<compile_context>
chip_gen: v6e
topology: v6e:2x2x1
jax: 0.10.0
libtpu: 0.0.40
codegen_flags: <defaults>
</compile_context>

<pallas_src>
import functools

import jax
import jax.numpy as jnp
from jax.experimental import pallas as pl
from jax.experimental.pallas import tpu as pltpu

VMEM_LIMIT_BYTES = 48 * 1024 * 1024


def _round_up(x, m):
    return (x + m - 1) // m * m


# ----------------------------------------------------------------------------
# Kernel 1: matmul + bias (ConvTranspose3d(k=2, s=2) expressed as a matmul).
# ----------------------------------------------------------------------------

def _matmul_bias_kernel(x_ref, w_ref, b_ref, o_ref):
    acc = jnp.dot(x_ref[...], w_ref[...], preferred_element_type=jnp.float32)
    o_ref[...] = (acc + b_ref[...]).astype(o_ref.dtype)


def matmul_bias(x, w, b, *, out_dtype=jnp.bfloat16, bm=256):
    """out[M, N] = x[M, K] @ w[K, N] + b[1, N].  bf16 operands, f32 accumulate."""
    M, K = x.shape
    _, Nc = w.shape
    bm = min(bm, _round_up(M, 8))
    Mp = _round_up(M, bm)
    if Mp != M:                                 # pad rows instead of shrinking bm
        x = jnp.pad(x, ((0, Mp - M), (0, 0)))
    out = pl.pallas_call(
        _matmul_bias_kernel,
        out_shape=jax.ShapeDtypeStruct((Mp, Nc), out_dtype),
        grid_spec=pltpu.PrefetchScalarGridSpec(
            num_scalar_prefetch=0,
            grid=(Mp // bm,),
            in_specs=[
                pl.BlockSpec((bm, K), lambda i: (i, 0)),     # K = full dim, no pad
                pl.BlockSpec((K, Nc), lambda i: (0, 0)),
                pl.BlockSpec((1, Nc), lambda i: (0, 0)),
            ],
            out_specs=pl.BlockSpec((bm, Nc), lambda i: (i, 0)),
        ),
        compiler_params=pltpu.CompilerParams(
            dimension_semantics=("parallel",),
            vmem_limit_bytes=VMEM_LIMIT_BYTES),
    )(x, w, b)
    return out[:M]


# ----------------------------------------------------------------------------
# Kernel 2: Conv3d(k=3, p=1) + bias + fused training-BN partial statistics.
#
# Input layout: (N, D+2, Lin, C) -- spatially zero-padded volume whose padded
# (H+2, W+2) plane is flattened to rows (row = hp*Wp + wp), then zero-padded to
# Lin rows so every shifted window stays in-bounds.  For output depth slice d,
# depth tap kd (grid axes), the 9 in-plane taps are constant row offsets
# kh*Wp + kw applied to the f32 matmul product.  Rows that do not correspond to
# a real (h < H, w < W) output position are garbage and are masked out of the
# BN statistics (and discarded by the wrapper).
# ----------------------------------------------------------------------------

def _conv3_bn_kernel(x_ref, w_ref, b_ref, mask_ref, y_ref, s_ref, sq_ref,
                     acc_ref, *, Wp, Lout):
    kd = pl.program_id(2)

    @pl.when(kd == 0)
    def _():
        acc_ref[...] = jnp.zeros_like(acc_ref)

    x_full = x_ref[0, 0]                       # (Lin, C) bf16, aligned load
    acc = acc_ref[...]
    for kh in range(3):
        for kw in range(3):
            off = kh * Wp + kw
            p = jnp.dot(x_full, w_ref[0, kh * 3 + kw],
                        preferred_element_type=jnp.float32)   # (Lin, Cout) f32
            acc = acc + p[off:off + Lout]                     # shifted view
    acc_ref[...] = acc

    @pl.when(kd == 2)
    def _():
        y = acc + b_ref[...]                   # (Lout, Cout) f32, bias added once
        y_ref[0, 0] = y.astype(y_ref.dtype)    # bf16 activation to HBM
        ym = y * mask_ref[...]                 # zero the non-image rows
        s_ref[0, 0] = jnp.sum(ym, axis=0, keepdims=True)       # per-slab partials
        sq_ref[0, 0] = jnp.sum(ym * y, axis=0, keepdims=True)


def conv3d_bn_stats(xp, w, b, mask, *, Wp, out_dtype=jnp.bfloat16):
    """xp: (N, D+2, Lin, C) bf16; w: (3, 9, C, Cout) bf16; b: (1, Cout) f32;
    mask: (Lout, 1) f32.  Returns (y_big, sum_partial, sumsq_partial)."""
    N, Dp, Lin, C = xp.shape
    Cout = w.shape[-1]
    Lout = mask.shape[0]
    D = Dp - 2
    kernel = functools.partial(_conv3_bn_kernel, Wp=Wp, Lout=Lout)
    return pl.pallas_call(
        kernel,
        out_shape=(jax.ShapeDtypeStruct((N, D, Lout, Cout), out_dtype),
                   jax.ShapeDtypeStruct((N, D, 1, Cout), jnp.float32),
                   jax.ShapeDtypeStruct((N, D, 1, Cout), jnp.float32)),
        grid_spec=pltpu.PrefetchScalarGridSpec(
            num_scalar_prefetch=0,
            grid=(N, D, 3),
            in_specs=[
                # depth block size 1 => block index is an element index: d + kd
                pl.BlockSpec((1, 1, Lin, C), lambda n, d, kd: (n, d + kd, 0, 0)),
                pl.BlockSpec((1, 9, C, Cout), lambda n, d, kd: (kd, 0, 0, 0)),
                pl.BlockSpec((1, Cout), lambda n, d, kd: (0, 0)),
                pl.BlockSpec((Lout, 1), lambda n, d, kd: (0, 0)),
            ],
            out_specs=(
                pl.BlockSpec((1, 1, Lout, Cout), lambda n, d, kd: (n, d, 0, 0)),
                pl.BlockSpec((1, 1, 1, Cout), lambda n, d, kd: (n, d, 0, 0)),
                pl.BlockSpec((1, 1, 1, Cout), lambda n, d, kd: (n, d, 0, 0)),
            ),
            scratch_shapes=[pltpu.VMEM((Lout, Cout), jnp.float32)],
        ),
        compiler_params=pltpu.CompilerParams(
            dimension_semantics=("parallel", "parallel", "arbitrary"),
            vmem_limit_bytes=VMEM_LIMIT_BYTES),
    )(xp, w, b, mask)


# ----------------------------------------------------------------------------
# Kernel 3: per-channel scale/shift + ReLU (BN apply), f32 math, bf16/f32 store.
# ----------------------------------------------------------------------------

def _bn_relu_kernel(x_ref, scale_ref, shift_ref, o_ref):
    x = x_ref[0, 0].astype(jnp.float32)
    y = jnp.maximum(x * scale_ref[...] + shift_ref[...], 0.0)
    o_ref[0, 0] = y.astype(o_ref.dtype)


def bn_relu_apply(y_big, scale, shift, *, out_dtype):
    N, D, Lout, C = y_big.shape
    return pl.pallas_call(
        _bn_relu_kernel,
        out_shape=jax.ShapeDtypeStruct((N, D, Lout, C), out_dtype),
        grid_spec=pltpu.PrefetchScalarGridSpec(
            num_scalar_prefetch=0,
            grid=(N, D),
            in_specs=[
                pl.BlockSpec((1, 1, Lout, C), lambda n, d: (n, d, 0, 0)),
                pl.BlockSpec((1, C), lambda n, d: (0, 0)),
                pl.BlockSpec((1, C), lambda n, d: (0, 0)),
            ],
            out_specs=pl.BlockSpec((1, 1, Lout, C), lambda n, d: (n, d, 0, 0)),
        ),
        compiler_params=pltpu.CompilerParams(
            dimension_semantics=("parallel", "parallel"),
            vmem_limit_bytes=VMEM_LIMIT_BYTES),
    )(y_big, scale, shift)


# ----------------------------------------------------------------------------
# Layout glue (XLA): pad / flatten / gather.
# ----------------------------------------------------------------------------

def _to_padded_rows(x_cl, Lin):
    """(N, D, H, W, C) -> (N, D+2, Lin, C) bf16: zero-pad by 1 in D/H/W, flatten
    the padded (H+2, W+2) plane into rows, zero-pad rows up to Lin."""
    N, D, H, W, C = x_cl.shape
    Hp, Wp = H + 2, W + 2
    xp = jnp.pad(x_cl.astype(jnp.bfloat16),
                 ((0, 0), (1, 1), (1, 1), (1, 1), (0, 0)))
    xp = xp.reshape(N, D + 2, Hp * Wp, C)
    return jnp.pad(xp, ((0, 0), (0, 0), (0, Lin - Hp * Wp), (0, 0)))


def _valid_row_mask(Lout, Wp, H, W):
    r = jnp.arange(Lout, dtype=jnp.int32)
    valid = ((r // Wp) < H) & ((r % Wp) < W)
    return valid.astype(jnp.float32).reshape(Lout, 1)


# ----------------------------------------------------------------------------
# Parameters + forward pass.
# ----------------------------------------------------------------------------

def init_up_transition(key, inChans, outChans, depth):
    """Deterministic synthetic parameters matching the PyTorch module shapes."""
    c_cat = inChans + outChans // 2            # channels after concat
    c1 = 32 * 2 ** (depth + 1)                 # double_chnnel=True
    c2 = 32 * 2 ** (depth + 1)
    ks = jax.random.split(key, 10)
    return {
        # ConvTranspose3d weight: (Cin, Cout, 2, 2, 2)
        "up_w": 0.10 * jax.random.normal(ks[0], (inChans, outChans, 2, 2, 2), jnp.float32),
        "up_b": 0.10 * jax.random.normal(ks[1], (outChans,), jnp.float32),
        # Conv3d weights: (Cout, Cin, 3, 3, 3)
        "conv1_w": 0.05 * jax.random.normal(ks[2], (c1, c_cat, 3, 3, 3), jnp.float32),
        "conv1_b": 0.05 * jax.random.normal(ks[3], (c1,), jnp.float32),
        "bn1_gamma": 1.0 + 0.1 * jax.random.normal(ks[4], (c1,), jnp.float32),
        "bn1_beta": 0.1 * jax.random.normal(ks[5], (c1,), jnp.float32),
        "conv2_w": 0.05 * jax.random.normal(ks[6], (c2, c1, 3, 3, 3), jnp.float32),
        "conv2_b": 0.05 * jax.random.normal(ks[7], (c2,), jnp.float32),
        "bn2_gamma": 1.0 + 0.1 * jax.random.normal(ks[8], (c2,), jnp.float32),
        "bn2_beta": 0.1 * jax.random.normal(ks[9], (c2,), jnp.float32),
    }


def up_transition_forward(params, x, skip_x, t=None, eps=1e-5):
    """x, skip_x: NCDHW (PyTorch convention).  Returns NCDHW output (f32)."""
    f32 = jnp.float32
    xl = jnp.transpose(x, (0, 2, 3, 4, 1))
    sl = jnp.transpose(skip_x, (0, 2, 3, 4, 1))
    N, D, H, W, Cin = xl.shape
    Cout_up = params["up_b"].shape[0]

    # --- ConvTranspose3d(k=2, s=2) as a bf16 matmul: (M, Cin) @ (Cin, Cout*8) ---
    x_flat = xl.reshape(N * D * H * W, Cin).astype(jnp.bfloat16)
    w_t = params["up_w"].reshape(Cin, Cout_up * 8).astype(jnp.bfloat16)
    b_t = jnp.repeat(params["up_b"], 8).reshape(1, -1).astype(f32)
    y = matmul_bias(x_flat, w_t, b_t, out_dtype=jnp.bfloat16)      # (M, Cout*8)
    y = y.reshape(N, D, H, W, Cout_up, 2, 2, 2)
    y = jnp.transpose(y, (0, 1, 5, 2, 6, 3, 7, 4))                 # (N,D,2,H,2,W,2,C)
    up = y.reshape(N, 2 * D, 2 * H, 2 * W, Cout_up)

    # --- channel concat (matches torch.cat(dim=1) order), bf16 ---
    concat = jnp.concatenate([up, sl.astype(jnp.bfloat16)], axis=-1)
    D2, H2, W2 = 2 * D, 2 * H, 2 * W
    Hp, Wp = H2 + 2, W2 + 2
    Lout = _round_up(Hp * Wp, 8)
    Lin = Lout + _round_up(2 * Wp + 2, 8)      # room for the largest in-plane shift

    mask = _valid_row_mask(Lout, Wp, H2, W2)
    cnt = float(N * D2 * H2 * W2)              # rows that contribute to BN stats

    def luconv(x_vol, w_conv, b_conv, gamma, beta, out_dtype):
        c_in = w_conv.shape[1]
        c_o = w_conv.shape[0]
        xp = _to_padded_rows(x_vol, Lin)                                 # bf16
        w = jnp.transpose(w_conv, (2, 3, 4, 1, 0))                        # (3,3,3,Cin,Cout)
        w = w.reshape(3, 9, c_in, c_o).astype(jnp.bfloat16)
        b = b_conv.reshape(1, c_o).astype(f32)
        y_big, s, sq = conv3d_bn_stats(xp, w, b, mask, Wp=Wp,
                                       out_dtype=jnp.bfloat16)
        s = jnp.sum(s, axis=(0, 1, 2))                                    # (Cout,)
        sq = jnp.sum(sq, axis=(0, 1, 2))
        mean = s / cnt
        var = jnp.maximum(sq / cnt - mean * mean, 0.0)   # biased (training) var, clamped
        inv = gamma / jnp.sqrt(var + eps)
        scale = inv.reshape(1, c_o).astype(f32)
        shift = (beta - mean * inv).reshape(1, c_o).astype(f32)
        h_big = bn_relu_apply(y_big, scale, shift, out_dtype=out_dtype)   # (N,D2,Lout,Cout)
        # gather the valid rows back to a (N, D2, H2, W2, Cout) volume
        h = h_big[:, :, :Hp * Wp, :].reshape(N, D2, Hp, Wp, c_o)[:, :, :H2, :W2, :]
        return h

    h1 = luconv(concat, params["conv1_w"], params["conv1_b"],
                params["bn1_gamma"], params["bn1_beta"], jnp.bfloat16)
    h2 = luconv(h1, params["conv2_w"], params["conv2_b"],
                params["bn2_gamma"], params["bn2_beta"], jnp.float32)

    # TODO(synk): t (temb) dense addition omitted — make_dense_layer undefined in source.
    return jnp.transpose(h2.astype(f32), (0, 4, 1, 2, 3))          # back to NCDHW


# ----------------------------------------------------------------------------
# Pure-JAX reference (f32) of the PyTorch module semantics, for validation.
# ----------------------------------------------------------------------------

def ref_forward(params, x, skip_x, eps=1e-5):
    hp = jax.lax.Precision.HIGHEST
    xl = jnp.transpose(x, (0, 2, 3, 4, 1)).astype(jnp.float32)
    sl = jnp.transpose(skip_x, (0, 2, 3, 4, 1)).astype(jnp.float32)
    N, D, H, W, _ = xl.shape

    y = jnp.einsum("ndhwc,coijk->ndhwoijk", xl, params["up_w"], precision=hp)
    y = y + params["up_b"][:, None, None, None]
    y = jnp.transpose(y, (0, 1, 5, 2, 6, 3, 7, 4)).reshape(N, 2 * D, 2 * H, 2 * W, -1)
    h = jnp.concatenate([y, sl], axis=-1)

    def luconv_ref(v, w, b, gamma, beta):
        wt = jnp.transpose(w, (2, 3, 4, 1, 0))                    # DHWIO
        o = jax.lax.conv_general_dilated(
            v, wt, window_strides=(1, 1, 1),
            padding=((1, 1), (1, 1), (1, 1)),
            dimension_numbers=("NDHWC", "DHWIO", "NDHWC"),
            precision=hp) + b
        mean = jnp.mean(o, axis=(0, 1, 2, 3))
        var = jnp.mean((o - mean) ** 2, axis=(0, 1, 2, 3))
        o = (o - mean) / jnp.sqrt(var + eps) * gamma + beta
        return jnp.maximum(o, 0.0)

    h = luconv_ref(h, params["conv1_w"], params["conv1_b"],
                   params["bn1_gamma"], params["bn1_beta"])
    h = luconv_ref(h, params["conv2_w"], params["conv2_b"],
                   params["bn2_gamma"], params["bn2_beta"])
    return jnp.transpose(h, (0, 4, 1, 2, 3))


# ----------------------------------------------------------------------------
# Demo
# ----------------------------------------------------------------------------

if __name__ == "__main__":
    # UpTransition(inChans=8, outChans=8, depth=0, act='relu', temb_dim=None)
    N, inChans, outChans, depth = 2, 8, 8, 0
    D = H = W = 4
    skip_chans = inChans - outChans // 2       # so concat matches ops input channels

    key = jax.random.PRNGKey(0)
    k_params, k_x, k_s = jax.random.split(key, 3)
    params = init_up_transition(k_params, inChans, outChans, depth)

    x = jax.random.normal(k_x, (N, inChans, D, H, W), jnp.float32)
    skip_x = jax.random.normal(k_s, (N, skip_chans, 2 * D, 2 * H, 2 * W), jnp.float32)

    fwd = jax.jit(up_transition_forward)
    out = jax.block_until_ready(fwd(params, x, skip_x))

    expected_c = 32 * 2 ** (depth + 1)
    assert out.shape == (N, expected_c, 2 * D, 2 * H, 2 * W), out.shape
    assert bool(jnp.all(jnp.isfinite(out)))

    ref = ref_forward(params, x, skip_x)
    err = float(jnp.max(jnp.abs(out - ref)))
    assert err < 0.3, f"kernel vs reference max |diff| too large: {err}"
    print("KERNEL_OK")
</pallas_src>

<mosaic_0001>
module attributes {stable_mosaic.version = 11 : i64} {
  func.func @_matmul_bias_kernel(%arg0: i32, %arg1: memref<128x8xbf16, #tpu.memory_space<vmem>>, %arg2: memref<8x64xbf16, #tpu.memory_space<vmem>>, %arg3: memref<1x64xf32, #tpu.memory_space<vmem>>, %arg4: memref<128x64xbf16, #tpu.memory_space<vmem>>) attributes {dimension_semantics = [#tpu.dimension_semantics<parallel>], iteration_bounds = array<i64: 1>, scalar_prefetch = 0 : i64, scratch_operands = 0 : i64, tpu.core_type = #tpu.core_type<tc>, window_params = [{transform_indices = @transform_0, window_bounds = array<i64: 128, 8>}, {pipeline_mode = #tpu.pipeline_mode<synchronous>, transform_indices = @transform_1, window_bounds = array<i64: 8, 64>}, {pipeline_mode = #tpu.pipeline_mode<synchronous>, transform_indices = @transform_2, window_bounds = array<i64: 1, 64>}, {transform_indices = @transform_3, window_bounds = array<i64: 128, 64>}]} {
    %c0 = arith.constant 0 : index
    %c0_0 = arith.constant 0 : index
    %0 = vector.load %arg1[%c0, %c0_0] : memref<128x8xbf16, #tpu.memory_space<vmem>>, vector<128x8xbf16>
    %c0_1 = arith.constant 0 : index
    %c0_2 = arith.constant 0 : index
    %1 = vector.load %arg2[%c0_1, %c0_2] : memref<8x64xbf16, #tpu.memory_space<vmem>>, vector<8x64xbf16>
    %cst = arith.constant dense<0.000000e+00> : vector<128x64xf32>
    %2 = tpu.matmul %0, %1, %cst {dimension_numbers = #tpu.dot_dimension_numbers<[1], [0], [0], [1], [0, 0, 1, 1], [], []>} : vector<128x8xbf16>, vector<8x64xbf16>, vector<128x64xf32> -> vector<128x64xf32>
    %c0_3 = arith.constant 0 : index
    %c0_4 = arith.constant 0 : index
    %3 = vector.load %arg3[%c0_3, %c0_4] : memref<1x64xf32, #tpu.memory_space<vmem>>, vector<1x64xf32>
    %4 = vector.broadcast %3 : vector<1x64xf32> to vector<128x64xf32>
    %5 = arith.addf %2, %4 : vector<128x64xf32>
    %6 = arith.truncf %5 : vector<128x64xf32> to vector<128x64xbf16>
    %c0_5 = arith.constant 0 : index
    %c0_6 = arith.constant 0 : index
    %7 = vector.load %arg4[%c0_5, %c0_6] : memref<128x64xbf16, #tpu.memory_space<vmem>>, vector<128x64xbf16>
    tpu.vector_store %arg4[%c0_5, %c0_6], %6 {strides = array<i32>} : memref<128x64xbf16, #tpu.memory_space<vmem>>, vector<128x64xbf16>,
    return
  }
  func.func @transform_0(%arg0: i32) -> (i32, i32) {
    %c0_i32 = arith.constant 0 : i32
    %c0_i32_0 = arith.constant 0 : i32
    return %arg0, %c0_i32 : i32, i32
  }
  func.func @transform_1(%arg0: i32) -> (i32, i32) {
    %c0_i32 = arith.constant 0 : i32
    %c0_i32_0 = arith.constant 0 : i32
    %c0_i32_1 = arith.constant 0 : i32
    return %c0_i32, %c0_i32_0 : i32, i32
  }
  func.func @transform_2(%arg0: i32) -> (i32, i32) {
    %c0_i32 = arith.constant 0 : i32
    %c0_i32_0 = arith.constant 0 : i32
    %c0_i32_1 = arith.constant 0 : i32
    return %c0_i32, %c0_i32_0 : i32, i32
  }
  func.func @transform_3(%arg0: i32) -> (i32, i32) {
    %c0_i32 = arith.constant 0 : i32
    %c0_i32_0 = arith.constant 0 : i32
    return %arg0, %c0_i32 : i32, i32
  }
}

module attributes {stable_mosaic.version = 11 : i64} {
  func.func @_conv3_bn_kernel(%arg0: i32, %arg1: i32, %arg2: i32, %arg3: memref<1x1x128x12xbf16, #tpu.memory_space<vmem>>, %arg4: memref<1x9x12x64xbf16, #tpu.memory_space<vmem>>, %arg5: memref<1x64xf32, #tpu.memory_space<vmem>>, %arg6: memref<104x1xf32, #tpu.memory_space<vmem>>, %arg7: memref<1x1x104x64xbf16, #tpu.memory_space<vmem>>, %arg8: memref<1x1x1x64xf32, #tpu.memory_space<vmem>>, %arg9: memref<1x1x1x64xf32, #tpu.memory_space<vmem>>, %arg10: memref<104x64xf32, #tpu.memory_space<vmem>>) attributes {dimension_semantics = [#tpu.dimension_semantics<parallel>, #tpu.dimension_semantics<parallel>, #tpu.dimension_semantics<arbitrary>], iteration_bounds = array<i64: 2, 8, 3>, scalar_prefetch = 0 : i64, scratch_operands = 1 : i64, tpu.core_type = #tpu.core_type<tc>, window_params = [{transform_indices = @transform_0, window_bounds = array<i64: 1, 1, 128, 12>}, {transform_indices = @transform_1, window_bounds = array<i64: 1, 9, 12, 64>}, {pipeline_mode = #tpu.pipeline_mode<synchronous>, transform_indices = @transform_2, window_bounds = array<i64: 1, 64>}, {pipeline_mode = #tpu.pipeline_mode<synchronous>, transform_indices = @transform_3, window_bounds = array<i64: 104, 1>}, {transform_indices = @transform_4, window_bounds = array<i64: 1, 1, 104, 64>}, {transform_indices = @transform_5, window_bounds = array<i64: 1, 1, 1, 64>}, {transform_indices = @transform_6, window_bounds = array<i64: 1, 1, 1, 64>}]} {
    %c0_i32 = arith.constant 0 : i32
    %0 = arith.cmpi eq, %arg2, %c0_i32 : i32
    %1 = arith.extui %0 : i1 to i32
    %c0_i32_0 = arith.constant 0 : i32
    %2 = arith.cmpi ne, %1, %c0_i32_0 : i32
    scf.if %2 {
      %cst_45 = arith.constant 0.000000e+00 : f32
      %55 = vector.broadcast %cst_45 : f32 to vector<104x64xf32>
      %c0_46 = arith.constant 0 : index
      %c0_47 = arith.constant 0 : index
      %56 = vector.load %arg10[%c0_46, %c0_47] : memref<104x64xf32, #tpu.memory_space<vmem>>, vector<104x64xf32>
      tpu.vector_store %arg10[%c0_46, %c0_47], %55 {strides = array<i32>} : memref<104x64xf32, #tpu.memory_space<vmem>>, vector<104x64xf32>,
    } else {
    }
    %c0 = arith.constant 0 : index
    %c0_1 = arith.constant 0 : index
    %c0_2 = arith.constant 0 : index
    %c0_3 = arith.constant 0 : index
    %3 = vector.load %arg3[%c0, %c0_1, %c0_2, %c0_3] : memref<1x1x128x12xbf16, #tpu.memory_space<vmem>>, vector<1x1x128x12xbf16>
    %4 = vector.shape_cast %3 : vector<1x1x128x12xbf16> to vector<128x12xbf16>
    %c0_4 = arith.constant 0 : index
    %c0_5 = arith.constant 0 : index
    %5 = vector.load %arg10[%c0_4, %c0_5] : memref<104x64xf32, #tpu.memory_space<vmem>>, vector<104x64xf32>
    %c0_6 = arith.constant 0 : index
    %c0_7 = arith.constant 0 : index
    %c0_8 = arith.constant 0 : index
    %c0_9 = arith.constant 0 : index
    %6 = vector.load %arg4[%c0_6, %c0_7, %c0_8, %c0_9] : memref<1x9x12x64xbf16, #tpu.memory_space<vmem>>, vector<1x1x12x64xbf16>
    %7 = vector.shape_cast %6 : vector<1x1x12x64xbf16> to vector<12x64xbf16>
    %cst = arith.constant dense<0.000000e+00> : vector<128x64xf32>
    %8 = tpu.matmul %4, %7, %cst {dimension_numbers = #tpu.dot_dimension_numbers<[1], [0], [0], [1], [0, 0, 1, 1], [], []>} : vector<128x12xbf16>, vector<12x64xbf16>, vector<128x64xf32> -> vector<128x64xf32>
    %9 = vector.extract_strided_slice %8 {offsets = [0, 0], sizes = [104, 64], strides = [1, 1]} : vector<128x64xf32> to vector<104x64xf32>
    %10 = arith.addf %5, %9 : vector<104x64xf32>
    %c0_10 = arith.constant 0 : index
    %c1 = arith.constant 1 : index
    %c0_11 = arith.constant 0 : index
    %c0_12 = arith.constant 0 : index
    %11 = vector.load %arg4[%c0_10, %c1, %c0_11, %c0_12] : memref<1x9x12x64xbf16, #tpu.memory_space<vmem>>, vector<1x1x12x64xbf16>
    %12 = vector.shape_cast %11 : vector<1x1x12x64xbf16> to vector<12x64xbf16>
    %cst_13 = arith.constant dense<0.000000e+00> : vector<128x64xf32>
    %13 = tpu.matmul %4, %12, %cst_13 {dimension_numbers = #tpu.dot_dimension_numbers<[1], [0], [0], [1], [0, 0, 1, 1], [], []>} : vector<128x12xbf16>, vector<12x64xbf16>, vector<128x64xf32> -> vector<128x64xf32>
    %14 = vector.extract_strided_slice %13 {offsets = [1, 0], sizes = [104, 64], strides = [1, 1]} : vector<128x64xf32> to vector<104x64xf32>
    %15 = arith.addf %10, %14 : vector<104x64xf32>
    %c0_14 = arith.constant 0 : index
    %c2 = arith.constant 2 : index
    %c0_15 = arith.constant 0 : index
    %c0_16 = arith.constant 0 : index
    %16 = vector.load %arg4[%c0_14, %c2, %c0_15, %c0_16] : memref<1x9x12x64xbf16, #tpu.memory_space<vmem>>, vector<1x1x12x64xbf16>
    %17 = vector.shape_cast %16 : vector<1x1x12x64xbf16> to vector<12x64xbf16>
    %cst_17 = arith.constant dense<0.000000e+00> : vector<128x64xf32>
    %18 = tpu.matmul %4, %17, %cst_17 {dimension_numbers = #tpu.dot_dimension_numbers<[1], [0], [0], [1], [0, 0, 1, 1], [], []>} : vector<128x12xbf16>, vector<12x64xbf16>, vector<128x64xf32> -> vector<128x64xf32>
    %19 = vector.extract_strided_slice %18 {offsets = [2, 0], sizes = [104, 64], strides = [1, 1]} : vector<128x64xf32> to vector<104x64xf32>
    %20 = arith.addf %15, %19 : vector<104x64xf32>
    %c0_18 = arith.constant 0 : index
    %c3 = arith.constant 3 : index
    %c0_19 = arith.constant 0 : index
    %c0_20 = arith.constant 0 : index
    %21 = vector.load %arg4[%c0_18, %c3, %c0_19, %c0_20] : memref<1x9x12x64xbf16, #tpu.memory_space<vmem>>, vector<1x1x12x64xbf16>
    %22 = vector.shape_cast %21 : vector<1x1x12x64xbf16> to vector<12x64xbf16>
    %cst_21 = arith.constant dense<0.000000e+00> : vector<128x64xf32>
    %23 = tpu.matmul %4, %22, %cst_21 {dimension_numbers = #tpu.dot_dimension_numbers<[1], [0], [0], [1], [0, 0, 1, 1], [], []>} : vector<128x12xbf16>, vector<12x64xbf16>, vector<128x64xf32> -> vector<128x64xf32>
    %24 = vector.extract_strided_slice %23 {offsets = [10, 0], sizes = [104, 64], strides = [1, 1]} : vector<128x64xf32> to vector<104x64xf32>
    %25 = arith.addf %20, %24 : vector<104x64xf32>
    %c0_22 = arith.constant 0 : index
    %c4 = arith.constant 4 : index
    %c0_23 = arith.constant 0 : index
    %c0_24 = arith.constant 0 : index
    %26 = vector.load %arg4[%c0_22, %c4, %c0_23, %c0_24] : memref<1x9x12x64xbf16, #tpu.memory_space<vmem>>, vector<1x1x12x64xbf16>
    %27 = vector.shape_cast %26 : vector<1x1x12x64xbf16> to vector<12x64xbf16>
    %cst_25 = arith.constant dense<0.000000e+00> : vector<128x64xf32>
    %28 = tpu.matmul %4, %27, %cst_25 {dimension_numbers = #tpu.dot_dimension_numbers<[1], [0], [0], [1], [0, 0, 1, 1], [], []>} : vector<128x12xbf16>, vector<12x64xbf16>, vector<128x64xf32> -> vector<128x64xf32>
    %29 = vector.extract_strided_slice %28 {offsets = [11, 0], sizes = [104, 64], strides = [1, 1]} : vector<128x64xf32> to vector<104x64xf32>
    %30 = arith.addf %25, %29 : vector<104x64xf32>
    %c0_26 = arith.constant 0 : index
    %c5 = arith.constant 5 : index
    %c0_27 = arith.constant 0 : index
    %c0_28 = arith.constant 0 : index
    %31 = vector.load %arg4[%c0_26, %c5, %c0_27, %c0_28] : memref<1x9x12x64xbf16, #tpu.memory_space<vmem>>, vector<1x1x12x64xbf16>
    %32 = vector.shape_cast %31 : vector<1x1x12x64xbf16> to vector<12x64xbf16>
    %cst_29 = arith.constant dense<0.000000e+00> : vector<128x64xf32>
    %33 = tpu.matmul %4, %32, %cst_29 {dimension_numbers = #tpu.dot_dimension_numbers<[1], [0], [0], [1], [0, 0, 1, 1], [], []>} : vector<128x12xbf16>, vector<12x64xbf16>, vector<128x64xf32> -> vector<128x64xf32>
    %34 = vector.extract_strided_slice %33 {offsets = [12, 0], sizes = [104, 64], strides = [1, 1]} : vector<128x64xf32> to vector<104x64xf32>
    %35 = arith.addf %30, %34 : vector<104x64xf32>
    %c0_30 = arith.constant 0 : index
    %c6 = arith.constant 6 : index
    %c0_31 = arith.constant 0 : index
    %c0_32 = arith.constant 0 : index
    %36 = vector.load %arg4[%c0_30, %c6, %c0_31, %c0_32] : memref<1x9x12x64xbf16, #tpu.memory_space<vmem>>, vector<1x1x12x64xbf16>
    %37 = vector.shape_cast %36 : vector<1x1x12x64xbf16> to vector<12x64xbf16>
    %cst_33 = arith.constant dense<0.000000e+00> : vector<128x64xf32>
    %38 = tpu.matmul %4, %37, %cst_33 {dimension_numbers = #tpu.dot_dimension_numbers<[1], [0], [0], [1], [0, 0, 1, 1], [], []>} : vector<128x12xbf16>, vector<12x64xbf16>, vector<128x64xf32> -> vector<128x64xf32>
    %39 = vector.extract_strided_slice %38 {offsets = [20, 0], sizes = [104, 64], strides = [1, 1]} : vector<128x64xf32> to vector<104x64xf32>
    %40 = arith.addf %35, %39 : vector<104x64xf32>
    %c0_34 = arith.constant 0 : index
    %c7 = arith.constant 7 : index
    %c0_35 = arith.constant 0 : index
    %c0_36 = arith.constant 0 : index
    %41 = vector.load %arg4[%c0_34, %c7, %c0_35, %c0_36] : memref<1x9x12x64xbf16, #tpu.memory_space<vmem>>, vector<1x1x12x64xbf16>
    %42 = vector.shape_cast %41 : vector<1x1x12x64xbf16> to vector<12x64xbf16>
    %cst_37 = arith.constant dense<0.000000e+00> : vector<128x64xf32>
    %43 = tpu.matmul %4, %42, %cst_37 {dimension_numbers = #tpu.dot_dimension_numbers<[1], [0], [0], [1], [0, 0, 1, 1], [], []>} : vector<128x12xbf16>, vector<12x64xbf16>, vector<128x64xf32> -> vector<128x64xf32>
    %44 = vector.extract_strided_slice %43 {offsets = [21, 0], sizes = [104, 64], strides = [1, 1]} : vector<128x64xf32> to vector<104x64xf32>
    %45 = arith.addf %40, %44 : vector<104x64xf32>
    %c0_38 = arith.constant 0 : index
    %c8 = arith.constant 8 : index
    %c0_39 = arith.constant 0 : index
    %c0_40 = arith.constant 0 : index
    %46 = vector.load %arg4[%c0_38, %c8, %c0_39, %c0_40] : memref<1x9x12x64xbf16, #tpu.memory_space<vmem>>, vector<1x1x12x64xbf16>
    %47 = vector.shape_cast %46 : vector<1x1x12x64xbf16> to vector<12x64xbf16>
    %cst_41 = arith.constant dense<0.000000e+00> : vector<128x64xf32>
    %48 = tpu.matmul %4, %47, %cst_41 {dimension_numbers = #tpu.dot_dimension_numbers<[1], [0], [0], [1], [0, 0, 1, 1], [], []>} : vector<128x12xbf16>, vector<12x64xbf16>, vector<128x64xf32> -> vector<128x64xf32>
    %49 = vector.extract_strided_slice %48 {offsets = [22, 0], sizes = [104, 64], strides = [1, 1]} : vector<128x64xf32> to vector<104x64xf32>
    %50 = arith.addf %45, %49 : vector<104x64xf32>
    %c0_42 = arith.constant 0 : index
    %c0_43 = arith.constant 0 : index
    %51 = vector.load %arg10[%c0_42, %c0_43] : memref<104x64xf32, #tpu.memory_space<vmem>>, vector<104x64xf32>
    tpu.vector_store %arg10[%c0_42, %c0_43], %50 {strides = array<i32>} : memref<104x64xf32, #tpu.memory_space<vmem>>, vector<104x64xf32>,
    %c2_i32 = arith.constant 2 : i32
    %52 = arith.cmpi eq, %arg2, %c2_i32 : i32
    %53 = arith.extui %52 : i1 to i32
    %c0_i32_44 = arith.constant 0 : i32
    %54 = arith.cmpi ne, %53, %c0_i32_44 : i32
    scf.if %54 {
      %c0_45 = arith.constant 0 : index
      %c0_46 = arith.constant 0 : index
      %55 = vector.load %arg5[%c0_45, %c0_46] : memref<1x64xf32, #tpu.memory_space<vmem>>, vector<1x64xf32>
      %56 = vector.broadcast %55 : vector<1x64xf32> to vector<104x64xf32>
      %57 = arith.addf %50, %56 : vector<104x64xf32>
      %58 = arith.truncf %57 : vector<104x64xf32> to vector<104x64xbf16>
      %c0_47 = arith.constant 0 : index
      %c0_48 = arith.constant 0 : index
      %c0_49 = arith.constant 0 : index
      %c0_50 = arith.constant 0 : index
      %59 = vector.load %arg7[%c0_47, %c0_48, %c0_49, %c0_50] : memref<1x1x104x64xbf16, #tpu.memory_space<vmem>>, vector<1x1x104x64xbf16>
      %60 = vector.shape_cast %59 : vector<1x1x104x64xbf16> to vector<104x64xbf16>
      %61 = vector.shape_cast %58 : vector<104x64xbf16> to vector<1x1x104x64xbf16>
      tpu.vector_store %arg7[%c0_47, %c0_48, %c0_49, %c0_50], %61 {strides = array<i32>} : memref<1x1x104x64xbf16, #tpu.memory_space<vmem>>, vector<1x1x104x64xbf16>,
      %c0_51 = arith.constant 0 : index
      %c0_52 = arith.constant 0 : index
      %62 = vector.load %arg6[%c0_51, %c0_52] : memref<104x1xf32, #tpu.memory_space<vmem>>, vector<104x1xf32>
      %63 = vector.broadcast %62 : vector<104x1xf32> to vector<104x64xf32>
      %64 = arith.mulf %57, %63 : vector<104x64xf32>
      %cst_53 = arith.constant dense<0.000000e+00> : vector<64xf32>
      %65 = vector.multi_reduction <add>, %64, %cst_53 [0] : vector<104x64xf32> to vector<64xf32>
      %66 = vector.shape_cast %65 : vector<64xf32> to vector<1x64xf32>
      %c0_54 = arith.constant 0 : index
      %c0_55 = arith.constant 0 : index
      %c0_56 = arith.constant 0 : index
      %c0_57 = arith.constant 0 : index
      %67 = vector.load %arg8[%c0_54, %c0_55, %c0_56, %c0_57] : memref<1x1x1x64xf32, #tpu.memory_space<vmem>>, vector<1x1x1x64xf32>
      %68 = vector.shape_cast %67 : vector<1x1x1x64xf32> to vector<1x64xf32>
      %69 = vector.shape_cast %66 : vector<1x64xf32> to vector<1x1x1x64xf32>
      tpu.vector_store %arg8[%c0_54, %c0_55, %c0_56, %c0_57], %69 {strides = array<i32>} : memref<1x1x1x64xf32, #tpu.memory_space<vmem>>, vector<1x1x1x64xf32>,
      %70 = arith.mulf %64, %57 : vector<104x64xf32>
      %cst_58 = arith.constant dense<0.000000e+00> : vector<64xf32>
      %71 = vector.multi_reduction <add>, %70, %cst_58 [0] : vector<104x64xf32> to vector<64xf32>
      %72 = vector.shape_cast %71 : vector<64xf32> to vector<1x64xf32>
      %c0_59 = arith.constant 0 : index
      %c0_60 = arith.constant 0 : index
      %c0_61 = arith.constant 0 : index
      %c0_62 = arith.constant 0 : index
      %73 = vector.load %arg9[%c0_59, %c0_60, %c0_61, %c0_62] : memref<1x1x1x64xf32, #tpu.memory_space<vmem>>, vector<1x1x1x64xf32>
      %74 = vector.shape_cast %73 : vector<1x1x1x64xf32> to vector<1x64xf32>
      %75 = vector.shape_cast %72 : vector<1x64xf32> to vector<1x1x1x64xf32>
      tpu.vector_store %arg9[%c0_59, %c0_60, %c0_61, %c0_62], %75 {strides = array<i32>} : memref<1x1x1x64xf32, #tpu.memory_space<vmem>>, vector<1x1x1x64xf32>,
    } else {
    }
    return
  }
  func.func @transform_0(%arg0: i32, %arg1: i32, %arg2: i32) -> (i32, i32, i32, i32) {
    %0 = arith.addi %arg1, %arg2 : i32
    %c0_i32 = arith.constant 0 : i32
    %c0_i32_0 = arith.constant 0 : i32
    %c0_i32_1 = arith.constant 0 : i32
    return %arg0, %0, %c0_i32, %c0_i32_0 : i32, i32, i32, i32
  }
  func.func @transform_1(%arg0: i32, %arg1: i32, %arg2: i32) -> (i32, i32, i32, i32) {
    %c0_i32 = arith.constant 0 : i32
    %c0_i32_0 = arith.constant 0 : i32
    %c0_i32_1 = arith.constant 0 : i32
    %c0_i32_2 = arith.constant 0 : i32
    return %arg2, %c0_i32, %c0_i32_0, %c0_i32_1 : i32, i32, i32, i32
  }
  func.func @transform_2(%arg0: i32, %arg1: i32, %arg2: i32) -> (i32, i32) {
    %c0_i32 = arith.constant 0 : i32
    %c0_i32_0 = arith.constant 0 : i32
    %c0_i32_1 = arith.constant 0 : i32
    return %c0_i32, %c0_i32_0 : i32, i32
  }
  func.func @transform_3(%arg0: i32, %arg1: i32, %arg2: i32) -> (i32, i32) {
    %c0_i32 = arith.constant 0 : i32
    %c0_i32_0 = arith.constant 0 : i32
    %c0_i32_1 = arith.constant 0 : i32
    return %c0_i32, %c0_i32_0 : i32, i32
  }
  func.func @transform_4(%arg0: i32, %arg1: i32, %arg2: i32) -> (i32, i32, i32, i32) {
    %c0_i32 = arith.constant 0 : i32
    %c0_i32_0 = arith.constant 0 : i32
    %c0_i32_1 = arith.constant 0 : i32
    return %arg0, %arg1, %c0_i32, %c0_i32_0 : i32, i32, i32, i32
  }
  func.func @transform_5(%arg0: i32, %arg1: i32, %arg2: i32) -> (i32, i32, i32, i32) {
    %c0_i32 = arith.constant 0 : i32
    %c0_i32_0 = arith.constant 0 : i32
    %c0_i32_1 = arith.constant 0 : i32
    return %arg0, %arg1, %c0_i32, %c0_i32_0 : i32, i32, i32, i32
  }
  func.func @transform_6(%arg0: i32, %arg1: i32, %arg2: i32) -> (i32, i32, i32, i32) {
    %c0_i32 = arith.constant 0 : i32
    %c0_i32_0 = arith.constant 0 : i32
    %c0_i32_1 = arith.constant 0 : i32
    return %arg0, %arg1, %c0_i32, %c0_i32_0 : i32, i32, i32, i32
  }
}

module attributes {stable_mosaic.version = 11 : i64} {
  func.func @_bn_relu_kernel(%arg0: i32, %arg1: i32, %arg2: memref<1x1x104x64xbf16, #tpu.memory_space<vmem>>, %arg3: memref<1x64xf32, #tpu.memory_space<vmem>>, %arg4: memref<1x64xf32, #tpu.memory_space<vmem>>, %arg5: memref<1x1x104x64xbf16, #tpu.memory_space<vmem>>) attributes {dimension_semantics = [#tpu.dimension_semantics<parallel>, #tpu.dimension_semantics<parallel>], iteration_bounds = array<i64: 2, 8>, scalar_prefetch = 0 : i64, scratch_operands = 0 : i64, tpu.core_type = #tpu.core_type<tc>, window_params = [{transform_indices = @transform_0, window_bounds = array<i64: 1, 1, 104, 64>}, {pipeline_mode = #tpu.pipeline_mode<synchronous>, transform_indices = @transform_1, window_bounds = array<i64: 1, 64>}, {pipeline_mode = #tpu.pipeline_mode<synchronous>, transform_indices = @transform_2, window_bounds = array<i64: 1, 64>}, {transform_indices = @transform_3, window_bounds = array<i64: 1, 1, 104, 64>}]} {
    %c0 = arith.constant 0 : index
    %c0_0 = arith.constant 0 : index
    %c0_1 = arith.constant 0 : index
    %c0_2 = arith.constant 0 : index
    %0 = vector.load %arg2[%c0, %c0_0, %c0_1, %c0_2] : memref<1x1x104x64xbf16, #tpu.memory_space<vmem>>, vector<1x1x104x64xbf16>
    %1 = vector.shape_cast %0 : vector<1x1x104x64xbf16> to vector<104x64xbf16>
    %2 = arith.extf %1 : vector<104x64xbf16> to vector<104x64xf32>
    %c0_3 = arith.constant 0 : index
    %c0_4 = arith.constant 0 : index
    %3 = vector.load %arg3[%c0_3, %c0_4] : memref<1x64xf32, #tpu.memory_space<vmem>>, vector<1x64xf32>
    %4 = vector.broadcast %3 : vector<1x64xf32> to vector<104x64xf32>
    %5 = arith.mulf %2, %4 : vector<104x64xf32>
    %c0_5 = arith.constant 0 : index
    %c0_6 = arith.constant 0 : index
    %6 = vector.load %arg4[%c0_5, %c0_6] : memref<1x64xf32, #tpu.memory_space<vmem>>, vector<1x64xf32>
    %7 = vector.broadcast %6 : vector<1x64xf32> to vector<104x64xf32>
    %8 = arith.addf %5, %7 : vector<104x64xf32>
    %cst = arith.constant 0.000000e+00 : f32
    %9 = vector.broadcast %cst : f32 to vector<104x64xf32>
    %10 = arith.maximumf %8, %9 : vector<104x64xf32>
    %11 = arith.truncf %10 : vector<104x64xf32> to vector<104x64xbf16>
    %c0_7 = arith.constant 0 : index
    %c0_8 = arith.constant 0 : index
    %c0_9 = arith.constant 0 : index
    %c0_10 = arith.constant 0 : index
    %12 = vector.load %arg5[%c0_7, %c0_8, %c0_9, %c0_10] : memref<1x1x104x64xbf16, #tpu.memory_space<vmem>>, vector<1x1x104x64xbf16>
    %13 = vector.shape_cast %12 : vector<1x1x104x64xbf16> to vector<104x64xbf16>
    %14 = vector.shape_cast %11 : vector<104x64xbf16> to vector<1x1x104x64xbf16>
    tpu.vector_store %arg5[%c0_7, %c0_8, %c0_9, %c0_10], %14 {strides = array<i32>} : memref<1x1x104x64xbf16, #tpu.memory_space<vmem>>, vector<1x1x104x64xbf16>,
    return
  }
  func.func @transform_0(%arg0: i32, %arg1: i32) -> (i32, i32, i32, i32) {
    %c0_i32 = arith.constant 0 : i32
    %c0_i32_0 = arith.constant 0 : i32
    %c0_i32_1 = arith.constant 0 : i32
    return %arg0, %arg1, %c0_i32, %c0_i32_0 : i32, i32, i32, i32
  }
  func.func @transform_1(%arg0: i32, %arg1: i32) -> (i32, i32) {
    %c0_i32 = arith.constant 0 : i32
    %c0_i32_0 = arith.constant 0 : i32
    %c0_i32_1 = arith.constant 0 : i32
    return %c0_i32, %c0_i32_0 : i32, i32
  }
  func.func @transform_2(%arg0: i32, %arg1: i32) -> (i32, i32) {
    %c0_i32 = arith.constant 0 : i32
    %c0_i32_0 = arith.constant 0 : i32
    %c0_i32_1 = arith.constant 0 : i32
    return %c0_i32, %c0_i32_0 : i32, i32
  }
  func.func @transform_3(%arg0: i32, %arg1: i32) -> (i32, i32, i32, i32) {
    %c0_i32 = arith.constant 0 : i32
    %c0_i32_0 = arith.constant 0 : i32
    %c0_i32_1 = arith.constant 0 : i32
    return %arg0, %arg1, %c0_i32, %c0_i32_0 : i32, i32, i32, i32
  }
}

module attributes {stable_mosaic.version = 11 : i64} {
  func.func @_conv3_bn_kernel(%arg0: i32, %arg1: i32, %arg2: i32, %arg3: memref<1x1x128x64xbf16, #tpu.memory_space<vmem>>, %arg4: memref<1x9x64x64xbf16, #tpu.memory_space<vmem>>, %arg5: memref<1x64xf32, #tpu.memory_space<vmem>>, %arg6: memref<104x1xf32, #tpu.memory_space<vmem>>, %arg7: memref<1x1x104x64xbf16, #tpu.memory_space<vmem>>, %arg8: memref<1x1x1x64xf32, #tpu.memory_space<vmem>>, %arg9: memref<1x1x1x64xf32, #tpu.memory_space<vmem>>, %arg10: memref<104x64xf32, #tpu.memory_space<vmem>>) attributes {dimension_semantics = [#tpu.dimension_semantics<parallel>, #tpu.dimension_semantics<parallel>, #tpu.dimension_semantics<arbitrary>], iteration_bounds = array<i64: 2, 8, 3>, scalar_prefetch = 0 : i64, scratch_operands = 1 : i64, tpu.core_type = #tpu.core_type<tc>, window_params = [{transform_indices = @transform_0, window_bounds = array<i64: 1, 1, 128, 64>}, {transform_indices = @transform_1, window_bounds = array<i64: 1, 9, 64, 64>}, {pipeline_mode = #tpu.pipeline_mode<synchronous>, transform_indices = @transform_2, window_bounds = array<i64: 1, 64>}, {pipeline_mode = #tpu.pipeline_mode<synchronous>, transform_indices = @transform_3, window_bounds = array<i64: 104, 1>}, {transform_indices = @transform_4, window_bounds = array<i64: 1, 1, 104, 64>}, {transform_indices = @transform_5, window_bounds = array<i64: 1, 1, 1, 64>}, {transform_indices = @transform_6, window_bounds = array<i64: 1, 1, 1, 64>}]} {
    %c0_i32 = arith.constant 0 : i32
    %0 = arith.cmpi eq, %arg2, %c0_i32 : i32
    %1 = arith.extui %0 : i1 to i32
    %c0_i32_0 = arith.constant 0 : i32
    %2 = arith.cmpi ne, %1, %c0_i32_0 : i32
    scf.if %2 {
      %cst_45 = arith.constant 0.000000e+00 : f32
      %55 = vector.broadcast %cst_45 : f32 to vector<104x64xf32>
      %c0_46 = arith.constant 0 : index
      %c0_47 = arith.constant 0 : index
      %56 = vector.load %arg10[%c0_46, %c0_47] : memref<104x64xf32, #tpu.memory_space<vmem>>, vector<104x64xf32>
      tpu.vector_store %arg10[%c0_46, %c0_47], %55 {strides = array<i32>} : memref<104x64xf32, #tpu.memory_space<vmem>>, vector<104x64xf32>,
    } else {
    }
    %c0 = arith.constant 0 : index
    %c0_1 = arith.constant 0 : index
    %c0_2 = arith.constant 0 : index
    %c0_3 = arith.constant 0 : index
    %3 = vector.load %arg3[%c0, %c0_1, %c0_2, %c0_3] : memref<1x1x128x64xbf16, #tpu.memory_space<vmem>>, vector<1x1x128x64xbf16>
    %4 = vector.shape_cast %3 : vector<1x1x128x64xbf16> to vector<128x64xbf16>
    %c0_4 = arith.constant 0 : index
    %c0_5 = arith.constant 0 : index
    %5 = vector.load %arg10[%c0_4, %c0_5] : memref<104x64xf32, #tpu.memory_space<vmem>>, vector<104x64xf32>
    %c0_6 = arith.constant 0 : index
    %c0_7 = arith.constant 0 : index
    %c0_8 = arith.constant 0 : index
    %c0_9 = arith.constant 0 : index
    %6 = vector.load %arg4[%c0_6, %c0_7, %c0_8, %c0_9] : memref<1x9x64x64xbf16, #tpu.memory_space<vmem>>, vector<1x1x64x64xbf16>
    %7 = vector.shape_cast %6 : vector<1x1x64x64xbf16> to vector<64x64xbf16>
    %cst = arith.constant dense<0.000000e+00> : vector<128x64xf32>
    %8 = tpu.matmul %4, %7, %cst {dimension_numbers = #tpu.dot_dimension_numbers<[1], [0], [0], [1], [0, 0, 1, 1], [], []>} : vector<128x64xbf16>, vector<64x64xbf16>, vector<128x64xf32> -> vector<128x64xf32>
    %9 = vector.extract_strided_slice %8 {offsets = [0, 0], sizes = [104, 64], strides = [1, 1]} : vector<128x64xf32> to vector<104x64xf32>
    %10 = arith.addf %5, %9 : vector<104x64xf32>
    %c0_10 = arith.constant 0 : index
    %c1 = arith.constant 1 : index
    %c0_11 = arith.constant 0 : index
    %c0_12 = arith.constant 0 : index
    %11 = vector.load %arg4[%c0_10, %c1, %c0_11, %c0_12] : memref<1x9x64x64xbf16, #tpu.memory_space<vmem>>, vector<1x1x64x64xbf16>
    %12 = vector.shape_cast %11 : vector<1x1x64x64xbf16> to vector<64x64xbf16>
    %cst_13 = arith.constant dense<0.000000e+00> : vector<128x64xf32>
    %13 = tpu.matmul %4, %12, %cst_13 {dimension_numbers = #tpu.dot_dimension_numbers<[1], [0], [0], [1], [0, 0, 1, 1], [], []>} : vector<128x64xbf16>, vector<64x64xbf16>, vector<128x64xf32> -> vector<128x64xf32>
    %14 = vector.extract_strided_slice %13 {offsets = [1, 0], sizes = [104, 64], strides = [1, 1]} : vector<128x64xf32> to vector<104x64xf32>
    %15 = arith.addf %10, %14 : vector<104x64xf32>
    %c0_14 = arith.constant 0 : index
    %c2 = arith.constant 2 : index
    %c0_15 = arith.constant 0 : index
    %c0_16 = arith.constant 0 : index
    %16 = vector.load %arg4[%c0_14, %c2, %c0_15, %c0_16] : memref<1x9x64x64xbf16, #tpu.memory_space<vmem>>, vector<1x1x64x64xbf16>
    %17 = vector.shape_cast %16 : vector<1x1x64x64xbf16> to vector<64x64xbf16>
    %cst_17 = arith.constant dense<0.000000e+00> : vector<128x64xf32>
    %18 = tpu.matmul %4, %17, %cst_17 {dimension_numbers = #tpu.dot_dimension_numbers<[1], [0], [0], [1], [0, 0, 1, 1], [], []>} : vector<128x64xbf16>, vector<64x64xbf16>, vector<128x64xf32> -> vector<128x64xf32>
    %19 = vector.extract_strided_slice %18 {offsets = [2, 0], sizes = [104, 64], strides = [1, 1]} : vector<128x64xf32> to vector<104x64xf32>
    %20 = arith.addf %15, %19 : vector<104x64xf32>
    %c0_18 = arith.constant 0 : index
    %c3 = arith.constant 3 : index
    %c0_19 = arith.constant 0 : index
    %c0_20 = arith.constant 0 : index
    %21 = vector.load %arg4[%c0_18, %c3, %c0_19, %c0_20] : memref<1x9x64x64xbf16, #tpu.memory_space<vmem>>, vector<1x1x64x64xbf16>
    %22 = vector.shape_cast %21 : vector<1x1x64x64xbf16> to vector<64x64xbf16>
    %cst_21 = arith.constant dense<0.000000e+00> : vector<128x64xf32>
    %23 = tpu.matmul %4, %22, %cst_21 {dimension_numbers = #tpu.dot_dimension_numbers<[1], [0], [0], [1], [0, 0, 1, 1], [], []>} : vector<128x64xbf16>, vector<64x64xbf16>, vector<128x64xf32> -> vector<128x64xf32>
    %24 = vector.extract_strided_slice %23 {offsets = [10, 0], sizes = [104, 64], strides = [1, 1]} : vector<128x64xf32> to vector<104x64xf32>
    %25 = arith.addf %20, %24 : vector<104x64xf32>
    %c0_22 = arith.constant 0 : index
    %c4 = arith.constant 4 : index
    %c0_23 = arith.constant 0 : index
    %c0_24 = arith.constant 0 : index
    %26 = vector.load %arg4[%c0_22, %c4, %c0_23, %c0_24] : memref<1x9x64x64xbf16, #tpu.memory_space<vmem>>, vector<1x1x64x64xbf16>
    %27 = vector.shape_cast %26 : vector<1x1x64x64xbf16> to vector<64x64xbf16>
    %cst_25 = arith.constant dense<0.000000e+00> : vector<128x64xf32>
    %28 = tpu.matmul %4, %27, %cst_25 {dimension_numbers = #tpu.dot_dimension_numbers<[1], [0], [0], [1], [0, 0, 1, 1], [], []>} : vector<128x64xbf16>, vector<64x64xbf16>, vector<128x64xf32> -> vector<128x64xf32>
    %29 = vector.extract_strided_slice %28 {offsets = [11, 0], sizes = [104, 64], strides = [1, 1]} : vector<128x64xf32> to vector<104x64xf32>
    %30 = arith.addf %25, %29 : vector<104x64xf32>
    %c0_26 = arith.constant 0 : index
    %c5 = arith.constant 5 : index
    %c0_27 = arith.constant 0 : index
    %c0_28 = arith.constant 0 : index
    %31 = vector.load %arg4[%c0_26, %c5, %c0_27, %c0_28] : memref<1x9x64x64xbf16, #tpu.memory_space<vmem>>, vector<1x1x64x64xbf16>
    %32 = vector.shape_cast %31 : vector<1x1x64x64xbf16> to vector<64x64xbf16>
    %cst_29 = arith.constant dense<0.000000e+00> : vector<128x64xf32>
    %33 = tpu.matmul %4, %32, %cst_29 {dimension_numbers = #tpu.dot_dimension_numbers<[1], [0], [0], [1], [0, 0, 1, 1], [], []>} : vector<128x64xbf16>, vector<64x64xbf16>, vector<128x64xf32> -> vector<128x64xf32>
    %34 = vector.extract_strided_slice %33 {offsets = [12, 0], sizes = [104, 64], strides = [1, 1]} : vector<128x64xf32> to vector<104x64xf32>
    %35 = arith.addf %30, %34 : vector<104x64xf32>
    %c0_30 = arith.constant 0 : index
    %c6 = arith.constant 6 : index
    %c0_31 = arith.constant 0 : index
    %c0_32 = arith.constant 0 : index
    %36 = vector.load %arg4[%c0_30, %c6, %c0_31, %c0_32] : memref<1x9x64x64xbf16, #tpu.memory_space<vmem>>, vector<1x1x64x64xbf16>
    %37 = vector.shape_cast %36 : vector<1x1x64x64xbf16> to vector<64x64xbf16>
    %cst_33 = arith.constant dense<0.000000e+00> : vector<128x64xf32>
    %38 = tpu.matmul %4, %37, %cst_33 {dimension_numbers = #tpu.dot_dimension_numbers<[1], [0], [0], [1], [0, 0, 1, 1], [], []>} : vector<128x64xbf16>, vector<64x64xbf16>, vector<128x64xf32> -> vector<128x64xf32>
    %39 = vector.extract_strided_slice %38 {offsets = [20, 0], sizes = [104, 64], strides = [1, 1]} : vector<128x64xf32> to vector<104x64xf32>
    %40 = arith.addf %35, %39 : vector<104x64xf32>
    %c0_34 = arith.constant 0 : index
    %c7 = arith.constant 7 : index
    %c0_35 = arith.constant 0 : index
    %c0_36 = arith.constant 0 : index
    %41 = vector.load %arg4[%c0_34, %c7, %c0_35, %c0_36] : memref<1x9x64x64xbf16, #tpu.memory_space<vmem>>, vector<1x1x64x64xbf16>
    %42 = vector.shape_cast %41 : vector<1x1x64x64xbf16> to vector<64x64xbf16>
    %cst_37 = arith.constant dense<0.000000e+00> : vector<128x64xf32>
    %43 = tpu.matmul %4, %42, %cst_37 {dimension_numbers = #tpu.dot_dimension_numbers<[1], [0], [0], [1], [0, 0, 1, 1], [], []>} : vector<128x64xbf16>, vector<64x64xbf16>, vector<128x64xf32> -> vector<128x64xf32>
    %44 = vector.extract_strided_slice %43 {offsets = [21, 0], sizes = [104, 64], strides = [1, 1]} : vector<128x64xf32> to vector<104x64xf32>
    %45 = arith.addf %40, %44 : vector<104x64xf32>
    %c0_38 = arith.constant 0 : index
    %c8 = arith.constant 8 : index
    %c0_39 = arith.constant 0 : index
    %c0_40 = arith.constant 0 : index
    %46 = vector.load %arg4[%c0_38, %c8, %c0_39, %c0_40] : memref<1x9x64x64xbf16, #tpu.memory_space<vmem>>, vector<1x1x64x64xbf16>
    %47 = vector.shape_cast %46 : vector<1x1x64x64xbf16> to vector<64x64xbf16>
    %cst_41 = arith.constant dense<0.000000e+00> : vector<128x64xf32>
    %48 = tpu.matmul %4, %47, %cst_41 {dimension_numbers = #tpu.dot_dimension_numbers<[1], [0], [0], [1], [0, 0, 1, 1], [], []>} : vector<128x64xbf16>, vector<64x64xbf16>, vector<128x64xf32> -> vector<128x64xf32>
    %49 = vector.extract_strided_slice %48 {offsets = [22, 0], sizes = [104, 64], strides = [1, 1]} : vector<128x64xf32> to vector<104x64xf32>
    %50 = arith.addf %45, %49 : vector<104x64xf32>
    %c0_42 = arith.constant 0 : index
    %c0_43 = arith.constant 0 : index
    %51 = vector.load %arg10[%c0_42, %c0_43] : memref<104x64xf32, #tpu.memory_space<vmem>>, vector<104x64xf32>
    tpu.vector_store %arg10[%c0_42, %c0_43], %50 {strides = array<i32>} : memref<104x64xf32, #tpu.memory_space<vmem>>, vector<104x64xf32>,
    %c2_i32 = arith.constant 2 : i32
    %52 = arith.cmpi eq, %arg2, %c2_i32 : i32
    %53 = arith.extui %52 : i1 to i32
    %c0_i32_44 = arith.constant 0 : i32
    %54 = arith.cmpi ne, %53, %c0_i32_44 : i32
    scf.if %54 {
      %c0_45 = arith.constant 0 : index
      %c0_46 = arith.constant 0 : index
      %55 = vector.load %arg5[%c0_45, %c0_46] : memref<1x64xf32, #tpu.memory_space<vmem>>, vector<1x64xf32>
      %56 = vector.broadcast %55 : vector<1x64xf32> to vector<104x64xf32>
      %57 = arith.addf %50, %56 : vector<104x64xf32>
      %58 = arith.truncf %57 : vector<104x64xf32> to vector<104x64xbf16>
      %c0_47 = arith.constant 0 : index
      %c0_48 = arith.constant 0 : index
      %c0_49 = arith.constant 0 : index
      %c0_50 = arith.constant 0 : index
      %59 = vector.load %arg7[%c0_47, %c0_48, %c0_49, %c0_50] : memref<1x1x104x64xbf16, #tpu.memory_space<vmem>>, vector<1x1x104x64xbf16>
      %60 = vector.shape_cast %59 : vector<1x1x104x64xbf16> to vector<104x64xbf16>
      %61 = vector.shape_cast %58 : vector<104x64xbf16> to vector<1x1x104x64xbf16>
      tpu.vector_store %arg7[%c0_47, %c0_48, %c0_49, %c0_50], %61 {strides = array<i32>} : memref<1x1x104x64xbf16, #tpu.memory_space<vmem>>, vector<1x1x104x64xbf16>,
      %c0_51 = arith.constant 0 : index
      %c0_52 = arith.constant 0 : index
      %62 = vector.load %arg6[%c0_51, %c0_52] : memref<104x1xf32, #tpu.memory_space<vmem>>, vector<104x1xf32>
      %63 = vector.broadcast %62 : vector<104x1xf32> to vector<104x64xf32>
      %64 = arith.mulf %57, %63 : vector<104x64xf32>
      %cst_53 = arith.constant dense<0.000000e+00> : vector<64xf32>
      %65 = vector.multi_reduction <add>, %64, %cst_53 [0] : vector<104x64xf32> to vector<64xf32>
      %66 = vector.shape_cast %65 : vector<64xf32> to vector<1x64xf32>
      %c0_54 = arith.constant 0 : index
      %c0_55 = arith.constant 0 : index
      %c0_56 = arith.constant 0 : index
      %c0_57 = arith.constant 0 : index
      %67 = vector.load %arg8[%c0_54, %c0_55, %c0_56, %c0_57] : memref<1x1x1x64xf32, #tpu.memory_space<vmem>>, vector<1x1x1x64xf32>
      %68 = vector.shape_cast %67 : vector<1x1x1x64xf32> to vector<1x64xf32>
      %69 = vector.shape_cast %66 : vector<1x64xf32> to vector<1x1x1x64xf32>
      tpu.vector_store %arg8[%c0_54, %c0_55, %c0_56, %c0_57], %69 {strides = array<i32>} : memref<1x1x1x64xf32, #tpu.memory_space<vmem>>, vector<1x1x1x64xf32>,
      %70 = arith.mulf %64, %57 : vector<104x64xf32>
      %cst_58 = arith.constant dense<0.000000e+00> : vector<64xf32>
      %71 = vector.multi_reduction <add>, %70, %cst_58 [0] : vector<104x64xf32> to vector<64xf32>
      %72 = vector.shape_cast %71 : vector<64xf32> to vector<1x64xf32>
      %c0_59 = arith.constant 0 : index
      %c0_60 = arith.constant 0 : index
      %c0_61 = arith.constant 0 : index
      %c0_62 = arith.constant 0 : index
      %73 = vector.load %arg9[%c0_59, %c0_60, %c0_61, %c0_62] : memref<1x1x1x64xf32, #tpu.memory_space<vmem>>, vector<1x1x1x64xf32>
      %74 = vector.shape_cast %73 : vector<1x1x1x64xf32> to vector<1x64xf32>
      %75 = vector.shape_cast %72 : vector<1x64xf32> to vector<1x1x1x64xf32>
      tpu.vector_store %arg9[%c0_59, %c0_60, %c0_61, %c0_62], %75 {strides = array<i32>} : memref<1x1x1x64xf32, #tpu.memory_space<vmem>>, vector<1x1x1x64xf32>,
    } else {
    }
    return
  }
  func.func @transform_0(%arg0: i32, %arg1: i32, %arg2: i32) -> (i32, i32, i32, i32) {
    %0 = arith.addi %arg1, %arg2 : i32
    %c0_i32 = arith.constant 0 : i32
    %c0_i32_0 = arith.constant 0 : i32
    %c0_i32_1 = arith.constant 0 : i32
    return %arg0, %0, %c0_i32, %c0_i32_0 : i32, i32, i32, i32
  }
  func.func @transform_1(%arg0: i32, %arg1: i32, %arg2: i32) -> (i32, i32, i32, i32) {
    %c0_i32 = arith.constant 0 : i32
    %c0_i32_0 = arith.constant 0 : i32
    %c0_i32_1 = arith.constant 0 : i32
    %c0_i32_2 = arith.constant 0 : i32
    return %arg2, %c0_i32, %c0_i32_0, %c0_i32_1 : i32, i32, i32, i32
  }
  func.func @transform_2(%arg0: i32, %arg1: i32, %arg2: i32) -> (i32, i32) {
    %c0_i32 = arith.constant 0 : i32
    %c0_i32_0 = arith.constant 0 : i32
    %c0_i32_1 = arith.constant 0 : i32
    return %c0_i32, %c0_i32_0 : i32, i32
  }
  func.func @transform_3(%arg0: i32, %arg1: i32, %arg2: i32) -> (i32, i32) {
    %c0_i32 = arith.constant 0 : i32
    %c0_i32_0 = arith.constant 0 : i32
    %c0_i32_1 = arith.constant 0 : i32
    return %c0_i32, %c0_i32_0 : i32, i32
  }
  func.func @transform_4(%arg0: i32, %arg1: i32, %arg2: i32) -> (i32, i32, i32, i32) {
    %c0_i32 = arith.constant 0 : i32
    %c0_i32_0 = arith.constant 0 : i32
    %c0_i32_1 = arith.constant 0 : i32
    return %arg0, %arg1, %c0_i32, %c0_i32_0 : i32, i32, i32, i32
  }
  func.func @transform_5(%arg0: i32, %arg1: i32, %arg2: i32) -> (i32, i32, i32, i32) {
    %c0_i32 = arith.constant 0 : i32
    %c0_i32_0 = arith.constant 0 : i32
    %c0_i32_1 = arith.constant 0 : i32
    return %arg0, %arg1, %c0_i32, %c0_i32_0 : i32, i32, i32, i32
  }
  func.func @transform_6(%arg0: i32, %arg1: i32, %arg2: i32) -> (i32, i32, i32, i32) {
    %c0_i32 = arith.constant 0 : i32
    %c0_i32_0 = arith.constant 0 : i32
    %c0_i32_1 = arith.constant 0 : i32
    return %arg0, %arg1, %c0_i32, %c0_i32_0 : i32, i32, i32, i32
  }
}

module attributes {stable_mosaic.version = 11 : i64} {
  func.func @_bn_relu_kernel(%arg0: i32, %arg1: i32, %arg2: memref<1x1x104x64xbf16, #tpu.memory_space<vmem>>, %arg3: memref<1x64xf32, #tpu.memory_space<vmem>>, %arg4: memref<1x64xf32, #tpu.memory_space<vmem>>, %arg5: memref<1x1x104x64xf32, #tpu.memory_space<vmem>>) attributes {dimension_semantics = [#tpu.dimension_semantics<parallel>, #tpu.dimension_semantics<parallel>], iteration_bounds = array<i64: 2, 8>, scalar_prefetch = 0 : i64, scratch_operands = 0 : i64, tpu.core_type = #tpu.core_type<tc>, window_params = [{transform_indices = @transform_0, window_bounds = array<i64: 1, 1, 104, 64>}, {pipeline_mode = #tpu.pipeline_mode<synchronous>, transform_indices = @transform_1, window_bounds = array<i64: 1, 64>}, {pipeline_mode = #tpu.pipeline_mode<synchronous>, transform_indices = @transform_2, window_bounds = array<i64: 1, 64>}, {transform_indices = @transform_3, window_bounds = array<i64: 1, 1, 104, 64>}]} {
    %c0 = arith.constant 0 : index
    %c0_0 = arith.constant 0 : index
    %c0_1 = arith.constant 0 : index
    %c0_2 = arith.constant 0 : index
    %0 = vector.load %arg2[%c0, %c0_0, %c0_1, %c0_2] : memref<1x1x104x64xbf16, #tpu.memory_space<vmem>>, vector<1x1x104x64xbf16>
    %1 = vector.shape_cast %0 : vector<1x1x104x64xbf16> to vector<104x64xbf16>
    %2 = arith.extf %1 : vector<104x64xbf16> to vector<104x64xf32>
    %c0_3 = arith.constant 0 : index
    %c0_4 = arith.constant 0 : index
    %3 = vector.load %arg3[%c0_3, %c0_4] : memref<1x64xf32, #tpu.memory_space<vmem>>, vector<1x64xf32>
    %4 = vector.broadcast %3 : vector<1x64xf32> to vector<104x64xf32>
    %5 = arith.mulf %2, %4 : vector<104x64xf32>
    %c0_5 = arith.constant 0 : index
    %c0_6 = arith.constant 0 : index
    %6 = vector.load %arg4[%c0_5, %c0_6] : memref<1x64xf32, #tpu.memory_space<vmem>>, vector<1x64xf32>
    %7 = vector.broadcast %6 : vector<1x64xf32> to vector<104x64xf32>
    %8 = arith.addf %5, %7 : vector<104x64xf32>
    %cst = arith.constant 0.000000e+00 : f32
    %9 = vector.broadcast %cst : f32 to vector<104x64xf32>
    %10 = arith.maximumf %8, %9 : vector<104x64xf32>
    %c0_7 = arith.constant 0 : index
    %c0_8 = arith.constant 0 : index
    %c0_9 = arith.constant 0 : index
    %c0_10 = arith.constant 0 : index
    %11 = vector.load %arg5[%c0_7, %c0_8, %c0_9, %c0_10] : memref<1x1x104x64xf32, #tpu.memory_space<vmem>>, vector<1x1x104x64xf32>
    %12 = vector.shape_cast %11 : vector<1x1x104x64xf32> to vector<104x64xf32>
    %13 = vector.shape_cast %10 : vector<104x64xf32> to vector<1x1x104x64xf32>
    tpu.vector_store %arg5[%c0_7, %c0_8, %c0_9, %c0_10], %13 {strides = array<i32>} : memref<1x1x104x64xf32, #tpu.memory_space<vmem>>, vector<1x1x104x64xf32>,
    return
  }
  func.func @transform_0(%arg0: i32, %arg1: i32) -> (i32, i32, i32, i32) {
    %c0_i32 = arith.constant 0 : i32
    %c0_i32_0 = arith.constant 0 : i32
    %c0_i32_1 = arith.constant 0 : i32
    return %arg0, %arg1, %c0_i32, %c0_i32_0 : i32, i32, i32, i32
  }
  func.func @transform_1(%arg0: i32, %arg1: i32) -> (i32, i32) {
    %c0_i32 = arith.constant 0 : i32
    %c0_i32_0 = arith.constant 0 : i32
    %c0_i32_1 = arith.constant 0 : i32
    return %c0_i32, %c0_i32_0 : i32, i32
  }
  func.func @transform_2(%arg0: i32, %arg1: i32) -> (i32, i32) {
    %c0_i32 = arith.constant 0 : i32
    %c0_i32_0 = arith.constant 0 : i32
    %c0_i32_1 = arith.constant 0 : i32
    return %c0_i32, %c0_i32_0 : i32, i32
  }
  func.func @transform_3(%arg0: i32, %arg1: i32) -> (i32, i32, i32, i32) {
    %c0_i32 = arith.constant 0 : i32
    %c0_i32_0 = arith.constant 0 : i32
    %c0_i32_1 = arith.constant 0 : i32
    return %arg0, %arg1, %c0_i32, %c0_i32_0 : i32, i32, i32, i32
  }
}

</mosaic_0001>

<llo_original>
// kernel: up_transition_forward.5
$region0: #{up_transition_forward.5}
  #allocation0 [shape = 'u32[]', space=smem, size = 0x4, offset = 0x4, fixed_abs, tag = 'smem constant byte address 0x4 - core index']
  #allocation1 [shape = 'u32[144,128]{1,0:T(1,128)}', space=vmem, size = 0x12000, scoped, tag = 'internal scratch']
  %s0 = inlined_call_operand.vmem [shape: bf16[128,8], index: 0, kind: input, shape index: {}]
  %s1 = inlined_call_operand.vmem [shape: bf16[8,64], index: 1, kind: input, shape index: {}]
  %s2 = inlined_call_operand.vmem [shape: f32[1,64], index: 2, kind: input, shape index: {}]
  %s3 = inlined_call_operand.vmem [shape: bf16[128,64], index: 3, kind: output, shape index: {}]
  %s4 = sld [smem:[#allocation0]]
  $region22: #{up_transition_forward.5} parent=0
    _
  %s6 = ssub.s32 1, %s4
  %s7 = scalar_select 0, %s6, %s4
  // Predicated region
  $region2: #{up_transition_forward.5} parent=0 // pred_check
    _
  $region3: #{up_transition_forward.5} parent=0 // pred_check_branch
    %9 = sbr.rel (0) target = $region5
  $region4: #{up_transition_forward.5} parent=0 // pred_region
    _
  $region5: #{up_transition_forward.5} parent=0 // pred_fallthru
    _
  // Predicated region
  $region6: #{up_transition_forward.5} parent=0 // pred_check
    _
  $region7: #{up_transition_forward.5} parent=0 // pred_check_branch
    %11 = sbr.rel (0) target = $region9
  $region8: #{up_transition_forward.5} parent=0 // pred_region
    _
  $region9: #{up_transition_forward.5} parent=0 // pred_fallthru
    _
  // Predicated region
  $region10: #{up_transition_forward.5} parent=0 // pred_check
    _
  $region11: #{up_transition_forward.5} parent=0 // pred_check_branch
    %13 = sbr.rel (0) target = $region13
  $region12: #{up_transition_forward.5} parent=0 // pred_region
    _
  $region13: #{up_transition_forward.5} parent=0 // pred_fallthru
    _
  %v15 = vld [vmem:[%s0] sm:$0xf]
  %v16 = vld [vmem:[%s0 + $0x4] sm:$0xf]
  %v17 = vld [vmem:[%s0 + $0x8] sm:$0xf]
  %v18 = vld [vmem:[%s0 + $0xc] sm:$0xf]
  %v19 = vld [vmem:[%s0 + $0x10] sm:$0xf]
  %v20 = vld [vmem:[%s0 + $0x14] sm:$0xf]
  %v21 = vld [vmem:[%s0 + $0x18] sm:$0xf]
  %v22 = vld [vmem:[%s0 + $0x1c] sm:$0xf]
  %v23 = vld [vmem:[%s0 + $0x20] sm:$0xf]
  %v24 = vld [vmem:[%s0 + $0x24] sm:$0xf]
  %v25 = vld [vmem:[%s0 + $0x28] sm:$0xf]
  %v26 = vld [vmem:[%s0 + $0x2c] sm:$0xf]
  %v27 = vld [vmem:[%s0 + $0x30] sm:$0xf]
  %v28 = vld [vmem:[%s0 + $0x34] sm:$0xf]
  %v29 = vld [vmem:[%s0 + $0x38] sm:$0xf]
  %v30 = vld [vmem:[%s0 + $0x3c] sm:$0xf]
  %v31 = vld [vmem:[%s1] sm:$0xf]
  %v32 = vld [vmem:[%s2] sm:$0x1]
  %v34 = vlaneseq
  %v35 = vshrl.u32 %v34, 7
  %v36 = vsub.s32 0, %v35
  %v37 = vrot.slane %v32, %v36
  %v55 = vunpack.c.l.b16 %v15
  %v56 = vunpack.c.l.b16 %v16
  %v57 = vunpack.c.l.b16 %v17
  %v58 = vunpack.c.l.b16 %v18
  %v59 = vunpack.c.l.b16 %v19
  %v60 = vunpack.c.l.b16 %v20
  %v61 = vunpack.c.l.b16 %v21
  %v62 = vunpack.c.l.b16 %v22
  %v63 = vunpack.c.l.b16 %v23
  %v64 = vunpack.c.l.b16 %v24
  %v65 = vunpack.c.l.b16 %v25
  %v66 = vunpack.c.l.b16 %v26
  %v67 = vunpack.c.l.b16 %v27
  %v68 = vunpack.c.l.b16 %v28
  %v69 = vunpack.c.l.b16 %v29
  %v70 = vunpack.c.l.b16 %v30
  %v71 = vpack.c.b16 %v56, %v55
  %v72 = vpack.c.b16 %v58, %v57
  %v73 = vpack.c.b16 %v60, %v59
  %v74 = vpack.c.b16 %v62, %v61
  %v75 = vpack.c.b16 %v64, %v63
  %v76 = vpack.c.b16 %v66, %v65
  %v77 = vpack.c.b16 %v68, %v67
  %v78 = vpack.c.b16 %v70, %v69
  %vm79 = vcmask 64512
  %v81 = vsel %vm79, %v71, 0
  %v84 = vsel %vm79, %v72, 0
  %v87 = vsel %vm79, %v73, 0
  %v90 = vsel %vm79, %v74, 0
  %v93 = vsel %vm79, %v75, 0
  %v96 = vsel %vm79, %v76, 0
  %v99 = vsel %vm79, %v77, 0
  %v102 = vsel %vm79, %v78, 0
  %vm104 = vcmask 1043456
  %v106 = vsel %vm104, %v31, 0
  %108 = vmatprep.subr.bf16.mxu0 0
  %109 = vmatpush1.bf16.msra.mxu0 0
  %110 = vmatprep.subr.bf16.mxu0 0
  %111 = vmatpush1.bf16.msra.mxu0 0
  %112 = vmatprep.subr.bf16.mxu0 0
  %113 = vmatpush1.bf16.msra.mxu0 0
  %114 = vmatprep.subr.bf16.mxu0 0
  %115 = vmatpush1.bf16.msra.mxu0 0
  %116 = vmatprep.subr.bf16.mxu0 0
  %117 = vmatpush1.bf16.msra.mxu0 0
  %118 = vmatprep.subr.bf16.mxu0 0
  %119 = vmatpush1.bf16.msra.mxu0 0
  %120 = vmatprep.subr.bf16.mxu0 0
  %121 = vmatpush1.bf16.msra.mxu0 0
  %122 = vmatprep.subr.bf16.mxu0 0
  %123 = vmatpush1.bf16.msra.mxu0 %v106
  %124 = vmatprep.subr.bf16.mxu0 0
  %125 = vmatpush2.bf16.msra.mxu0 0
  %126 = vmatprep.subr.bf16.mxu0 0
  %127 = vmatpush2.bf16.msra.mxu0 0
  %128 = vmatprep.subr.bf16.mxu0 0
  %129 = vmatpush2.bf16.msra.mxu0 0
  %130 = vmatprep.subr.bf16.mxu0 0
  %131 = vmatpush2.bf16.msra.mxu0 0
  %132 = vmatprep.subr.bf16.mxu0 0
  %133 = vmatpush2.bf16.msra.mxu0 0
  %134 = vmatprep.subr.bf16.mxu0 0
  %135 = vmatpush2.bf16.msra.mxu0 0
  %136 = vmatprep.subr.bf16.mxu0 0
  %137 = vmatpush2.bf16.msra.mxu0 0
  %138 = vmatprep.subr.bf16.mxu0 0
  %139 = vmatpush2.bf16.msra.mxu0 0
  %140 = vmatprep.mubr.bf16.mxu0 0
  %141 = vmatmul.mubr.bf16.gmra.mxu0 %v81
  %v142 = vpop.f32.mrf.mxu0
  %v143 = vadd.f32 %v37, %v142
  %v144 = vpop.f32.mrf.mxu0
  %v145 = vpop.f32.mrf.mxu0
  %v146 = vadd.f32 %v37, %v145
  %v147 = vpop.f32.mrf.mxu0
  %148 = vmatprep.mubr.bf16.mxu0 0
  %149 = vmatmul.mubr.bf16.gmra.mxu0 %v84
  %v150 = vpop.f32.mrf.mxu0
  %v151 = vadd.f32 %v37, %v150
  %v152 = vpop.f32.mrf.mxu0
  %v153 = vpop.f32.mrf.mxu0
  %v154 = vadd.f32 %v37, %v153
  %v155 = vpop.f32.mrf.mxu0
  %156 = vmatprep.mubr.bf16.mxu0 0
  %157 = vmatmul.mubr.bf16.gmra.mxu0 %v87
  %v158 = vpop.f32.mrf.mxu0
  %v159 = vadd.f32 %v37, %v158
  %v160 = vpop.f32.mrf.mxu0
  %v161 = vpop.f32.mrf.mxu0
  %v162 = vadd.f32 %v37, %v161
  %v163 = vpop.f32.mrf.mxu0
  %164 = vmatprep.mubr.bf16.mxu0 0
  %165 = vmatmul.mubr.bf16.gmra.mxu0 %v90
  %v166 = vpop.f32.mrf.mxu0
  %v167 = vadd.f32 %v37, %v166
  %v168 = vpop.f32.mrf.mxu0
  %v169 = vpop.f32.mrf.mxu0
  %v170 = vadd.f32 %v37, %v169
  %v171 = vpop.f32.mrf.mxu0
  %172 = vmatprep.mubr.bf16.mxu0 0
  %173 = vmatmul.mubr.bf16.gmra.mxu0 %v93
  %v174 = vpop.f32.mrf.mxu0
  %v175 = vadd.f32 %v37, %v174
  %v176 = vpop.f32.mrf.mxu0
  %v177 = vpop.f32.mrf.mxu0
  %v178 = vadd.f32 %v37, %v177
  %v179 = vpop.f32.mrf.mxu0
  %180 = vmatprep.mubr.bf16.mxu0 0
  %181 = vmatmul.mubr.bf16.gmra.mxu0 %v96
  %v182 = vpop.f32.mrf.mxu0
  %v183 = vadd.f32 %v37, %v182
  %v184 = vpop.f32.mrf.mxu0
  %v185 = vpop.f32.mrf.mxu0
  %v186 = vadd.f32 %v37, %v185
  %v187 = vpop.f32.mrf.mxu0
  %188 = vmatprep.mubr.bf16.mxu0 0
  %189 = vmatmul.mubr.bf16.gmra.mxu0 %v99
  %v190 = vpop.f32.mrf.mxu0
  %v191 = vadd.f32 %v37, %v190
  %v192 = vpop.f32.mrf.mxu0
  %v193 = vpop.f32.mrf.mxu0
  %v194 = vadd.f32 %v37, %v193
  %v195 = vpop.f32.mrf.mxu0
  %196 = vmatprep.mubr.bf16.mxu0 0
  %197 = vmatmul.mubr.bf16.gmra.mxu0 %v102
  %v198 = vpop.f32.mrf.mxu0
  %v199 = vadd.f32 %v37, %v198
  %v200 = vpop.f32.mrf.mxu0
  %v201 = vpop.f32.mrf.mxu0
  %v202 = vadd.f32 %v37, %v201
  %v203 = vpop.f32.mrf.mxu0
  %204 = vdwg.mxu0
  %v205 = vpack.c.bf16 %v146, %v143
  %v206 = vpack.c.bf16 %v154, %v151
  %v207 = vpack.c.bf16 %v162, %v159
  %v208 = vpack.c.bf16 %v170, %v167
  %v209 = vpack.c.bf16 %v178, %v175
  %v210 = vpack.c.bf16 %v186, %v183
  %v211 = vpack.c.bf16 %v194, %v191
  %v212 = vpack.c.bf16 %v202, %v199
  %v221 = vunpack.c.l.b16 %v205
  %v222 = vunpack.c.h.b16 %v205
  %v223 = vunpack.c.l.b16 %v206
  %v224 = vunpack.c.h.b16 %v206
  %v225 = vunpack.c.l.b16 %v207
  %v226 = vunpack.c.h.b16 %v207
  %v227 = vunpack.c.l.b16 %v208
  %v228 = vunpack.c.h.b16 %v208
  %v229 = vunpack.c.l.b16 %v209
  %v230 = vunpack.c.h.b16 %v209
  %v231 = vunpack.c.l.b16 %v210
  %v232 = vunpack.c.h.b16 %v210
  %v233 = vunpack.c.l.b16 %v211
  %v234 = vunpack.c.h.b16 %v211
  %v235 = vunpack.c.l.b16 %v212
  %v236 = vunpack.c.h.b16 %v212
  %v237 = vpack.c.b16 %v221, %v221
  %v238 = vpack.c.b16 %v222, %v222
  %v239 = vpack.c.b16 %v223, %v223
  %v240 = vpack.c.b16 %v224, %v224
  %v241 = vpack.c.b16 %v225, %v225
  %v242 = vpack.c.b16 %v226, %v226
  %v243 = vpack.c.b16 %v227, %v227
  %v244 = vpack.c.b16 %v228, %v228
  %v245 = vpack.c.b16 %v229, %v229
  %v246 = vpack.c.b16 %v230, %v230
  %v247 = vpack.c.b16 %v231, %v231
  %v248 = vpack.c.b16 %v232, %v232
  %v249 = vpack.c.b16 %v233, %v233
  %v250 = vpack.c.b16 %v234, %v234
  %v251 = vpack.c.b16 %v235, %v235
  %v252 = vpack.c.b16 %v236, %v236
  %vm269 = vcmask 519168
  %270 = vst.msk [vmem:[%s3] sm:$0xf] %vm269, %v237
  %271 = vst.msk [vmem:[%s3 + $0x4] sm:$0xf] %vm269, %v238
  %272 = vst.msk [vmem:[%s3 + $0x8] sm:$0xf] %vm269, %v239
  %273 = vst.msk [vmem:[%s3 + $0xc] sm:$0xf] %vm269, %v240
  %274 = vst.msk [vmem:[%s3 + $0x10] sm:$0xf] %vm269, %v241
  %275 = vst.msk [vmem:[%s3 + $0x14] sm:$0xf] %vm269, %v242
  %276 = vst.msk [vmem:[%s3 + $0x18] sm:$0xf] %vm269, %v243
  %277 = vst.msk [vmem:[%s3 + $0x1c] sm:$0xf] %vm269, %v244
  %278 = vst.msk [vmem:[%s3 + $0x20] sm:$0xf] %vm269, %v245
  %279 = vst.msk [vmem:[%s3 + $0x24] sm:$0xf] %vm269, %v246
  %280 = vst.msk [vmem:[%s3 + $0x28] sm:$0xf] %vm269, %v247
  %281 = vst.msk [vmem:[%s3 + $0x2c] sm:$0xf] %vm269, %v248
  %282 = vst.msk [vmem:[%s3 + $0x30] sm:$0xf] %vm269, %v249
  %283 = vst.msk [vmem:[%s3 + $0x34] sm:$0xf] %vm269, %v250
  %284 = vst.msk [vmem:[%s3 + $0x38] sm:$0xf] %vm269, %v251
  %285 = vst.msk [vmem:[%s3 + $0x3c] sm:$0xf] %vm269, %v252
  // Predicated region
  $region14: #{up_transition_forward.5} parent=0 // pred_check
    _
  $region15: #{up_transition_forward.5} parent=0 // pred_check_branch
    %287 = sbr.rel (0) target = $region17
  $region16: #{up_transition_forward.5} parent=0 // pred_region
    _
  $region17: #{up_transition_forward.5} parent=0 // pred_fallthru
    _
  // Predicated region
  $region18: #{up_transition_forward.5} parent=0 // pred_check
    _
  $region19: #{up_transition_forward.5} parent=0 // pred_check_branch
    %289 = sbr.rel (0) target = $region21
  $region20: #{up_transition_forward.5} parent=0 // pred_region
    _
  $region21: #{up_transition_forward.5} parent=0 // pred_fallthru
    _

// kernel: up_transition_forward.7
$region0: #{up_transition_forward.7}
  #allocation0 [shape = 'u32[]', space=smem, size = 0x4, offset = 0x4, fixed_abs, tag = 'smem constant byte address 0x4 - core index']
  #allocation1 [shape = 'u32[144,128]{1,0:T(1,128)}', space=vmem, size = 0x12000, scoped, tag = 'internal scratch']
  %s0 = inlined_call_operand.vmem [shape: bf16[2,8,104,64], index: 0, kind: input, shape index: {}]
  %s1 = inlined_call_operand.vmem [shape: f32[1,64], index: 1, kind: input, shape index: {}]
  %s2 = inlined_call_operand.vmem [shape: f32[1,64], index: 2, kind: input, shape index: {}]
  %s3 = inlined_call_operand.vmem [shape: bf16[2,8,104,64], index: 3, kind: output, shape index: {}]
  %s4 = sld [smem:[#allocation0]]
  $region45: #{up_transition_forward.7} parent=0
    _
  %s6 = ssub.s32 1, %s4
  %s7 = scalar_select 0, %s6, %s4
  loop: start=0, step=1, limit=18
  $region2: #{up_transition_forward.7} parent=0 // loop_pre_header
    _
  $region3: #{up_transition_forward.7} parent=0 // loop_header
    %s9 = sphi 0, %s13
    %p10 = scmp.ge.s32.totalorder %s9, 18
    %s16 = sphi 0, %s28
    %s17 = sphi 0, %s24
    %s18 = sphi 0, %s16
    %s19 = sphi 0, %s17
    %s20 = sphi 0, %s18
    %s21 = sphi 0, %s19
    %s33 = sphi 0, %s35
    %s36 = sphi 0, %s33
    %s37 = sphi 0, %s36
    %s53 = sphi 0, %s37
    %s57 = sphi 0, %s57
    %s59 = sphi 0, %s57
    %s60 = sphi 0, %s59
    %s74 = sphi 0, %s60
    %s78 = sphi 0, %s78
    %s80 = sphi 0, %s78
    %s81 = sphi 0, %s80
    %s95 = sphi 0, %s81
    %s103 = sphi 0, %s105
    %s106 = sphi 0, %s103
    %s107 = sphi 0, %s106
    %s123 = sphi 0, %s107
  $region4: #{up_transition_forward.7} parent=0 // loop_header_branch
    %12 = sbr.rel (%p10) target = $region8
  $region5: #{up_transition_forward.7} parent=0 // loop_body
    %s14 = ssub.s32 %s9, 1
    %s15 = ssub.s32 %s9, 2
    %s22 = sadd.s32 1, %s17
    %p23 = scmp.ge.s32.totalorder %s22, 8
    %s24 = scalar_select %p23, 0, %s22
    %s25 = sadd.s32 1, %s16
    %s26 = scalar_select %p23, %s25, %s16
    %p27 = scmp.ge.s32.totalorder %s26, 2
    %s28 = scalar_select %p27, 0, %s26
    %s29 = ssub.s32 %s16, %s28
    %s30 = ssub.s32 %s17, %s24
    %s31 = sor.u32 %s29, %s30
    %p32 = scmp.eq.s32.totalorder %s31, 0
    %s34 = sadd.s32 %s33, 1
    %s35 = scalar_select %p32, %s33, %s34
    %p38 = pneg %p32
    %p39 = scmp.eq.s32.totalorder %s9, 15
    %p40 = por %p38, %p39
    %p41 = scmp.ne.s32.totalorder %s33, %s36
    %p42 = scmp.eq.s32.totalorder %s9, 0
    %p43 = por %p41, %p42
    %p44 = scmp.ne.s32.totalorder %s33, %s36
    %p45 = scmp.eq.s32.totalorder %s14, 15
    %p46 = por %p44, %p45
    %p47 = scmp.ne.s32.totalorder %s36, %s37
    %p48 = scmp.eq.s32.totalorder %s14, 0
    %p49 = por %p47, %p48
    %p50 = scmp.ne.s32.totalorder %s36, %s37
    %p51 = scmp.eq.s32.totalorder %s15, 15
    %p52 = por %p50, %p51
    %p54 = scmp.ne.s32.totalorder %s37, %s53
    %p55 = scmp.eq.s32.totalorder %s15, 0
    %p56 = por %p54, %p55
    %s58 = sadd.s32 %s57, 1
    %p61 = scmp.eq.s32.totalorder %s9, 15
    %p62 = scmp.ne.s32.totalorder %s57, %s59
    %p63 = scmp.eq.s32.totalorder %s9, 0
    %p64 = por %p62, %p63
    %p65 = scmp.ne.s32.totalorder %s57, %s59
    %p66 = scmp.eq.s32.totalorder %s14, 15
    %p67 = por %p65, %p66
    %p68 = scmp.ne.s32.totalorder %s59, %s60
    %p69 = scmp.eq.s32.totalorder %s14, 0
    %p70 = por %p68, %p69
    %p71 = scmp.ne.s32.totalorder %s59, %s60
    %p72 = scmp.eq.s32.totalorder %s15, 15
    %p73 = por %p71, %p72
    %p75 = scmp.ne.s32.totalorder %s60, %s74
    %p76 = scmp.eq.s32.totalorder %s15, 0
    %p77 = por %p75, %p76
    %s79 = sadd.s32 %s78, 1
    %p82 = scmp.eq.s32.totalorder %s9, 15
    %p83 = scmp.ne.s32.totalorder %s78, %s80
    %p84 = scmp.eq.s32.totalorder %s9, 0
    %p85 = por %p83, %p84
    %p86 = scmp.ne.s32.totalorder %s78, %s80
    %p87 = scmp.eq.s32.totalorder %s14, 15
    %p88 = por %p86, %p87
    %p89 = scmp.ne.s32.totalorder %s80, %s81
    %p90 = scmp.eq.s32.totalorder %s14, 0
    %p91 = por %p89, %p90
    %p92 = scmp.ne.s32.totalorder %s80, %s81
    %p93 = scmp.eq.s32.totalorder %s15, 15
    %p94 = por %p92, %p93
    %p96 = scmp.ne.s32.totalorder %s81, %s95
    %p97 = scmp.eq.s32.totalorder %s15, 0
    %p98 = por %p96, %p97
    %s99 = ssub.s32 %s16, %s28
    %s100 = ssub.s32 %s17, %s24
    %s101 = sor.u32 %s99, %s100
    %p102 = scmp.eq.s32.totalorder %s101, 0
    %s104 = sadd.s32 %s103, 1
    %s105 = scalar_select %p102, %s103, %s104
    %p108 = pneg %p102
    %p109 = scmp.eq.s32.totalorder %s9, 15
    %p110 = por %p108, %p109
    %p111 = scmp.ne.s32.totalorder %s103, %s106
    %p112 = scmp.eq.s32.totalorder %s9, 0
    %p113 = por %p111, %p112
    %p114 = scmp.ne.s32.totalorder %s103, %s106
    %p115 = scmp.eq.s32.totalorder %s14, 15
    %p116 = por %p114, %p115
    %p117 = scmp.ne.s32.totalorder %s106, %s107
    %p118 = scmp.eq.s32.totalorder %s14, 0
    %p119 = por %p117, %p118
    %p120 = scmp.ne.s32.totalorder %s106, %s107
    %p121 = scmp.eq.s32.totalorder %s15, 15
    %p122 = por %p120, %p121
    %p124 = scmp.ne.s32.totalorder %s107, %s123
    %p125 = scmp.eq.s32.totalorder %s15, 0
    %p126 = por %p124, %p125
    %p127 = scmp.le.s32.totalorder 1, %s9
    %p128 = scmp.lt.s32.totalorder %s9, 17
    %p129 = pnand %p127, %p128
    %p130 = pneg %p129
    // Predicated region
    $region9: #{up_transition_forward.7} parent=5 // pred_check
      _
    $region10: #{up_transition_forward.7} parent=5 // pred_check_branch
      %132 = sbr.rel (%p129) target = $region12
    $region11: #{up_transition_forward.7} parent=5 // pred_region
      %s133 = ssub.s32 %s9, 1
      // Predicated region
      $region13: #{up_transition_forward.7} parent=11 // pred_check
        %p134 = pneg %p70
      $region14: #{up_transition_forward.7} parent=11 // pred_check_branch
        %136 = sbr.rel (%p134) target = $region16
      $region15: #{up_transition_forward.7} parent=11 // pred_region
        _
      $region16: #{up_transition_forward.7} parent=11 // pred_fallthru
        _
      // Predicated region
      $region17: #{up_transition_forward.7} parent=11 // pred_check
        %p137 = pneg %p91
      $region18: #{up_transition_forward.7} parent=11 // pred_check_branch
        %139 = sbr.rel (%p137) target = $region20
      $region19: #{up_transition_forward.7} parent=11 // pred_region
        _
      $region20: #{up_transition_forward.7} parent=11 // pred_fallthru
        _
    $region12: #{up_transition_forward.7} parent=5 // pred_fallthru
      _
    %p140 = scmp.lt.s32.totalorder %s9, 16
    // Predicated region
    $region21: #{up_transition_forward.7} parent=5 // pred_check
      %p141 = pneg %p140
    $region22: #{up_transition_forward.7} parent=5 // pred_check_branch
      %143 = sbr.rel (%p141) target = $region24
    $region23: #{up_transition_forward.7} parent=5 // pred_region
      // Predicated region
      $region25: #{up_transition_forward.7} parent=23 // pred_check
        %p144 = pneg %p43
      $region26: #{up_transition_forward.7} parent=23 // pred_check_branch
        %146 = sbr.rel (%p144) target = $region28
      $region27: #{up_transition_forward.7} parent=23 // pred_region
        %p147 = scmp.lt.s32.totalorder %s16, 1
        %s148 = scalar_select %p147, %s16, 1
        %p149 = scmp.lt.s32.totalorder %s17, 7
        %s150 = scalar_select %p149, %s17, 7
        %s151 = smul.addr %s150, 13
        %s152 = smul.addr %s148, 104
        %s153 = sadd.s32 %s151, %s152
        %s154 = smul.addr %s153, 4
        %s155 = scalar_lea.vmem %s0, %s154
      $region28: #{up_transition_forward.7} parent=23 // pred_fallthru
        _
    $region24: #{up_transition_forward.7} parent=5 // pred_fallthru
      _
    %p156 = scmp.le.s32.totalorder 1, %s9
    %p157 = scmp.lt.s32.totalorder %s9, 17
    %p158 = pnand %p156, %p157
    %p159 = pneg %p158
    // Predicated region
    $region29: #{up_transition_forward.7} parent=5 // pred_check
      _
    $region30: #{up_transition_forward.7} parent=5 // pred_check_branch
      %161 = sbr.rel (%p158) target = $region32
    $region31: #{up_transition_forward.7} parent=5 // pred_region
      %s162 = ssub.s32 %s9, 1
      %p163 = scmp.lt.s32.totalorder %s18, 1
      %s164 = scalar_select %p163, %s18, 1
      %p165 = scmp.lt.s32.totalorder %s19, 7
      %s166 = scalar_select %p165, %s19, 7
      %s167 = smul.addr %s166, 13
      %s168 = smul.addr %s164, 104
      %s169 = sadd.s32 %s167, %s168
      %s170 = smul.addr %s169, 4
      %s171 = scalar_lea.vmem %s0, %s170
      %p172 = pneg %p49
      %p173 = pneg %p46
      %p174 = pneg %p70
      %p175 = pneg %p67
      %p176 = pneg %p91
      %p177 = pneg %p88
      %p178 = pneg %p119
      %p179 = pneg %p116
      %p180 = scmp.lt.s32.totalorder %s18, 1
      %s181 = scalar_select %p180, %s18, 1
      %p182 = scmp.lt.s32.totalorder %s19, 7
      %s183 = scalar_select %p182, %s19, 7
      %s184 = smul.addr %s183, 13
      %s185 = smul.addr %s181, 104
      %s186 = sadd.s32 %s184, %s185
      %s187 = smul.addr %s186, 4
      %s188 = scalar_lea.vmem %s3, %s187
      %p189 = scmp.lt.s32.totalorder %s18, 1
      %s190 = scalar_select %p189, %s18, 1
      %p191 = scmp.lt.s32.totalorder %s19, 7
      %s192 = scalar_select %p191, %s19, 7
      %s193 = smul.addr %s192, 13
      %s194 = smul.addr %s190, 104
      %s195 = sadd.s32 %s193, %s194
      %s196 = smul.addr %s195, 4
      %s197 = scalar_lea.vmem %s0, %s196
      %p198 = scmp.lt.s32.totalorder %s18, 1
      %s199 = scalar_select %p198, %s18, 1
      %p200 = scmp.lt.s32.totalorder %s19, 7
      %s201 = scalar_select %p200, %s19, 7
      %s202 = smul.addr %s201, 13
      %s203 = smul.addr %s199, 104
      %s204 = sadd.s32 %s202, %s203
      %s205 = smul.addr %s204, 4
      %s206 = scalar_lea.vmem %s3, %s205
      %v207 = vld [vmem:[%s197] sm:$0xf]
      %v208 = vld [vmem:[%s197 + $0x4] sm:$0xf]
      %v209 = vld [vmem:[%s197 + $0x8] sm:$0xf]
      %v210 = vld [vmem:[%s197 + $0xc] sm:$0xf]
      %v211 = vld [vmem:[%s197 + $0x10] sm:$0xf]
      %v212 = vld [vmem:[%s197 + $0x14] sm:$0xf]
      %v213 = vld [vmem:[%s197 + $0x18] sm:$0xf]
      %v214 = vld [vmem:[%s197 + $0x1c] sm:$0xf]
      %v215 = vld [vmem:[%s197 + $0x20] sm:$0xf]
      %v216 = vld [vmem:[%s197 + $0x24] sm:$0xf]
      %v217 = vld [vmem:[%s197 + $0x28] sm:$0xf]
      %v218 = vld [vmem:[%s197 + $0x2c] sm:$0xf]
      %v219 = vld [vmem:[%s197 + $0x30] sm:$0xf]
      %v220 = vunpack.c.l.bf16 %v207
      %v221 = vunpack.c.l.bf16 %v208
      %v222 = vunpack.c.l.bf16 %v209
      %v223 = vunpack.c.l.bf16 %v210
      %v224 = vunpack.c.l.bf16 %v211
      %v225 = vunpack.c.l.bf16 %v212
      %v226 = vunpack.c.l.bf16 %v213
      %v227 = vunpack.c.l.bf16 %v214
      %v228 = vunpack.c.l.bf16 %v215
      %v229 = vunpack.c.l.bf16 %v216
      %v230 = vunpack.c.l.bf16 %v217
      %v231 = vunpack.c.l.bf16 %v218
      %v232 = vunpack.c.l.bf16 %v219
      %v233 = vld [vmem:[%s1] sm:$0x1]
      %v235 = vlaneseq
      %v236 = vshrl.u32 %v235, 7
      %v237 = vsub.s32 0, %v236
      %v238 = vrot.slane %v233, %v237
      %v240 = vmul.f32 %v220, %v238
      %v241 = vmul.f32 %v221, %v238
      %v242 = vmul.f32 %v222, %v238
      %v243 = vmul.f32 %v223, %v238
      %v244 = vmul.f32 %v224, %v238
      %v245 = vmul.f32 %v225, %v238
      %v246 = vmul.f32 %v226, %v238
      %v247 = vmul.f32 %v227, %v238
      %v248 = vmul.f32 %v228, %v238
      %v249 = vmul.f32 %v229, %v238
      %v250 = vmul.f32 %v230, %v238
      %v251 = vmul.f32 %v231, %v238
      %v252 = vmul.f32 %v232, %v238
      %v253 = vld [vmem:[%s2] sm:$0x1]
      %v255 = vlaneseq
      %v256 = vshrl.u32 %v255, 7
      %v257 = vsub.s32 0, %v256
      %v258 = vrot.slane %v253, %v257
      %v260 = vadd.f32 %v240, %v258
      %v261 = vadd.f32 %v241, %v258
      %v262 = vadd.f32 %v242, %v258
      %v263 = vadd.f32 %v243, %v258
      %v264 = vadd.f32 %v244, %v258
      %v265 = vadd.f32 %v245, %v258
      %v266 = vadd.f32 %v246, %v258
      %v267 = vadd.f32 %v247, %v258
      %v268 = vadd.f32 %v248, %v258
      %v269 = vadd.f32 %v249, %v258
      %v270 = vadd.f32 %v250, %v258
      %v271 = vadd.f32 %v251, %v258
      %v272 = vadd.f32 %v252, %v258
      %v273 = vmax.f32 %v260, 0.0
      %v274 = vmax.f32 %v261, 0.0
      %v275 = vmax.f32 %v262, 0.0
      %v276 = vmax.f32 %v263, 0.0
      %v277 = vmax.f32 %v264, 0.0
      %v278 = vmax.f32 %v265, 0.0
      %v279 = vmax.f32 %v266, 0.0
      %v280 = vmax.f32 %v267, 0.0
      %v281 = vmax.f32 %v268, 0.0
      %v282 = vmax.f32 %v269, 0.0
      %v283 = vmax.f32 %v270, 0.0
      %v284 = vmax.f32 %v271, 0.0
      %v285 = vmax.f32 %v272, 0.0
      %v286 = vpack.c.bf16 %v274, %v273
      %v287 = vpack.c.bf16 %v276, %v275
      %v288 = vpack.c.bf16 %v278, %v277
      %v289 = vpack.c.bf16 %v280, %v279
      %v290 = vpack.c.bf16 %v282, %v281
      %v291 = vpack.c.bf16 %v284, %v283
      %v292 = vpack.c.bf16 %v285, %v285
      %v300 = vunpack.c.l.b16 %v286
      %v301 = vunpack.c.h.b16 %v286
      %v302 = vunpack.c.l.b16 %v287
      %v303 = vunpack.c.h.b16 %v287
      %v304 = vunpack.c.l.b16 %v288
      %v305 = vunpack.c.h.b16 %v288
      %v306 = vunpack.c.l.b16 %v289
      %v307 = vunpack.c.h.b16 %v289
      %v308 = vunpack.c.l.b16 %v290
      %v309 = vunpack.c.h.b16 %v290
      %v310 = vunpack.c.l.b16 %v291
      %v311 = vunpack.c.h.b16 %v291
      %v312 = vunpack.c.l.b16 %v292
      %v313 = vpack.c.b16 %v300, %v300
      %v314 = vpack.c.b16 %v301, %v301
      %v315 = vpack.c.b16 %v302, %v302
      %v316 = vpack.c.b16 %v303, %v303
      %v317 = vpack.c.b16 %v304, %v304
      %v318 = vpack.c.b16 %v305, %v305
      %v319 = vpack.c.b16 %v306, %v306
      %v320 = vpack.c.b16 %v307, %v307
      %v321 = vpack.c.b16 %v308, %v308
      %v322 = vpack.c.b16 %v309, %v309
      %v323 = vpack.c.b16 %v310, %v310
      %v324 = vpack.c.b16 %v311, %v311
      %v325 = vpack.c.b16 %v312, %v312
      %vm339 = vcmask 519168
      %340 = vst.msk [vmem:[%s206] sm:$0xf] %vm339, %v313
      %341 = vst.msk [vmem:[%s206 + $0x4] sm:$0xf] %vm339, %v314
      %342 = vst.msk [vmem:[%s206 + $0x8] sm:$0xf] %vm339, %v315
      %343 = vst.msk [vmem:[%s206 + $0xc] sm:$0xf] %vm339, %v316
      %344 = vst.msk [vmem:[%s206 + $0x10] sm:$0xf] %vm339, %v317
      %345 = vst.msk [vmem:[%s206 + $0x14] sm:$0xf] %vm339, %v318
      %346 = vst.msk [vmem:[%s206 + $0x18] sm:$0xf] %vm339, %v319
      %347 = vst.msk [vmem:[%s206 + $0x1c] sm:$0xf] %vm339, %v320
      %348 = vst.msk [vmem:[%s206 + $0x20] sm:$0xf] %vm339, %v321
      %349 = vst.msk [vmem:[%s206 + $0x24] sm:$0xf] %vm339, %v322
      %350 = vst.msk [vmem:[%s206 + $0x28] sm:$0xf] %vm339, %v323
      %351 = vst.msk [vmem:[%s206 + $0x2c] sm:$0xf] %vm339, %v324
      %352 = vst.msk [vmem:[%s206 + $0x30] sm:$0xf] %vm339, %v325
      %p353 = scmp.lt.s32.totalorder %s18, 1
      %s354 = scalar_select %p353, %s18, 1
      %p355 = scmp.lt.s32.totalorder %s19, 7
      %s356 = scalar_select %p355, %s19, 7
      %s357 = smul.addr %s356, 13
      %s358 = smul.addr %s354, 104
      %s359 = sadd.s32 %s357, %s358
      %s360 = smul.addr %s359, 4
      %s361 = scalar_lea.vmem %s3, %s360
      // Predicated region
      $region33: #{up_transition_forward.7} parent=31 // pred_check
        %p362 = pneg %p116
      $region34: #{up_transition_forward.7} parent=31 // pred_check_branch
        %364 = sbr.rel (%p362) target = $region36
      $region35: #{up_transition_forward.7} parent=31 // pred_region
        _
      $region36: #{up_transition_forward.7} parent=31 // pred_fallthru
        _
    $region32: #{up_transition_forward.7} parent=5 // pred_fallthru
      _
    %p365 = scmp.le.s32.totalorder 2, %s9
    // Predicated region
    $region37: #{up_transition_forward.7} parent=5 // pred_check
      %p366 = pneg %p365
    $region38: #{up_transition_forward.7} parent=5 // pred_check_branch
      %368 = sbr.rel (%p366) target = $region40
    $region39: #{up_transition_forward.7} parent=5 // pred_region
      %s369 = ssub.s32 %s9, 2
      // Predicated region
      $region41: #{up_transition_forward.7} parent=39 // pred_check
        %p370 = pneg %p122
      $region42: #{up_transition_forward.7} parent=39 // pred_check_branch
        %372 = sbr.rel (%p370) target = $region44
      $region43: #{up_transition_forward.7} parent=39 // pred_region
        %p373 = scmp.lt.s32.totalorder %s20, 1
        %s374 = scalar_select %p373, %s20, 1
        %p375 = scmp.lt.s32.totalorder %s21, 7
        %s376 = scalar_select %p375, %s21, 7
        %s377 = smul.addr %s376, 13
        %s378 = smul.addr %s374, 104
        %s379 = sadd.s32 %s377, %s378
        %s380 = smul.addr %s379, 4
        %s381 = scalar_lea.vmem %s3, %s380
      $region44: #{up_transition_forward.7} parent=39 // pred_fallthru
        _
    $region40: #{up_transition_forward.7} parent=5 // pred_fallthru
      _
  $region6: #{up_transition_forward.7} parent=0 // loop_footer
    %s13 = sadd.s32 1, %s9
  $region7: #{up_transition_forward.7} parent=0 // loop_footer_branch
    %8 = sbr.rel target = $region3
  $region8: #{up_transition_forward.7} parent=0 // loop_exit
    _

// kernel: up_transition_forward.6
$region0: #{up_transition_forward.6}
  #allocation0 [shape = 'u32[]', space=smem, size = 0x4, offset = 0x4, fixed_abs, tag = 'smem constant byte address 0x4 - core index']
  #allocation1 [shape = 'u32[144,128]{1,0:T(1,128)}', space=vmem, size = 0x12000, scoped, tag = 'internal scratch']
  #allocation2 [shape = 'f32[104,64]{1,0:T(8,128)}', space=vmem, size = 0xd000, scoped, tag = 'scratch operand']
  %s0 = inlined_call_operand.vmem [shape: bf16[2,10,128,12], index: 0, kind: input, shape index: {}]
  %s1 = inlined_call_operand.vmem [shape: bf16[3,9,12,64], index: 1, kind: input, shape index: {}]
  %s2 = inlined_call_operand.vmem [shape: f32[1,64], index: 2, kind: input, shape index: {}]
  %s3 = inlined_call_operand.vmem [shape: f32[104,1], index: 3, kind: input, shape index: {}]
  %s4 = inlined_call_operand.vmem [shape: bf16[2,8,104,64], index: 4, kind: output, shape index: {0}]
  %s5 = inlined_call_operand.vmem [shape: f32[2,8,1,64], index: 5, kind: output, shape index: {1}]
  %s6 = inlined_call_operand.vmem [shape: f32[2,8,1,64], index: 6, kind: output, shape index: {2}]
  %7 = xla_tuple %s4, %s5, %s6
  %s8 = sld [smem:[#allocation0]]
  $region73: #{up_transition_forward.6} parent=0
    _
  %s10 = ssub.s32 1, %s8
  %s11 = scalar_select 0, %s10, %s8
  loop: start=0, step=1, limit=50
  $region2: #{up_transition_forward.6} parent=0 // loop_pre_header
    _
  $region3: #{up_transition_forward.6} parent=0 // loop_header
    %s13 = sphi 0, %s17
    %p14 = scmp.ge.s32.totalorder %s13, 50
    %s20 = sphi 0, %s39
    %s21 = sphi 0, %s35
    %s22 = sphi 0, %s31
    %s23 = sphi 0, %s20
    %s24 = sphi 0, %s21
    %s25 = sphi 0, %s22
    %s26 = sphi 0, %s23
    %s27 = sphi 0, %s24
    %s28 = sphi 0, %s25
    %s46 = sphi 0, %s48
    %s49 = sphi 0, %s46
    %s50 = sphi 0, %s49
    %s66 = sphi 0, %s50
    %s72 = sphi 0, %s74
    %s75 = sphi 0, %s72
    %s76 = sphi 0, %s75
    %s92 = sphi 0, %s76
    %s96 = sphi 0, %s96
    %s98 = sphi 0, %s96
    %s99 = sphi 0, %s98
    %s113 = sphi 0, %s99
    %s117 = sphi 0, %s117
    %s119 = sphi 0, %s117
    %s120 = sphi 0, %s119
    %s134 = sphi 0, %s120
    %s142 = sphi 0, %s144
    %s145 = sphi 0, %s142
    %s146 = sphi 0, %s145
    %s162 = sphi 0, %s146
    %s170 = sphi 0, %s172
    %s173 = sphi 0, %s170
    %s174 = sphi 0, %s173
    %s190 = sphi 0, %s174
    %s198 = sphi 0, %s200
    %s201 = sphi 0, %s198
    %s202 = sphi 0, %s201
    %s218 = sphi 0, %s202
  $region4: #{up_transition_forward.6} parent=0 // loop_header_branch
    %16 = sbr.rel (%p14) target = $region8
  $region5: #{up_transition_forward.6} parent=0 // loop_body
    %s18 = ssub.s32 %s13, 1
    %s19 = ssub.s32 %s13, 2
    %s29 = sadd.s32 1, %s22
    %p30 = scmp.ge.s32.totalorder %s29, 3
    %s31 = scalar_select %p30, 0, %s29
    %s32 = sadd.s32 1, %s21
    %s33 = scalar_select %p30, %s32, %s21
    %p34 = scmp.ge.s32.totalorder %s33, 8
    %s35 = scalar_select %p34, 0, %s33
    %s36 = sadd.s32 1, %s20
    %s37 = scalar_select %p34, %s36, %s20
    %p38 = scmp.ge.s32.totalorder %s37, 2
    %s39 = scalar_select %p38, 0, %s37
    %s40 = sadd.s32 %s21, %s22
    %s41 = sadd.s32 %s35, %s31
    %s42 = ssub.s32 %s20, %s39
    %s43 = ssub.s32 %s40, %s41
    %s44 = sor.u32 %s42, %s43
    %p45 = scmp.eq.s32.totalorder %s44, 0
    %s47 = sadd.s32 %s46, 1
    %s48 = scalar_select %p45, %s46, %s47
    %p51 = pneg %p45
    %p52 = scmp.eq.s32.totalorder %s13, 47
    %p53 = por %p51, %p52
    %p54 = scmp.ne.s32.totalorder %s46, %s49
    %p55 = scmp.eq.s32.totalorder %s13, 0
    %p56 = por %p54, %p55
    %p57 = scmp.ne.s32.totalorder %s46, %s49
    %p58 = scmp.eq.s32.totalorder %s18, 47
    %p59 = por %p57, %p58
    %p60 = scmp.ne.s32.totalorder %s49, %s50
    %p61 = scmp.eq.s32.totalorder %s18, 0
    %p62 = por %p60, %p61
    %p63 = scmp.ne.s32.totalorder %s49, %s50
    %p64 = scmp.eq.s32.totalorder %s19, 47
    %p65 = por %p63, %p64
    %p67 = scmp.ne.s32.totalorder %s50, %s66
    %p68 = scmp.eq.s32.totalorder %s19, 0
    %p69 = por %p67, %p68
    %s70 = ssub.s32 %s22, %s31
    %p71 = scmp.eq.s32.totalorder %s70, 0
    %s73 = sadd.s32 %s72, 1
    %s74 = scalar_select %p71, %s72, %s73
    %p77 = pneg %p71
    %p78 = scmp.eq.s32.totalorder %s13, 47
    %p79 = por %p77, %p78
    %p80 = scmp.ne.s32.totalorder %s72, %s75
    %p81 = scmp.eq.s32.totalorder %s13, 0
    %p82 = por %p80, %p81
    %p83 = scmp.ne.s32.totalorder %s72, %s75
    %p84 = scmp.eq.s32.totalorder %s18, 47
    %p85 = por %p83, %p84
    %p86 = scmp.ne.s32.totalorder %s75, %s76
    %p87 = scmp.eq.s32.totalorder %s18, 0
    %p88 = por %p86, %p87
    %p89 = scmp.ne.s32.totalorder %s75, %s76
    %p90 = scmp.eq.s32.totalorder %s19, 47
    %p91 = por %p89, %p90
    %p93 = scmp.ne.s32.totalorder %s76, %s92
    %p94 = scmp.eq.s32.totalorder %s19, 0
    %p95 = por %p93, %p94
    %s97 = sadd.s32 %s96, 1
    %p100 = scmp.eq.s32.totalorder %s13, 47
    %p101 = scmp.ne.s32.totalorder %s96, %s98
    %p102 = scmp.eq.s32.totalorder %s13, 0
    %p103 = por %p101, %p102
    %p104 = scmp.ne.s32.totalorder %s96, %s98
    %p105 = scmp.eq.s32.totalorder %s18, 47
    %p106 = por %p104, %p105
    %p107 = scmp.ne.s32.totalorder %s98, %s99
    %p108 = scmp.eq.s32.totalorder %s18, 0
    %p109 = por %p107, %p108
    %p110 = scmp.ne.s32.totalorder %s98, %s99
    %p111 = scmp.eq.s32.totalorder %s19, 47
    %p112 = por %p110, %p111
    %p114 = scmp.ne.s32.totalorder %s99, %s113
    %p115 = scmp.eq.s32.totalorder %s19, 0
    %p116 = por %p114, %p115
    %s118 = sadd.s32 %s117, 1
    %p121 = scmp.eq.s32.totalorder %s13, 47
    %p122 = scmp.ne.s32.totalorder %s117, %s119
    %p123 = scmp.eq.s32.totalorder %s13, 0
    %p124 = por %p122, %p123
    %p125 = scmp.ne.s32.totalorder %s117, %s119
    %p126 = scmp.eq.s32.totalorder %s18, 47
    %p127 = por %p125, %p126
    %p128 = scmp.ne.s32.totalorder %s119, %s120
    %p129 = scmp.eq.s32.totalorder %s18, 0
    %p130 = por %p128, %p129
    %p131 = scmp.ne.s32.totalorder %s119, %s120
    %p132 = scmp.eq.s32.totalorder %s19, 47
    %p133 = por %p131, %p132
    %p135 = scmp.ne.s32.totalorder %s120, %s134
    %p136 = scmp.eq.s32.totalorder %s19, 0
    %p137 = por %p135, %p136
    %s138 = ssub.s32 %s20, %s39
    %s139 = ssub.s32 %s21, %s35
    %s140 = sor.u32 %s138, %s139
    %p141 = scmp.eq.s32.totalorder %s140, 0
    %s143 = sadd.s32 %s142, 1
    %s144 = scalar_select %p141, %s142, %s143
    %p147 = pneg %p141
    %p148 = scmp.eq.s32.totalorder %s13, 47
    %p149 = por %p147, %p148
    %p150 = scmp.ne.s32.totalorder %s142, %s145
    %p151 = scmp.eq.s32.totalorder %s13, 0
    %p152 = por %p150, %p151
    %p153 = scmp.ne.s32.totalorder %s142, %s145
    %p154 = scmp.eq.s32.totalorder %s18, 47
    %p155 = por %p153, %p154
    %p156 = scmp.ne.s32.totalorder %s145, %s146
    %p157 = scmp.eq.s32.totalorder %s18, 0
    %p158 = por %p156, %p157
    %p159 = scmp.ne.s32.totalorder %s145, %s146
    %p160 = scmp.eq.s32.totalorder %s19, 47
    %p161 = por %p159, %p160
    %p163 = scmp.ne.s32.totalorder %s146, %s162
    %p164 = scmp.eq.s32.totalorder %s19, 0
    %p165 = por %p163, %p164
    %s166 = ssub.s32 %s20, %s39
    %s167 = ssub.s32 %s21, %s35
    %s168 = sor.u32 %s166, %s167
    %p169 = scmp.eq.s32.totalorder %s168, 0
    %s171 = sadd.s32 %s170, 1
    %s172 = scalar_select %p169, %s170, %s171
    %p175 = pneg %p169
    %p176 = scmp.eq.s32.totalorder %s13, 47
    %p177 = por %p175, %p176
    %p178 = scmp.ne.s32.totalorder %s170, %s173
    %p179 = scmp.eq.s32.totalorder %s13, 0
    %p180 = por %p178, %p179
    %p181 = scmp.ne.s32.totalorder %s170, %s173
    %p182 = scmp.eq.s32.totalorder %s18, 47
    %p183 = por %p181, %p182
    %p184 = scmp.ne.s32.totalorder %s173, %s174
    %p185 = scmp.eq.s32.totalorder %s18, 0
    %p186 = por %p184, %p185
    %p187 = scmp.ne.s32.totalorder %s173, %s174
    %p188 = scmp.eq.s32.totalorder %s19, 47
    %p189 = por %p187, %p188
    %p191 = scmp.ne.s32.totalorder %s174, %s190
    %p192 = scmp.eq.s32.totalorder %s19, 0
    %p193 = por %p191, %p192
    %s194 = ssub.s32 %s20, %s39
    %s195 = ssub.s32 %s21, %s35
    %s196 = sor.u32 %s194, %s195
    %p197 = scmp.eq.s32.totalorder %s196, 0
    %s199 = sadd.s32 %s198, 1
    %s200 = scalar_select %p197, %s198, %s199
    %p203 = pneg %p197
    %p204 = scmp.eq.s32.totalorder %s13, 47
    %p205 = por %p203, %p204
    %p206 = scmp.ne.s32.totalorder %s198, %s201
    %p207 = scmp.eq.s32.totalorder %s13, 0
    %p208 = por %p206, %p207
    %p209 = scmp.ne.s32.totalorder %s198, %s201
    %p210 = scmp.eq.s32.totalorder %s18, 47
    %p211 = por %p209, %p210
    %p212 = scmp.ne.s32.totalorder %s201, %s202
    %p213 = scmp.eq.s32.totalorder %s18, 0
    %p214 = por %p212, %p213
    %p215 = scmp.ne.s32.totalorder %s201, %s202
    %p216 = scmp.eq.s32.totalorder %s19, 47
    %p217 = por %p215, %p216
    %p219 = scmp.ne.s32.totalorder %s202, %s218
    %p220 = scmp.eq.s32.totalorder %s19, 0
    %p221 = por %p219, %p220
    %p222 = scmp.le.s32.totalorder 1, %s13
    %p223 = scmp.lt.s32.totalorder %s13, 49
    %p224 = pnand %p222, %p223
    %p225 = pneg %p224
    // Predicated region
    $region9: #{up_transition_forward.6} parent=5 // pred_check
      _
    $region10: #{up_transition_forward.6} parent=5 // pred_check_branch
      %227 = sbr.rel (%p224) target = $region12
    $region11: #{up_transition_forward.6} parent=5 // pred_region
      %s228 = ssub.s32 %s13, 1
      // Predicated region
      $region13: #{up_transition_forward.6} parent=11 // pred_check
        %p229 = pneg %p109
      $region14: #{up_transition_forward.6} parent=11 // pred_check_branch
        %231 = sbr.rel (%p229) target = $region16
      $region15: #{up_transition_forward.6} parent=11 // pred_region
        _
      $region16: #{up_transition_forward.6} parent=11 // pred_fallthru
        _
      // Predicated region
      $region17: #{up_transition_forward.6} parent=11 // pred_check
        %p232 = pneg %p130
      $region18: #{up_transition_forward.6} parent=11 // pred_check_branch
        %234 = sbr.rel (%p232) target = $region20
      $region19: #{up_transition_forward.6} parent=11 // pred_region
        _
      $region20: #{up_transition_forward.6} parent=11 // pred_fallthru
        _
    $region12: #{up_transition_forward.6} parent=5 // pred_fallthru
      _
    %p235 = scmp.lt.s32.totalorder %s13, 48
    // Predicated region
    $region21: #{up_transition_forward.6} parent=5 // pred_check
      %p236 = pneg %p235
    $region22: #{up_transition_forward.6} parent=5 // pred_check_branch
      %238 = sbr.rel (%p236) target = $region24
    $region23: #{up_transition_forward.6} parent=5 // pred_region
      // Predicated region
      $region25: #{up_transition_forward.6} parent=23 // pred_check
        %p239 = pneg %p56
      $region26: #{up_transition_forward.6} parent=23 // pred_check_branch
        %241 = sbr.rel (%p239) target = $region28
      $region27: #{up_transition_forward.6} parent=23 // pred_region
        %s242 = sadd.s32 %s21, %s22
        %p243 = scmp.lt.s32.totalorder %s20, 1
        %s244 = scalar_select %p243, %s20, 1
        %p245 = scmp.lt.s32.totalorder %s242, 9
        %s246 = scalar_select %p245, %s242, 9
        %s247 = smul.addr %s246, 16
        %s248 = smul.addr %s244, 160
        %s249 = sadd.s32 %s247, %s248
        %s250 = smul.addr %s249, 4
        %s251 = scalar_lea.vmem %s0, %s250
        %s252 = sadd.s32 %s21, %s22
      $region28: #{up_transition_forward.6} parent=23 // pred_fallthru
        _
      // Predicated region
      $region29: #{up_transition_forward.6} parent=23 // pred_check
        %p253 = pneg %p82
      $region30: #{up_transition_forward.6} parent=23 // pred_check_branch
        %255 = sbr.rel (%p253) target = $region32
      $region31: #{up_transition_forward.6} parent=23 // pred_region
        %p256 = scmp.lt.s32.totalorder %s22, 2
        %s257 = scalar_select %p256, %s22, 2
        %s258 = smul.addr %s257, 18
        %s259 = smul.addr %s258, 4
        %s260 = scalar_lea.vmem %s1, %s259
      $region32: #{up_transition_forward.6} parent=23 // pred_fallthru
        _
    $region24: #{up_transition_forward.6} parent=5 // pred_fallthru
      _
    %p261 = scmp.le.s32.totalorder 1, %s13
    %p262 = scmp.lt.s32.totalorder %s13, 49
    %p263 = pnand %p261, %p262
    %p264 = pneg %p263
    // Predicated region
    $region33: #{up_transition_forward.6} parent=5 // pred_check
      _
    $region34: #{up_transition_forward.6} parent=5 // pred_check_branch
      %266 = sbr.rel (%p263) target = $region36
    $region35: #{up_transition_forward.6} parent=5 // pred_region
      %s267 = ssub.s32 %s13, 1
      %s268 = sadd.s32 %s24, %s25
      %p269 = scmp.lt.s32.totalorder %s23, 1
      %s270 = scalar_select %p269, %s23, 1
      %p271 = scmp.lt.s32.totalorder %s268, 9
      %s272 = scalar_select %p271, %s268, 9
      %s273 = smul.addr %s272, 16
      %s274 = smul.addr %s270, 160
      %s275 = sadd.s32 %s273, %s274
      %s276 = smul.addr %s275, 4
      %s277 = scalar_lea.vmem %s0, %s276
      %p278 = pneg %p62
      %p279 = pneg %p59
      %p280 = scmp.lt.s32.totalorder %s25, 2
      %s281 = scalar_select %p280, %s25, 2
      %s282 = smul.addr %s281, 18
      %s283 = smul.addr %s282, 4
      %s284 = scalar_lea.vmem %s1, %s283
      %p285 = pneg %p88
      %p286 = pneg %p85
      %p287 = pneg %p109
      %p288 = pneg %p106
      %p289 = pneg %p130
      %p290 = pneg %p127
      %p291 = pneg %p158
      %p292 = pneg %p155
      %p293 = scmp.lt.s32.totalorder %s23, 1
      %s294 = scalar_select %p293, %s23, 1
      %p295 = scmp.lt.s32.totalorder %s24, 7
      %s296 = scalar_select %p295, %s24, 7
      %s297 = smul.addr %s296, 13
      %s298 = smul.addr %s294, 104
      %s299 = sadd.s32 %s297, %s298
      %s300 = smul.addr %s299, 4
      %s301 = scalar_lea.vmem %s4, %s300
      %p302 = pneg %p186
      %p303 = pneg %p183
      %p304 = scmp.lt.s32.totalorder %s23, 1
      %s305 = scalar_select %p304, %s23, 1
      %p306 = scmp.lt.s32.totalorder %s24, 7
      %s307 = scalar_select %p306, %s24, 7
      %s308 = smul.addr %s305, 8
      %s309 = sadd.s32 %s307, %s308
      %s310 = scalar_lea.vmem %s5, %s309
      %p311 = pneg %p214
      %p312 = pneg %p211
      %p313 = scmp.lt.s32.totalorder %s23, 1
      %s314 = scalar_select %p313, %s23, 1
      %p315 = scmp.lt.s32.totalorder %s24, 7
      %s316 = scalar_select %p315, %s24, 7
      %s317 = smul.addr %s314, 8
      %s318 = sadd.s32 %s316, %s317
      %s319 = scalar_lea.vmem %s6, %s318
      %s320 = sadd.s32 %s24, %s25
      %p321 = scmp.lt.s32.totalorder %s23, 1
      %s322 = scalar_select %p321, %s23, 1
      %p323 = scmp.lt.s32.totalorder %s320, 9
      %s324 = scalar_select %p323, %s320, 9
      %s325 = smul.addr %s324, 16
      %s326 = smul.addr %s322, 160
      %s327 = sadd.s32 %s325, %s326
      %s328 = smul.addr %s327, 4
      %s329 = scalar_lea.vmem %s0, %s328
      %s330 = sadd.s32 %s24, %s25
      %p331 = scmp.lt.s32.totalorder %s25, 2
      %s332 = scalar_select %p331, %s25, 2
      %s333 = smul.addr %s332, 18
      %s334 = smul.addr %s333, 4
      %s335 = scalar_lea.vmem %s1, %s334
      %p336 = scmp.lt.s32.totalorder %s23, 1
      %s337 = scalar_select %p336, %s23, 1
      %p338 = scmp.lt.s32.totalorder %s24, 7
      %s339 = scalar_select %p338, %s24, 7
      %s340 = smul.addr %s339, 13
      %s341 = smul.addr %s337, 104
      %s342 = sadd.s32 %s340, %s341
      %s343 = smul.addr %s342, 4
      %s344 = scalar_lea.vmem %s4, %s343
      %p345 = scmp.lt.s32.totalorder %s23, 1
      %s346 = scalar_select %p345, %s23, 1
      %p347 = scmp.lt.s32.totalorder %s24, 7
      %s348 = scalar_select %p347, %s24, 7
      %s349 = smul.addr %s346, 8
      %s350 = sadd.s32 %s348, %s349
      %s351 = scalar_lea.vmem %s5, %s350
      %p352 = scmp.lt.s32.totalorder %s23, 1
      %s353 = scalar_select %p352, %s23, 1
      %p354 = scmp.lt.s32.totalorder %s24, 7
      %s355 = scalar_select %p354, %s24, 7
      %s356 = smul.addr %s353, 8
      %s357 = sadd.s32 %s355, %s356
      %s358 = scalar_lea.vmem %s6, %s357
      %p360 = scmp.eq.s32.totalorder %s25, 0
      // Predicated region
      $region37: #{up_transition_forward.6} parent=35 // pred_check
        %p361 = pneg %p360
      $region38: #{up_transition_forward.6} parent=35 // pred_check_branch
        %363 = sbr.rel (%p361) target = $region40
      $region39: #{up_transition_forward.6} parent=35 // pred_region
        %vm364 = vcmask 523264
        %365 = vst.msk [vmem:[#allocation2] sm:$0xff] %vm364, 0.0
        %366 = vst.msk [vmem:[#allocation2 + $0x8] sm:$0xff] %vm364, 0.0
        %367 = vst.msk [vmem:[#allocation2 + $0x10] sm:$0xff] %vm364, 0.0
        %368 = vst.msk [vmem:[#allocation2 + $0x18] sm:$0xff] %vm364, 0.0
        %369 = vst.msk [vmem:[#allocation2 + $0x20] sm:$0xff] %vm364, 0.0
        %370 = vst.msk [vmem:[#allocation2 + $0x28] sm:$0xff] %vm364, 0.0
        %371 = vst.msk [vmem:[#allocation2 + $0x30] sm:$0xff] %vm364, 0.0
        %372 = vst.msk [vmem:[#allocation2 + $0x38] sm:$0xff] %vm364, 0.0
        %373 = vst.msk [vmem:[#allocation2 + $0x40] sm:$0xff] %vm364, 0.0
        %374 = vst.msk [vmem:[#allocation2 + $0x48] sm:$0xff] %vm364, 0.0
        %375 = vst.msk [vmem:[#allocation2 + $0x50] sm:$0xff] %vm364, 0.0
        %376 = vst.msk [vmem:[#allocation2 + $0x58] sm:$0xff] %vm364, 0.0
        %377 = vst.msk [vmem:[#allocation2 + $0x60] sm:$0xff] %vm364, 0.0
      $region40: #{up_transition_forward.6} parent=35 // pred_fallthru
        _
      %v378 = vld [vmem:[%s329] sm:$0xf]
      %v379 = vld [vmem:[%s329 + $0x4] sm:$0xf]
      %v380 = vld [vmem:[%s329 + $0x8] sm:$0xf]
      %v381 = vld [vmem:[%s329 + $0xc] sm:$0xf]
      %v382 = vld [vmem:[%s329 + $0x10] sm:$0xf]
      %v383 = vld [vmem:[%s329 + $0x14] sm:$0xf]
      %v384 = vld [vmem:[%s329 + $0x18] sm:$0xf]
      %v385 = vld [vmem:[%s329 + $0x1c] sm:$0xf]
      %v386 = vld [vmem:[%s329 + $0x20] sm:$0xf]
      %v387 = vld [vmem:[%s329 + $0x24] sm:$0xf]
      %v388 = vld [vmem:[%s329 + $0x28] sm:$0xf]
      %v389 = vld [vmem:[%s329 + $0x2c] sm:$0xf]
      %v390 = vld [vmem:[%s329 + $0x30] sm:$0xf]
      %v391 = vld [vmem:[%s329 + $0x34] sm:$0xf]
      %v392 = vld [vmem:[%s329 + $0x38] sm:$0xf]
      %v393 = vld [vmem:[%s329 + $0x3c] sm:$0xf]
      %v394 = vld [vmem:[#allocation2] sm:$0xff]
      %v395 = vld [vmem:[#allocation2 + $0x8] sm:$0xff]
      %v396 = vld [vmem:[#allocation2 + $0x10] sm:$0xff]
      %v397 = vld [vmem:[#allocation2 + $0x18] sm:$0xff]
      %v398 = vld [vmem:[#allocation2 + $0x20] sm:$0xff]
      %v399 = vld [vmem:[#allocation2 + $0x28] sm:$0xff]
      %v400 = vld [vmem:[#allocation2 + $0x30] sm:$0xff]
      %v401 = vld [vmem:[#allocation2 + $0x38] sm:$0xff]
      %v402 = vld [vmem:[#allocation2 + $0x40] sm:$0xff]
      %v403 = vld [vmem:[#allocation2 + $0x48] sm:$0xff]
      %v404 = vld [vmem:[#allocation2 + $0x50] sm:$0xff]
      %v405 = vld [vmem:[#allocation2 + $0x58] sm:$0xff]
      %v406 = vld [vmem:[#allocation2 + $0x60] sm:$0xff]
      %v407 = vld [vmem:[%s335] sm:$0xf]
      %v408 = vld [vmem:[%s335 + $0x4] sm:$0x3]
      %v425 = vunpack.c.l.b16 %v378
      %v426 = vunpack.c.l.b16 %v379
      %v427 = vunpack.c.l.b16 %v380
      %v428 = vunpack.c.l.b16 %v381
      %v429 = vunpack.c.l.b16 %v382
      %v430 = vunpack.c.l.b16 %v383
      %v431 = vunpack.c.l.b16 %v384
      %v432 = vunpack.c.l.b16 %v385
      %v433 = vunpack.c.l.b16 %v386
      %v434 = vunpack.c.l.b16 %v387
      %v435 = vunpack.c.l.b16 %v388
      %v436 = vunpack.c.l.b16 %v389
      %v437 = vunpack.c.l.b16 %v390
      %v438 = vunpack.c.l.b16 %v391
      %v439 = vunpack.c.l.b16 %v392
      %v440 = vunpack.c.l.b16 %v393
      %v441 = vpack.c.b16 %v426, %v425
      %v442 = vpack.c.b16 %v428, %v427
      %v443 = vpack.c.b16 %v430, %v429
      %v444 = vpack.c.b16 %v432, %v431
      %v445 = vpack.c.b16 %v434, %v433
      %v446 = vpack.c.b16 %v436, %v435
      %v447 = vpack.c.b16 %v438, %v437
      %v448 = vpack.c.b16 %v440, %v439
      %v451 = vunpack.c.l.b16 %v407
      %v452 = vunpack.c.l.b16 %v408
      %v453 = vpack.c.b16 %v452, %v451
      %vm454 = vcmask 97280
      %v456 = vsel %vm454, %v441, 0
      %v459 = vsel %vm454, %v442, 0
      %v462 = vsel %vm454, %v443, 0
      %v465 = vsel %vm454, %v444, 0
      %v468 = vsel %vm454, %v445, 0
      %v471 = vsel %vm454, %v446, 0
      %v474 = vsel %vm454, %v447, 0
      %v477 = vsel %vm454, %v448, 0
      %vm479 = vcmask 1045504
      %v481 = vsel %vm479, %v453, 0
      %483 = vmatprep.subr.bf16.mxu0 0
      %484 = vmatpush1.bf16.msra.mxu0 0
      %485 = vmatprep.subr.bf16.mxu0 0
      %486 = vmatpush1.bf16.msra.mxu0 0
      %487 = vmatprep.subr.bf16.mxu0 0
      %488 = vmatpush1.bf16.msra.mxu0 0
      %489 = vmatprep.subr.bf16.mxu0 0
      %490 = vmatpush1.bf16.msra.mxu0 0
      %491 = vmatprep.subr.bf16.mxu0 0
      %492 = vmatpush1.bf16.msra.mxu0 0
      %493 = vmatprep.subr.bf16.mxu0 0
      %494 = vmatpush1.bf16.msra.mxu0 0
      %495 = vmatprep.subr.bf16.mxu0 0
      %496 = vmatpush1.bf16.msra.mxu0 0
      %497 = vmatprep.subr.bf16.mxu0 0
      %498 = vmatpush1.bf16.msra.mxu0 %v481
      %499 = vmatprep.subr.bf16.mxu0 0
      %500 = vmatpush2.bf16.msra.mxu0 0
      %501 = vmatprep.subr.bf16.mxu0 0
      %502 = vmatpush2.bf16.msra.mxu0 0
      %503 = vmatprep.subr.bf16.mxu0 0
      %504 = vmatpush2.bf16.msra.mxu0 0
      %505 = vmatprep.subr.bf16.mxu0 0
      %506 = vmatpush2.bf16.msra.mxu0 0
      %507 = vmatprep.subr.bf16.mxu0 0
      %508 = vmatpush2.bf16.msra.mxu0 0
      %509 = vmatprep.subr.bf16.mxu0 0
      %510 = vmatpush2.bf16.msra.mxu0 0
      %511 = vmatprep.subr.bf16.mxu0 0
      %512 = vmatpush2.bf16.msra.mxu0 0
      %513 = vmatprep.subr.bf16.mxu0 0
      %514 = vmatpush2.bf16.msra.mxu0 0
      %515 = vmatprep.mubr.bf16.mxu0 0
      %516 = vmatmul.mubr.bf16.gmra.mxu0 %v456
      %v517 = vpop.f32.mrf.mxu0
      %v518 = vadd.f32 0.0, %v517
      %v519 = vpop.f32.mrf.mxu0
      %v520 = vpop.f32.mrf.mxu0
      %v521 = vadd.f32 0.0, %v520
      %v522 = vpop.f32.mrf.mxu0
      %523 = vmatprep.mubr.bf16.mxu0 0
      %524 = vmatmul.mubr.bf16.gmra.mxu0 %v459
      %v525 = vpop.f32.mrf.mxu0
      %v526 = vadd.f32 0.0, %v525
      %v527 = vpop.f32.mrf.mxu0
      %v528 = vpop.f32.mrf.mxu0
      %v529 = vadd.f32 0.0, %v528
      %v530 = vpop.f32.mrf.mxu0
      %531 = vmatprep.mubr.bf16.mxu0 0
      %532 = vmatmul.mubr.bf16.gmra.mxu0 %v462
      %v533 = vpop.f32.mrf.mxu0
      %v534 = vadd.f32 0.0, %v533
      %v535 = vpop.f32.mrf.mxu0
      %v536 = vpop.f32.mrf.mxu0
      %v537 = vadd.f32 0.0, %v536
      %v538 = vpop.f32.mrf.mxu0
      %539 = vmatprep.mubr.bf16.mxu0 0
      %540 = vmatmul.mubr.bf16.gmra.mxu0 %v465
      %v541 = vpop.f32.mrf.mxu0
      %v542 = vadd.f32 0.0, %v541
      %v543 = vpop.f32.mrf.mxu0
      %v544 = vpop.f32.mrf.mxu0
      %v545 = vadd.f32 0.0, %v544
      %v546 = vpop.f32.mrf.mxu0
      %547 = vmatprep.mubr.bf16.mxu0 0
      %548 = vmatmul.mubr.bf16.gmra.mxu0 %v468
      %v549 = vpop.f32.mrf.mxu0
      %v550 = vadd.f32 0.0, %v549
      %v551 = vpop.f32.mrf.mxu0
      %v552 = vpop.f32.mrf.mxu0
      %v553 = vadd.f32 0.0, %v552
      %v554 = vpop.f32.mrf.mxu0
      %555 = vmatprep.mubr.bf16.mxu0 0
      %556 = vmatmul.mubr.bf16.gmra.mxu0 %v471
      %v557 = vpop.f32.mrf.mxu0
      %v558 = vadd.f32 0.0, %v557
      %v559 = vpop.f32.mrf.mxu0
      %v560 = vpop.f32.mrf.mxu0
      %v561 = vadd.f32 0.0, %v560
      %v562 = vpop.f32.mrf.mxu0
      %563 = vmatprep.mubr.bf16.mxu0 0
      %564 = vmatmul.mubr.bf16.gmra.mxu0 %v474
      %v565 = vpop.f32.mrf.mxu0
      %v566 = vadd.f32 0.0, %v565
      %v567 = vpop.f32.mrf.mxu0
      %v568 = vpop.f32.mrf.mxu0
      %v569 = vpop.f32.mrf.mxu0
      %570 = vmatprep.mubr.bf16.mxu0 0
      %571 = vmatmul.mubr.bf16.gmra.mxu0 %v477
      %v572 = vpop.f32.mrf.mxu0
      %v573 = vpop.f32.mrf.mxu0
      %v574 = vpop.f32.mrf.mxu0
      %v575 = vpop.f32.mrf.mxu0
      %576 = vdwg.mxu0
      %v577 = vadd.f32 %v394, %v518
      %v578 = vadd.f32 %v395, %v521
      %v579 = vadd.f32 %v396, %v526
      %v580 = vadd.f32 %v397, %v529
      %v581 = vadd.f32 %v398, %v534
      %v582 = vadd.f32 %v399, %v537
      %v583 = vadd.f32 %v400, %v542
      %v584 = vadd.f32 %v401, %v545
      %v585 = vadd.f32 %v402, %v550
      %v586 = vadd.f32 %v403, %v553
      %v587 = vadd.f32 %v404, %v558
      %v588 = vadd.f32 %v405, %v561
      %v589 = vadd.f32 %v406, %v566
      %s590 = scalar_lea.vmem %s335, 8
      %v591 = vld [vmem:[%s590] sm:$0xf]
      %v592 = vld [vmem:[%s590 + $0x4] sm:$0x3]
      %v595 = vunpack.c.l.b16 %v591
      %v596 = vunpack.c.l.b16 %v592
      %v597 = vpack.c.b16 %v596, %v595
      %v599 = vsel %vm479, %v597, 0
      %601 = vmatprep.subr.bf16.mxu0 0
      %602 = vmatpush1.bf16.msra.mxu0 0
      %603 = vmatprep.subr.bf16.mxu0 0
      %604 = vmatpush1.bf16.msra.mxu0 0
      %605 = vmatprep.subr.bf16.mxu0 0
      %606 = vmatpush1.bf16.msra.mxu0 0
      %607 = vmatprep.subr.bf16.mxu0 0
      %608 = vmatpush1.bf16.msra.mxu0 0
      %609 = vmatprep.subr.bf16.mxu0 0
      %610 = vmatpush1.bf16.msra.mxu0 0
      %611 = vmatprep.subr.bf16.mxu0 0
      %612 = vmatpush1.bf16.msra.mxu0 0
      %613 = vmatprep.subr.bf16.mxu0 0
      %614 = vmatpush1.bf16.msra.mxu0 0
      %615 = vmatprep.subr.bf16.mxu0 0
      %616 = vmatpush1.bf16.msra.mxu0 %v599
      %617 = vmatprep.subr.bf16.mxu0 0
      %618 = vmatpush2.bf16.msra.mxu0 0
      %619 = vmatprep.subr.bf16.mxu0 0
      %620 = vmatpush2.bf16.msra.mxu0 0
      %621 = vmatprep.subr.bf16.mxu0 0
      %622 = vmatpush2.bf16.msra.mxu0 0
      %623 = vmatprep.subr.bf16.mxu0 0
      %624 = vmatpush2.bf16.msra.mxu0 0
      %625 = vmatprep.subr.bf16.mxu0 0
      %626 = vmatpush2.bf16.msra.mxu0 0
      %627 = vmatprep.subr.bf16.mxu0 0
      %628 = vmatpush2.bf16.msra.mxu0 0
      %629 = vmatprep.subr.bf16.mxu0 0
      %630 = vmatpush2.bf16.msra.mxu0 0
      %631 = vmatprep.subr.bf16.mxu0 0
      %632 = vmatpush2.bf16.msra.mxu0 0
      %633 = vmatprep.mubr.bf16.mxu0 0
      %634 = vmatmul.mubr.bf16.gmra.mxu0 %v456
      %v635 = vpop.f32.mrf.mxu0
      %v636 = vadd.f32 0.0, %v635
      %v637 = vpop.f32.mrf.mxu0
      %v638 = vpop.f32.mrf.mxu0
      %v639 = vadd.f32 0.0, %v638
      %v640 = vpop.f32.mrf.mxu0
      %641 = vmatprep.mubr.bf16.mxu0 0
      %642 = vmatmul.mubr.bf16.gmra.mxu0 %v459
      %v643 = vpop.f32.mrf.mxu0
      %v644 = vadd.f32 0.0, %v643
      %v645 = vpop.f32.mrf.mxu0
      %v646 = vpop.f32.mrf.mxu0
      %v647 = vadd.f32 0.0, %v646
      %v648 = vpop.f32.mrf.mxu0
      %649 = vmatprep.mubr.bf16.mxu0 0
      %650 = vmatmul.mubr.bf16.gmra.mxu0 %v462
      %v651 = vpop.f32.mrf.mxu0
      %v652 = vadd.f32 0.0, %v651
      %v653 = vpop.f32.mrf.mxu0
      %v654 = vpop.f32.mrf.mxu0
      %v655 = vadd.f32 0.0, %v654
      %v656 = vpop.f32.mrf.mxu0
      %657 = vmatprep.mubr.bf16.mxu0 0
      %658 = vmatmul.mubr.bf16.gmra.mxu0 %v465
      %v659 = vpop.f32.mrf.mxu0
      %v660 = vadd.f32 0.0, %v659
      %v661 = vpop.f32.mrf.mxu0
      %v662 = vpop.f32.mrf.mxu0
      %v663 = vadd.f32 0.0, %v662
      %v664 = vpop.f32.mrf.mxu0
      %665 = vmatprep.mubr.bf16.mxu0 0
      %666 = vmatmul.mubr.bf16.gmra.mxu0 %v468
      %v667 = vpop.f32.mrf.mxu0
      %v668 = vadd.f32 0.0, %v667
      %v669 = vpop.f32.mrf.mxu0
      %v670 = vpop.f32.mrf.mxu0
      %v671 = vadd.f32 0.0, %v670
      %v672 = vpop.f32.mrf.mxu0
      %673 = vmatprep.mubr.bf16.mxu0 0
      %674 = vmatmul.mubr.bf16.gmra.mxu0 %v471
      %v675 = vpop.f32.mrf.mxu0
      %v676 = vadd.f32 0.0, %v675
      %v677 = vpop.f32.mrf.mxu0
      %v678 = vpop.f32.mrf.mxu0
      %v679 = vadd.f32 0.0, %v678
      %v680 = vpop.f32.mrf.mxu0
      %681 = vmatprep.mubr.bf16.mxu0 0
      %682 = vmatmul.mubr.bf16.gmra.mxu0 %v474
      %v683 = vpop.f32.mrf.mxu0
      %v684 = vadd.f32 0.0, %v683
      %v685 = vpop.f32.mrf.mxu0
      %v686 = vpop.f32.mrf.mxu0
      %v687 = vadd.f32 0.0, %v686
      %v688 = vpop.f32.mrf.mxu0
      %689 = vmatprep.mubr.bf16.mxu0 0
      %690 = vmatmul.mubr.bf16.gmra.mxu0 %v477
      %v691 = vpop.f32.mrf.mxu0
      %v692 = vpop.f32.mrf.mxu0
      %v693 = vpop.f32.mrf.mxu0
      %v694 = vpop.f32.mrf.mxu0
      %695 = vdwg.mxu0
      %vm710 = vcmask 1046528
      %v711 = vrot.slane %v636, 1
      %v712 = vrot.slane %v639, 1
      %v713 = vsel %vm710, %v711, %v712
      %v714 = vrot.slane %v644, 1
      %v715 = vsel %vm710, %v712, %v714
      %v716 = vrot.slane %v647, 1
      %v717 = vsel %vm710, %v714, %v716
      %v718 = vrot.slane %v652, 1
      %v719 = vsel %vm710, %v716, %v718
      %v720 = vrot.slane %v655, 1
      %v721 = vsel %vm710, %v718, %v720
      %v722 = vrot.slane %v660, 1
      %v723 = vsel %vm710, %v720, %v722
      %v724 = vrot.slane %v663, 1
      %v725 = vsel %vm710, %v722, %v724
      %v726 = vrot.slane %v668, 1
      %v727 = vsel %vm710, %v724, %v726
      %v728 = vrot.slane %v671, 1
      %v729 = vsel %vm710, %v726, %v728
      %v730 = vrot.slane %v676, 1
      %v731 = vsel %vm710, %v728, %v730
      %v732 = vrot.slane %v679, 1
      %v733 = vsel %vm710, %v730, %v732
      %v734 = vrot.slane %v684, 1
      %v735 = vsel %vm710, %v732, %v734
      %v736 = vrot.slane %v687, 1
      %v737 = vsel %vm710, %v734, %v736
      %v751 = vadd.f32 %v577, %v713
      %v752 = vadd.f32 %v578, %v715
      %v753 = vadd.f32 %v579, %v717
      %v754 = vadd.f32 %v580, %v719
      %v755 = vadd.f32 %v581, %v721
      %v756 = vadd.f32 %v582, %v723
      %v757 = vadd.f32 %v583, %v725
      %v758 = vadd.f32 %v584, %v727
      %v759 = vadd.f32 %v585, %v729
      %v760 = vadd.f32 %v586, %v731
      %v761 = vadd.f32 %v587, %v733
      %v762 = vadd.f32 %v588, %v735
      %v763 = vadd.f32 %v589, %v737
      %s764 = scalar_lea.vmem %s335, 16
      %v765 = vld [vmem:[%s764] sm:$0xf]
      %v766 = vld [vmem:[%s764 + $0x4] sm:$0x3]
      %v769 = vunpack.c.l.b16 %v765
      %v770 = vunpack.c.l.b16 %v766
      %v771 = vpack.c.b16 %v770, %v769
      %v773 = vsel %vm479, %v771, 0
      %775 = vmatprep.subr.bf16.mxu0 0
      %776 = vmatpush1.bf16.msra.mxu0 0
      %777 = vmatprep.subr.bf16.mxu0 0
      %778 = vmatpush1.bf16.msra.mxu0 0
      %779 = vmatprep.subr.bf16.mxu0 0
      %780 = vmatpush1.bf16.msra.mxu0 0
      %781 = vmatprep.subr.bf16.mxu0 0
      %782 = vmatpush1.bf16.msra.mxu0 0
      %783 = vmatprep.subr.bf16.mxu0 0
      %784 = vmatpush1.bf16.msra.mxu0 0
      %785 = vmatprep.subr.bf16.mxu0 0
      %786 = vmatpush1.bf16.msra.mxu0 0
      %787 = vmatprep.subr.bf16.mxu0 0
      %788 = vmatpush1.bf16.msra.mxu0 0
      %789 = vmatprep.subr.bf16.mxu0 0
      %790 = vmatpush1.bf16.msra.mxu0 %v773
      %791 = vmatprep.subr.bf16.mxu0 0
      %792 = vmatpush2.bf16.msra.mxu0 0
      %793 = vmatprep.subr.bf16.mxu0 0
      %794 = vmatpush2.bf16.msra.mxu0 0
      %795 = vmatprep.subr.bf16.mxu0 0
      %796 = vmatpush2.bf16.msra.mxu0 0
      %797 = vmatprep.subr.bf16.mxu0 0
      %798 = vmatpush2.bf16.msra.mxu0 0
      %799 = vmatprep.subr.bf16.mxu0 0
      %800 = vmatpush2.bf16.msra.mxu0 0
      %801 = vmatprep.subr.bf16.mxu0 0
      %802 = vmatpush2.bf16.msra.mxu0 0
      %803 = vmatprep.subr.bf16.mxu0 0
      %804 = vmatpush2.bf16.msra.mxu0 0
      %805 = vmatprep.subr.bf16.mxu0 0
      %806 = vmatpush2.bf16.msra.mxu0 0
      %807 = vmatprep.mubr.bf16.mxu0 0
      %808 = vmatmul.mubr.bf16.gmra.mxu0 %v456
      %v809 = vpop.f32.mrf.mxu0
      %v810 = vadd.f32 0.0, %v809
      %v811 = vpop.f32.mrf.mxu0
      %v812 = vpop.f32.mrf.mxu0
      %v813 = vadd.f32 0.0, %v812
      %v814 = vpop.f32.mrf.mxu0
      %815 = vmatprep.mubr.bf16.mxu0 0
      %816 = vmatmul.mubr.bf16.gmra.mxu0 %v459
      %v817 = vpop.f32.mrf.mxu0
      %v818 = vadd.f32 0.0, %v817
      %v819 = vpop.f32.mrf.mxu0
      %v820 = vpop.f32.mrf.mxu0
      %v821 = vadd.f32 0.0, %v820
      %v822 = vpop.f32.mrf.mxu0
      %823 = vmatprep.mubr.bf16.mxu0 0
      %824 = vmatmul.mubr.bf16.gmra.mxu0 %v462
      %v825 = vpop.f32.mrf.mxu0
      %v826 = vadd.f32 0.0, %v825
      %v827 = vpop.f32.mrf.mxu0
      %v828 = vpop.f32.mrf.mxu0
      %v829 = vadd.f32 0.0, %v828
      %v830 = vpop.f32.mrf.mxu0
      %831 = vmatprep.mubr.bf16.mxu0 0
      %832 = vmatmul.mubr.bf16.gmra.mxu0 %v465
      %v833 = vpop.f32.mrf.mxu0
      %v834 = vadd.f32 0.0, %v833
      %v835 = vpop.f32.mrf.mxu0
      %v836 = vpop.f32.mrf.mxu0
      %v837 = vadd.f32 0.0, %v836
      %v838 = vpop.f32.mrf.mxu0
      %839 = vmatprep.mubr.bf16.mxu0 0
      %840 = vmatmul.mubr.bf16.gmra.mxu0 %v468
      %v841 = vpop.f32.mrf.mxu0
      %v842 = vadd.f32 0.0, %v841
      %v843 = vpop.f32.mrf.mxu0
      %v844 = vpop.f32.mrf.mxu0
      %v845 = vadd.f32 0.0, %v844
      %v846 = vpop.f32.mrf.mxu0
      %847 = vmatprep.mubr.bf16.mxu0 0
      %848 = vmatmul.mubr.bf16.gmra.mxu0 %v471
      %v849 = vpop.f32.mrf.mxu0
      %v850 = vadd.f32 0.0, %v849
      %v851 = vpop.f32.mrf.mxu0
      %v852 = vpop.f32.mrf.mxu0
      %v853 = vadd.f32 0.0, %v852
      %v854 = vpop.f32.mrf.mxu0
      %855 = vmatprep.mubr.bf16.mxu0 0
      %856 = vmatmul.mubr.bf16.gmra.mxu0 %v474
      %v857 = vpop.f32.mrf.mxu0
      %v858 = vadd.f32 0.0, %v857
      %v859 = vpop.f32.mrf.mxu0
      %v860 = vpop.f32.mrf.mxu0
      %v861 = vadd.f32 0.0, %v860
      %v862 = vpop.f32.mrf.mxu0
      %863 = vmatprep.mubr.bf16.mxu0 0
      %864 = vmatmul.mubr.bf16.gmra.mxu0 %v477
      %v865 = vpop.f32.mrf.mxu0
      %v866 = vpop.f32.mrf.mxu0
      %v867 = vpop.f32.mrf.mxu0
      %v868 = vpop.f32.mrf.mxu0
      %869 = vdwg.mxu0
      %v884 = vrot.slane %v810, 2
      %v885 = vrot.slane %v813, 2
      %v886 = vsel %vm479, %v884, %v885
      %v887 = vrot.slane %v818, 2
      %v888 = vsel %vm479, %v885, %v887
      %v889 = vrot.slane %v821, 2
      %v890 = vsel %vm479, %v887, %v889
      %v891 = vrot.slane %v826, 2
      %v892 = vsel %vm479, %v889, %v891
      %v893 = vrot.slane %v829, 2
      %v894 = vsel %vm479, %v891, %v893
      %v895 = vrot.slane %v834, 2
      %v896 = vsel %vm479, %v893, %v895
      %v897 = vrot.slane %v837, 2
      %v898 = vsel %vm479, %v895, %v897
      %v899 = vrot.slane %v842, 2
      %v900 = vsel %vm479, %v897, %v899
      %v901 = vrot.slane %v845, 2
      %v902 = vsel %vm479, %v899, %v901
      %v903 = vrot.slane %v850, 2
      %v904 = vsel %vm479, %v901, %v903
      %v905 = vrot.slane %v853, 2
      %v906 = vsel %vm479, %v903, %v905
      %v907 = vrot.slane %v858, 2
      %v908 = vsel %vm479, %v905, %v907
      %v909 = vrot.slane %v861, 2
      %v910 = vsel %vm479, %v907, %v909
      %v924 = vadd.f32 %v751, %v886
      %v925 = vadd.f32 %v752, %v888
      %v926 = vadd.f32 %v753, %v890
      %v927 = vadd.f32 %v754, %v892
      %v928 = vadd.f32 %v755, %v894
      %v929 = vadd.f32 %v756, %v896
      %v930 = vadd.f32 %v757, %v898
      %v931 = vadd.f32 %v758, %v900
      %v932 = vadd.f32 %v759, %v902
      %v933 = vadd.f32 %v760, %v904
      %v934 = vadd.f32 %v761, %v906
      %v935 = vadd.f32 %v762, %v908
      %v936 = vadd.f32 %v763, %v910
      %s937 = scalar_lea.vmem %s335, 24
      %v938 = vld [vmem:[%s937] sm:$0xf]
      %v939 = vld [vmem:[%s937 + $0x4] sm:$0x3]
      %v942 = vunpack.c.l.b16 %v938
      %v943 = vunpack.c.l.b16 %v939
      %v944 = vpack.c.b16 %v943, %v942
      %v946 = vsel %vm479, %v944, 0
      %948 = vmatprep.subr.bf16.mxu0 0
      %949 = vmatpush1.bf16.msra.mxu0 0
      %950 = vmatprep.subr.bf16.mxu0 0
      %951 = vmatpush1.bf16.msra.mxu0 0
      %952 = vmatprep.subr.bf16.mxu0 0
      %953 = vmatpush1.bf16.msra.mxu0 0
      %954 = vmatprep.subr.bf16.mxu0 0
      %955 = vmatpush1.bf16.msra.mxu0 0
      %956 = vmatprep.subr.bf16.mxu0 0
      %957 = vmatpush1.bf16.msra.mxu0 0
      %958 = vmatprep.subr.bf16.mxu0 0
      %959 = vmatpush1.bf16.msra.mxu0 0
      %960 = vmatprep.subr.bf16.mxu0 0
      %961 = vmatpush1.bf16.msra.mxu0 0
      %962 = vmatprep.subr.bf16.mxu0 0
      %963 = vmatpush1.bf16.msra.mxu0 %v946
      %964 = vmatprep.subr.bf16.mxu0 0
      %965 = vmatpush2.bf16.msra.mxu0 0
      %966 = vmatprep.subr.bf16.mxu0 0
      %967 = vmatpush2.bf16.msra.mxu0 0
      %968 = vmatprep.subr.bf16.mxu0 0
      %969 = vmatpush2.bf16.msra.mxu0 0
      %970 = vmatprep.subr.bf16.mxu0 0
      %971 = vmatpush2.bf16.msra.mxu0 0
      %972 = vmatprep.subr.bf16.mxu0 0
      %973 = vmatpush2.bf16.msra.mxu0 0
      %974 = vmatprep.subr.bf16.mxu0 0
      %975 = vmatpush2.bf16.msra.mxu0 0
      %976 = vmatprep.subr.bf16.mxu0 0
      %977 = vmatpush2.bf16.msra.mxu0 0
      %978 = vmatprep.subr.bf16.mxu0 0
      %979 = vmatpush2.bf16.msra.mxu0 0
      %980 = vmatprep.mubr.bf16.mxu0 0
      %981 = vmatmul.mubr.bf16.gmra.mxu0 %v456
      %v982 = vpop.f32.mrf.mxu0
      %v983 = vpop.f32.mrf.mxu0
      %v984 = vpop.f32.mrf.mxu0
      %v985 = vadd.f32 0.0, %v984
      %v986 = vpop.f32.mrf.mxu0
      %987 = vmatprep.mubr.bf16.mxu0 0
      %988 = vmatmul.mubr.bf16.gmra.mxu0 %v459
      %v989 = vpop.f32.mrf.mxu0
      %v990 = vadd.f32 0.0, %v989
      %v991 = vpop.f32.mrf.mxu0
      %v992 = vpop.f32.mrf.mxu0
      %v993 = vadd.f32 0.0, %v992
      %v994 = vpop.f32.mrf.mxu0
      %995 = vmatprep.mubr.bf16.mxu0 0
      %996 = vmatmul.mubr.bf16.gmra.mxu0 %v462
      %v997 = vpop.f32.mrf.mxu0
      %v998 = vadd.f32 0.0, %v997
      %v999 = vpop.f32.mrf.mxu0
      %v1000 = vpop.f32.mrf.mxu0
      %v1001 = vadd.f32 0.0, %v1000
      %v1002 = vpop.f32.mrf.mxu0
      %1003 = vmatprep.mubr.bf16.mxu0 0
      %1004 = vmatmul.mubr.bf16.gmra.mxu0 %v465
      %v1005 = vpop.f32.mrf.mxu0
      %v1006 = vadd.f32 0.0, %v1005
      %v1007 = vpop.f32.mrf.mxu0
      %v1008 = vpop.f32.mrf.mxu0
      %v1009 = vadd.f32 0.0, %v1008
      %v1010 = vpop.f32.mrf.mxu0
      %1011 = vmatprep.mubr.bf16.mxu0 0
      %1012 = vmatmul.mubr.bf16.gmra.mxu0 %v468
      %v1013 = vpop.f32.mrf.mxu0
      %v1014 = vadd.f32 0.0, %v1013
      %v1015 = vpop.f32.mrf.mxu0
      %v1016 = vpop.f32.mrf.mxu0
      %v1017 = vadd.f32 0.0, %v1016
      %v1018 = vpop.f32.mrf.mxu0
      %1019 = vmatprep.mubr.bf16.mxu0 0
      %1020 = vmatmul.mubr.bf16.gmra.mxu0 %v471
      %v1021 = vpop.f32.mrf.mxu0
      %v1022 = vadd.f32 0.0, %v1021
      %v1023 = vpop.f32.mrf.mxu0
      %v1024 = vpop.f32.mrf.mxu0
      %v1025 = vadd.f32 0.0, %v1024
      %v1026 = vpop.f32.mrf.mxu0
      %1027 = vmatprep.mubr.bf16.mxu0 0
      %1028 = vmatmul.mubr.bf16.gmra.mxu0 %v474
      %v1029 = vpop.f32.mrf.mxu0
      %v1030 = vadd.f32 0.0, %v1029
      %v1031 = vpop.f32.mrf.mxu0
      %v1032 = vpop.f32.mrf.mxu0
      %v1033 = vadd.f32 0.0, %v1032
      %v1034 = vpop.f32.mrf.mxu0
      %1035 = vmatprep.mubr.bf16.mxu0 0
      %1036 = vmatmul.mubr.bf16.gmra.mxu0 %v477
      %v1037 = vpop.f32.mrf.mxu0
      %v1038 = vadd.f32 0.0, %v1037
      %v1039 = vpop.f32.mrf.mxu0
      %v1040 = vpop.f32.mrf.mxu0
      %v1041 = vpop.f32.mrf.mxu0
      %1042 = vdwg.mxu0
      %v1057 = vrot.slane %v985, 2
      %v1058 = vrot.slane %v990, 2
      %v1059 = vsel %vm479, %v1057, %v1058
      %v1060 = vrot.slane %v993, 2
      %v1061 = vsel %vm479, %v1058, %v1060
      %v1062 = vrot.slane %v998, 2
      %v1063 = vsel %vm479, %v1060, %v1062
      %v1064 = vrot.slane %v1001, 2
      %v1065 = vsel %vm479, %v1062, %v1064
      %v1066 = vrot.slane %v1006, 2
      %v1067 = vsel %vm479, %v1064, %v1066
      %v1068 = vrot.slane %v1009, 2
      %v1069 = vsel %vm479, %v1066, %v1068
      %v1070 = vrot.slane %v1014, 2
      %v1071 = vsel %vm479, %v1068, %v1070
      %v1072 = vrot.slane %v1017, 2
      %v1073 = vsel %vm479, %v1070, %v1072
      %v1074 = vrot.slane %v1022, 2
      %v1075 = vsel %vm479, %v1072, %v1074
      %v1076 = vrot.slane %v1025, 2
      %v1077 = vsel %vm479, %v1074, %v1076
      %v1078 = vrot.slane %v1030, 2
      %v1079 = vsel %vm479, %v1076, %v1078
      %v1080 = vrot.slane %v1033, 2
      %v1081 = vsel %vm479, %v1078, %v1080
      %v1082 = vrot.slane %v1038, 2
      %v1083 = vsel %vm479, %v1080, %v1082
      %v1097 = vadd.f32 %v924, %v1059
      %v1098 = vadd.f32 %v925, %v1061
      %v1099 = vadd.f32 %v926, %v1063
      %v1100 = vadd.f32 %v927, %v1065
      %v1101 = vadd.f32 %v928, %v1067
      %v1102 = vadd.f32 %v929, %v1069
      %v1103 = vadd.f32 %v930, %v1071
      %v1104 = vadd.f32 %v931, %v1073
      %v1105 = vadd.f32 %v932, %v1075
      %v1106 = vadd.f32 %v933, %v1077
      %v1107 = vadd.f32 %v934, %v1079
      %v1108 = vadd.f32 %v935, %v1081
      %v1109 = vadd.f32 %v936, %v1083
      %s1110 = scalar_lea.vmem %s335, 32
      %v1111 = vld [vmem:[%s1110] sm:$0xf]
      %v1112 = vld [vmem:[%s1110 + $0x4] sm:$0x3]
      %v1115 = vunpack.c.l.b16 %v1111
      %v1116 = vunpack.c.l.b16 %v1112
      %v1117 = vpack.c.b16 %v1116, %v1115
      %v1119 = vsel %vm479, %v1117, 0
      %1121 = vmatprep.subr.bf16.mxu0 0
      %1122 = vmatpush1.bf16.msra.mxu0 0
      %1123 = vmatprep.subr.bf16.mxu0 0
      %1124 = vmatpush1.bf16.msra.mxu0 0
      %1125 = vmatprep.subr.bf16.mxu0 0
      %1126 = vmatpush1.bf16.msra.mxu0 0
      %1127 = vmatprep.subr.bf16.mxu0 0
      %1128 = vmatpush1.bf16.msra.mxu0 0
      %1129 = vmatprep.subr.bf16.mxu0 0
      %1130 = vmatpush1.bf16.msra.mxu0 0
      %1131 = vmatprep.subr.bf16.mxu0 0
      %1132 = vmatpush1.bf16.msra.mxu0 0
      %1133 = vmatprep.subr.bf16.mxu0 0
      %1134 = vmatpush1.bf16.msra.mxu0 0
      %1135 = vmatprep.subr.bf16.mxu0 0
      %1136 = vmatpush1.bf16.msra.mxu0 %v1119
      %1137 = vmatprep.subr.bf16.mxu0 0
      %1138 = vmatpush2.bf16.msra.mxu0 0
      %1139 = vmatprep.subr.bf16.mxu0 0
      %1140 = vmatpush2.bf16.msra.mxu0 0
      %1141 = vmatprep.subr.bf16.mxu0 0
      %1142 = vmatpush2.bf16.msra.mxu0 0
      %1143 = vmatprep.subr.bf16.mxu0 0
      %1144 = vmatpush2.bf16.msra.mxu0 0
      %1145 = vmatprep.subr.bf16.mxu0 0
      %1146 = vmatpush2.bf16.msra.mxu0 0
      %1147 = vmatprep.subr.bf16.mxu0 0
      %1148 = vmatpush2.bf16.msra.mxu0 0
      %1149 = vmatprep.subr.bf16.mxu0 0
      %1150 = vmatpush2.bf16.msra.mxu0 0
      %1151 = vmatprep.subr.bf16.mxu0 0
      %1152 = vmatpush2.bf16.msra.mxu0 0
      %1153 = vmatprep.mubr.bf16.mxu0 0
      %1154 = vmatmul.mubr.bf16.gmra.mxu0 %v456
      %v1155 = vpop.f32.mrf.mxu0
      %v1156 = vpop.f32.mrf.mxu0
      %v1157 = vpop.f32.mrf.mxu0
      %v1158 = vadd.f32 0.0, %v1157
      %v1159 = vpop.f32.mrf.mxu0
      %1160 = vmatprep.mubr.bf16.mxu0 0
      %1161 = vmatmul.mubr.bf16.gmra.mxu0 %v459
      %v1162 = vpop.f32.mrf.mxu0
      %v1163 = vadd.f32 0.0, %v1162
      %v1164 = vpop.f32.mrf.mxu0
      %v1165 = vpop.f32.mrf.mxu0
      %v1166 = vadd.f32 0.0, %v1165
      %v1167 = vpop.f32.mrf.mxu0
      %1168 = vmatprep.mubr.bf16.mxu0 0
      %1169 = vmatmul.mubr.bf16.gmra.mxu0 %v462
      %v1170 = vpop.f32.mrf.mxu0
      %v1171 = vadd.f32 0.0, %v1170
      %v1172 = vpop.f32.mrf.mxu0
      %v1173 = vpop.f32.mrf.mxu0
      %v1174 = vadd.f32 0.0, %v1173
      %v1175 = vpop.f32.mrf.mxu0
      %1176 = vmatprep.mubr.bf16.mxu0 0
      %1177 = vmatmul.mubr.bf16.gmra.mxu0 %v465
      %v1178 = vpop.f32.mrf.mxu0
      %v1179 = vadd.f32 0.0, %v1178
      %v1180 = vpop.f32.mrf.mxu0
      %v1181 = vpop.f32.mrf.mxu0
      %v1182 = vadd.f32 0.0, %v1181
      %v1183 = vpop.f32.mrf.mxu0
      %1184 = vmatprep.mubr.bf16.mxu0 0
      %1185 = vmatmul.mubr.bf16.gmra.mxu0 %v468
      %v1186 = vpop.f32.mrf.mxu0
      %v1187 = vadd.f32 0.0, %v1186
      %v1188 = vpop.f32.mrf.mxu0
      %v1189 = vpop.f32.mrf.mxu0
      %v1190 = vadd.f32 0.0, %v1189
      %v1191 = vpop.f32.mrf.mxu0
      %1192 = vmatprep.mubr.bf16.mxu0 0
      %1193 = vmatmul.mubr.bf16.gmra.mxu0 %v471
      %v1194 = vpop.f32.mrf.mxu0
      %v1195 = vadd.f32 0.0, %v1194
      %v1196 = vpop.f32.mrf.mxu0
      %v1197 = vpop.f32.mrf.mxu0
      %v1198 = vadd.f32 0.0, %v1197
      %v1199 = vpop.f32.mrf.mxu0
      %1200 = vmatprep.mubr.bf16.mxu0 0
      %1201 = vmatmul.mubr.bf16.gmra.mxu0 %v474
      %v1202 = vpop.f32.mrf.mxu0
      %v1203 = vadd.f32 0.0, %v1202
      %v1204 = vpop.f32.mrf.mxu0
      %v1205 = vpop.f32.mrf.mxu0
      %v1206 = vadd.f32 0.0, %v1205
      %v1207 = vpop.f32.mrf.mxu0
      %1208 = vmatprep.mubr.bf16.mxu0 0
      %1209 = vmatmul.mubr.bf16.gmra.mxu0 %v477
      %v1210 = vpop.f32.mrf.mxu0
      %v1211 = vadd.f32 0.0, %v1210
      %v1212 = vpop.f32.mrf.mxu0
      %v1213 = vpop.f32.mrf.mxu0
      %v1214 = vpop.f32.mrf.mxu0
      %1215 = vdwg.mxu0
      %vm1230 = vcmask 1044480
      %v1231 = vrot.slane %v1158, 3
      %v1232 = vrot.slane %v1163, 3
      %v1233 = vsel %vm1230, %v1231, %v1232
      %v1234 = vrot.slane %v1166, 3
      %v1235 = vsel %vm1230, %v1232, %v1234
      %v1236 = vrot.slane %v1171, 3
      %v1237 = vsel %vm1230, %v1234, %v1236
      %v1238 = vrot.slane %v1174, 3
      %v1239 = vsel %vm1230, %v1236, %v1238
      %v1240 = vrot.slane %v1179, 3
      %v1241 = vsel %vm1230, %v1238, %v1240
      %v1242 = vrot.slane %v1182, 3
      %v1243 = vsel %vm1230, %v1240, %v1242
      %v1244 = vrot.slane %v1187, 3
      %v1245 = vsel %vm1230, %v1242, %v1244
      %v1246 = vrot.slane %v1190, 3
      %v1247 = vsel %vm1230, %v1244, %v1246
      %v1248 = vrot.slane %v1195, 3
      %v1249 = vsel %vm1230, %v1246, %v1248
      %v1250 = vrot.slane %v1198, 3
      %v1251 = vsel %vm1230, %v1248, %v1250
      %v1252 = vrot.slane %v1203, 3
      %v1253 = vsel %vm1230, %v1250, %v1252
      %v1254 = vrot.slane %v1206, 3
      %v1255 = vsel %vm1230, %v1252, %v1254
      %v1256 = vrot.slane %v1211, 3
      %v1257 = vsel %vm1230, %v1254, %v1256
      %v1271 = vadd.f32 %v1097, %v1233
      %v1272 = vadd.f32 %v1098, %v1235
      %v1273 = vadd.f32 %v1099, %v1237
      %v1274 = vadd.f32 %v1100, %v1239
      %v1275 = vadd.f32 %v1101, %v1241
      %v1276 = vadd.f32 %v1102, %v1243
      %v1277 = vadd.f32 %v1103, %v1245
      %v1278 = vadd.f32 %v1104, %v1247
      %v1279 = vadd.f32 %v1105, %v1249
      %v1280 = vadd.f32 %v1106, %v1251
      %v1281 = vadd.f32 %v1107, %v1253
      %v1282 = vadd.f32 %v1108, %v1255
      %v1283 = vadd.f32 %v1109, %v1257
      %s1284 = scalar_lea.vmem %s335, 40
      %v1285 = vld [vmem:[%s1284] sm:$0xf]
      %v1286 = vld [vmem:[%s1284 + $0x4] sm:$0x3]
      %v1289 = vunpack.c.l.b16 %v1285
      %v1290 = vunpack.c.l.b16 %v1286
      %v1291 = vpack.c.b16 %v1290, %v1289
      %v1293 = vsel %vm479, %v1291, 0
      %1295 = vmatprep.subr.bf16.mxu0 0
      %1296 = vmatpush1.bf16.msra.mxu0 0
      %1297 = vmatprep.subr.bf16.mxu0 0
      %1298 = vmatpush1.bf16.msra.mxu0 0
      %1299 = vmatprep.subr.bf16.mxu0 0
      %1300 = vmatpush1.bf16.msra.mxu0 0
      %1301 = vmatprep.subr.bf16.mxu0 0
      %1302 = vmatpush1.bf16.msra.mxu0 0
      %1303 = vmatprep.subr.bf16.mxu0 0
      %1304 = vmatpush1.bf16.msra.mxu0 0
      %1305 = vmatprep.subr.bf16.mxu0 0
      %1306 = vmatpush1.bf16.msra.mxu0 0
      %1307 = vmatprep.subr.bf16.mxu0 0
      %1308 = vmatpush1.bf16.msra.mxu0 0
      %1309 = vmatprep.subr.bf16.mxu0 0
      %1310 = vmatpush1.bf16.msra.mxu0 %v1293
      %1311 = vmatprep.subr.bf16.mxu0 0
      %1312 = vmatpush2.bf16.msra.mxu0 0
      %1313 = vmatprep.subr.bf16.mxu0 0
      %1314 = vmatpush2.bf16.msra.mxu0 0
      %1315 = vmatprep.subr.bf16.mxu0 0
      %1316 = vmatpush2.bf16.msra.mxu0 0
      %1317 = vmatprep.subr.bf16.mxu0 0
      %1318 = vmatpush2.bf16.msra.mxu0 0
      %1319 = vmatprep.subr.bf16.mxu0 0
      %1320 = vmatpush2.bf16.msra.mxu0 0
      %1321 = vmatprep.subr.bf16.mxu0 0
      %1322 = vmatpush2.bf16.msra.mxu0 0
      %1323 = vmatprep.subr.bf16.mxu0 0
      %1324 = vmatpush2.bf16.msra.mxu0 0
      %1325 = vmatprep.subr.bf16.mxu0 0
      %1326 = vmatpush2.bf16.msra.mxu0 0
      %1327 = vmatprep.mubr.bf16.mxu0 0
      %1328 = vmatmul.mubr.bf16.gmra.mxu0 %v456
      %v1329 = vpop.f32.mrf.mxu0
      %v1330 = vpop.f32.mrf.mxu0
      %v1331 = vpop.f32.mrf.mxu0
      %v1332 = vadd.f32 0.0, %v1331
      %v1333 = vpop.f32.mrf.mxu0
      %1334 = vmatprep.mubr.bf16.mxu0 0
      %1335 = vmatmul.mubr.bf16.gmra.mxu0 %v459
      %v1336 = vpop.f32.mrf.mxu0
      %v1337 = vadd.f32 0.0, %v1336
      %v1338 = vpop.f32.mrf.mxu0
      %v1339 = vpop.f32.mrf.mxu0
      %v1340 = vadd.f32 0.0, %v1339
      %v1341 = vpop.f32.mrf.mxu0
      %1342 = vmatprep.mubr.bf16.mxu0 0
      %1343 = vmatmul.mubr.bf16.gmra.mxu0 %v462
      %v1344 = vpop.f32.mrf.mxu0
      %v1345 = vadd.f32 0.0, %v1344
      %v1346 = vpop.f32.mrf.mxu0
      %v1347 = vpop.f32.mrf.mxu0
      %v1348 = vadd.f32 0.0, %v1347
      %v1349 = vpop.f32.mrf.mxu0
      %1350 = vmatprep.mubr.bf16.mxu0 0
      %1351 = vmatmul.mubr.bf16.gmra.mxu0 %v465
      %v1352 = vpop.f32.mrf.mxu0
      %v1353 = vadd.f32 0.0, %v1352
      %v1354 = vpop.f32.mrf.mxu0
      %v1355 = vpop.f32.mrf.mxu0
      %v1356 = vadd.f32 0.0, %v1355
      %v1357 = vpop.f32.mrf.mxu0
      %1358 = vmatprep.mubr.bf16.mxu0 0
      %1359 = vmatmul.mubr.bf16.gmra.mxu0 %v468
      %v1360 = vpop.f32.mrf.mxu0
      %v1361 = vadd.f32 0.0, %v1360
      %v1362 = vpop.f32.mrf.mxu0
      %v1363 = vpop.f32.mrf.mxu0
      %v1364 = vadd.f32 0.0, %v1363
      %v1365 = vpop.f32.mrf.mxu0
      %1366 = vmatprep.mubr.bf16.mxu0 0
      %1367 = vmatmul.mubr.bf16.gmra.mxu0 %v471
      %v1368 = vpop.f32.mrf.mxu0
      %v1369 = vadd.f32 0.0, %v1368
      %v1370 = vpop.f32.mrf.mxu0
      %v1371 = vpop.f32.mrf.mxu0
      %v1372 = vadd.f32 0.0, %v1371
      %v1373 = vpop.f32.mrf.mxu0
      %1374 = vmatprep.mubr.bf16.mxu0 0
      %1375 = vmatmul.mubr.bf16.gmra.mxu0 %v474
      %v1376 = vpop.f32.mrf.mxu0
      %v1377 = vadd.f32 0.0, %v1376
      %v1378 = vpop.f32.mrf.mxu0
      %v1379 = vpop.f32.mrf.mxu0
      %v1380 = vadd.f32 0.0, %v1379
      %v1381 = vpop.f32.mrf.mxu0
      %1382 = vmatprep.mubr.bf16.mxu0 0
      %1383 = vmatmul.mubr.bf16.gmra.mxu0 %v477
      %v1384 = vpop.f32.mrf.mxu0
      %v1385 = vadd.f32 0.0, %v1384
      %v1386 = vpop.f32.mrf.mxu0
      %v1387 = vpop.f32.mrf.mxu0
      %v1388 = vpop.f32.mrf.mxu0
      %1389 = vdwg.mxu0
      %vm1404 = vcmask 1043456
      %v1405 = vrot.slane %v1332, 4
      %v1406 = vrot.slane %v1337, 4
      %v1407 = vsel %vm1404, %v1405, %v1406
      %v1408 = vrot.slane %v1340, 4
      %v1409 = vsel %vm1404, %v1406, %v1408
      %v1410 = vrot.slane %v1345, 4
      %v1411 = vsel %vm1404, %v1408, %v1410
      %v1412 = vrot.slane %v1348, 4
      %v1413 = vsel %vm1404, %v1410, %v1412
      %v1414 = vrot.slane %v1353, 4
      %v1415 = vsel %vm1404, %v1412, %v1414
      %v1416 = vrot.slane %v1356, 4
      %v1417 = vsel %vm1404, %v1414, %v1416
      %v1418 = vrot.slane %v1361, 4
      %v1419 = vsel %vm1404, %v1416, %v1418
      %v1420 = vrot.slane %v1364, 4
      %v1421 = vsel %vm1404, %v1418, %v1420
      %v1422 = vrot.slane %v1369, 4
      %v1423 = vsel %vm1404, %v1420, %v1422
      %v1424 = vrot.slane %v1372, 4
      %v1425 = vsel %vm1404, %v1422, %v1424
      %v1426 = vrot.slane %v1377, 4
      %v1427 = vsel %vm1404, %v1424, %v1426
      %v1428 = vrot.slane %v1380, 4
      %v1429 = vsel %vm1404, %v1426, %v1428
      %v1430 = vrot.slane %v1385, 4
      %v1431 = vsel %vm1404, %v1428, %v1430
      %v1445 = vadd.f32 %v1271, %v1407
      %v1446 = vadd.f32 %v1272, %v1409
      %v1447 = vadd.f32 %v1273, %v1411
      %v1448 = vadd.f32 %v1274, %v1413
      %v1449 = vadd.f32 %v1275, %v1415
      %v1450 = vadd.f32 %v1276, %v1417
      %v1451 = vadd.f32 %v1277, %v1419
      %v1452 = vadd.f32 %v1278, %v1421
      %v1453 = vadd.f32 %v1279, %v1423
      %v1454 = vadd.f32 %v1280, %v1425
      %v1455 = vadd.f32 %v1281, %v1427
      %v1456 = vadd.f32 %v1282, %v1429
      %v1457 = vadd.f32 %v1283, %v1431
      %s1458 = scalar_lea.vmem %s335, 48
      %v1459 = vld [vmem:[%s1458] sm:$0xf]
      %v1460 = vld [vmem:[%s1458 + $0x4] sm:$0x3]
      %v1463 = vunpack.c.l.b16 %v1459
      %v1464 = vunpack.c.l.b16 %v1460
      %v1465 = vpack.c.b16 %v1464, %v1463
      %v1467 = vsel %vm479, %v1465, 0
      %1469 = vmatprep.subr.bf16.mxu0 0
      %1470 = vmatpush1.bf16.msra.mxu0 0
      %1471 = vmatprep.subr.bf16.mxu0 0
      %1472 = vmatpush1.bf16.msra.mxu0 0
      %1473 = vmatprep.subr.bf16.mxu0 0
      %1474 = vmatpush1.bf16.msra.mxu0 0
      %1475 = vmatprep.subr.bf16.mxu0 0
      %1476 = vmatpush1.bf16.msra.mxu0 0
      %1477 = vmatprep.subr.bf16.mxu0 0
      %1478 = vmatpush1.bf16.msra.mxu0 0
      %1479 = vmatprep.subr.bf16.mxu0 0
      %1480 = vmatpush1.bf16.msra.mxu0 0
      %1481 = vmatprep.subr.bf16.mxu0 0
      %1482 = vmatpush1.bf16.msra.mxu0 0
      %1483 = vmatprep.subr.bf16.mxu0 0
      %1484 = vmatpush1.bf16.msra.mxu0 %v1467
      %1485 = vmatprep.subr.bf16.mxu0 0
      %1486 = vmatpush2.bf16.msra.mxu0 0
      %1487 = vmatprep.subr.bf16.mxu0 0
      %1488 = vmatpush2.bf16.msra.mxu0 0
      %1489 = vmatprep.subr.bf16.mxu0 0
      %1490 = vmatpush2.bf16.msra.mxu0 0
      %1491 = vmatprep.subr.bf16.mxu0 0
      %1492 = vmatpush2.bf16.msra.mxu0 0
      %1493 = vmatprep.subr.bf16.mxu0 0
      %1494 = vmatpush2.bf16.msra.mxu0 0
      %1495 = vmatprep.subr.bf16.mxu0 0
      %1496 = vmatpush2.bf16.msra.mxu0 0
      %1497 = vmatprep.subr.bf16.mxu0 0
      %1498 = vmatpush2.bf16.msra.mxu0 0
      %1499 = vmatprep.subr.bf16.mxu0 0
      %1500 = vmatpush2.bf16.msra.mxu0 0
      %1501 = vmatprep.mubr.bf16.mxu0 0
      %1502 = vmatmul.mubr.bf16.gmra.mxu0 %v456
      %v1503 = vpop.f32.mrf.mxu0
      %v1504 = vpop.f32.mrf.mxu0
      %v1505 = vpop.f32.mrf.mxu0
      %v1506 = vpop.f32.mrf.mxu0
      %1507 = vmatprep.mubr.bf16.mxu0 0
      %1508 = vmatmul.mubr.bf16.gmra.mxu0 %v459
      %v1509 = vpop.f32.mrf.mxu0
      %v1510 = vadd.f32 0.0, %v1509
      %v1511 = vpop.f32.mrf.mxu0
      %v1512 = vpop.f32.mrf.mxu0
      %v1513 = vadd.f32 0.0, %v1512
      %v1514 = vpop.f32.mrf.mxu0
      %1515 = vmatprep.mubr.bf16.mxu0 0
      %1516 = vmatmul.mubr.bf16.gmra.mxu0 %v462
      %v1517 = vpop.f32.mrf.mxu0
      %v1518 = vadd.f32 0.0, %v1517
      %v1519 = vpop.f32.mrf.mxu0
      %v1520 = vpop.f32.mrf.mxu0
      %v1521 = vadd.f32 0.0, %v1520
      %v1522 = vpop.f32.mrf.mxu0
      %1523 = vmatprep.mubr.bf16.mxu0 0
      %1524 = vmatmul.mubr.bf16.gmra.mxu0 %v465
      %v1525 = vpop.f32.mrf.mxu0
      %v1526 = vadd.f32 0.0, %v1525
      %v1527 = vpop.f32.mrf.mxu0
      %v1528 = vpop.f32.mrf.mxu0
      %v1529 = vadd.f32 0.0, %v1528
      %v1530 = vpop.f32.mrf.mxu0
      %1531 = vmatprep.mubr.bf16.mxu0 0
      %1532 = vmatmul.mubr.bf16.gmra.mxu0 %v468
      %v1533 = vpop.f32.mrf.mxu0
      %v1534 = vadd.f32 0.0, %v1533
      %v1535 = vpop.f32.mrf.mxu0
      %v1536 = vpop.f32.mrf.mxu0
      %v1537 = vadd.f32 0.0, %v1536
      %v1538 = vpop.f32.mrf.mxu0
      %1539 = vmatprep.mubr.bf16.mxu0 0
      %1540 = vmatmul.mubr.bf16.gmra.mxu0 %v471
      %v1541 = vpop.f32.mrf.mxu0
      %v1542 = vadd.f32 0.0, %v1541
      %v1543 = vpop.f32.mrf.mxu0
      %v1544 = vpop.f32.mrf.mxu0
      %v1545 = vadd.f32 0.0, %v1544
      %v1546 = vpop.f32.mrf.mxu0
      %1547 = vmatprep.mubr.bf16.mxu0 0
      %1548 = vmatmul.mubr.bf16.gmra.mxu0 %v474
      %v1549 = vpop.f32.mrf.mxu0
      %v1550 = vadd.f32 0.0, %v1549
      %v1551 = vpop.f32.mrf.mxu0
      %v1552 = vpop.f32.mrf.mxu0
      %v1553 = vadd.f32 0.0, %v1552
      %v1554 = vpop.f32.mrf.mxu0
      %1555 = vmatprep.mubr.bf16.mxu0 0
      %1556 = vmatmul.mubr.bf16.gmra.mxu0 %v477
      %v1557 = vpop.f32.mrf.mxu0
      %v1558 = vadd.f32 0.0, %v1557
      %v1559 = vpop.f32.mrf.mxu0
      %v1560 = vpop.f32.mrf.mxu0
      %v1561 = vadd.f32 0.0, %v1560
      %v1562 = vpop.f32.mrf.mxu0
      %1563 = vdwg.mxu0
      %v1578 = vrot.slane %v1510, 4
      %v1579 = vrot.slane %v1513, 4
      %v1580 = vsel %vm1404, %v1578, %v1579
      %v1581 = vrot.slane %v1518, 4
      %v1582 = vsel %vm1404, %v1579, %v1581
      %v1583 = vrot.slane %v1521, 4
      %v1584 = vsel %vm1404, %v1581, %v1583
      %v1585 = vrot.slane %v1526, 4
      %v1586 = vsel %vm1404, %v1583, %v1585
      %v1587 = vrot.slane %v1529, 4
      %v1588 = vsel %vm1404, %v1585, %v1587
      %v1589 = vrot.slane %v1534, 4
      %v1590 = vsel %vm1404, %v1587, %v1589
      %v1591 = vrot.slane %v1537, 4
      %v1592 = vsel %vm1404, %v1589, %v1591
      %v1593 = vrot.slane %v1542, 4
      %v1594 = vsel %vm1404, %v1591, %v1593
      %v1595 = vrot.slane %v1545, 4
      %v1596 = vsel %vm1404, %v1593, %v1595
      %v1597 = vrot.slane %v1550, 4
      %v1598 = vsel %vm1404, %v1595, %v1597
      %v1599 = vrot.slane %v1553, 4
      %v1600 = vsel %vm1404, %v1597, %v1599
      %v1601 = vrot.slane %v1558, 4
      %v1602 = vsel %vm1404, %v1599, %v1601
      %v1603 = vrot.slane %v1561, 4
      %v1604 = vsel %vm1404, %v1601, %v1603
      %v1618 = vadd.f32 %v1445, %v1580
      %v1619 = vadd.f32 %v1446, %v1582
      %v1620 = vadd.f32 %v1447, %v1584
      %v1621 = vadd.f32 %v1448, %v1586
      %v1622 = vadd.f32 %v1449, %v1588
      %v1623 = vadd.f32 %v1450, %v1590
      %v1624 = vadd.f32 %v1451, %v1592
      %v1625 = vadd.f32 %v1452, %v1594
      %v1626 = vadd.f32 %v1453, %v1596
      %v1627 = vadd.f32 %v1454, %v1598
      %v1628 = vadd.f32 %v1455, %v1600
      %v1629 = vadd.f32 %v1456, %v1602
      %v1630 = vadd.f32 %v1457, %v1604
      %s1631 = scalar_lea.vmem %s335, 56
      %v1632 = vld [vmem:[%s1631] sm:$0xf]
      %v1633 = vld [vmem:[%s1631 + $0x4] sm:$0x3]
      %v1636 = vunpack.c.l.b16 %v1632
      %v1637 = vunpack.c.l.b16 %v1633
      %v1638 = vpack.c.b16 %v1637, %v1636
      %v1640 = vsel %vm479, %v1638, 0
      %1642 = vmatprep.subr.bf16.mxu0 0
      %1643 = vmatpush1.bf16.msra.mxu0 0
      %1644 = vmatprep.subr.bf16.mxu0 0
      %1645 = vmatpush1.bf16.msra.mxu0 0
      %1646 = vmatprep.subr.bf16.mxu0 0
      %1647 = vmatpush1.bf16.msra.mxu0 0
      %1648 = vmatprep.subr.bf16.mxu0 0
      %1649 = vmatpush1.bf16.msra.mxu0 0
      %1650 = vmatprep.subr.bf16.mxu0 0
      %1651 = vmatpush1.bf16.msra.mxu0 0
      %1652 = vmatprep.subr.bf16.mxu0 0
      %1653 = vmatpush1.bf16.msra.mxu0 0
      %1654 = vmatprep.subr.bf16.mxu0 0
      %1655 = vmatpush1.bf16.msra.mxu0 0
      %1656 = vmatprep.subr.bf16.mxu0 0
      %1657 = vmatpush1.bf16.msra.mxu0 %v1640
      %1658 = vmatprep.subr.bf16.mxu0 0
      %1659 = vmatpush2.bf16.msra.mxu0 0
      %1660 = vmatprep.subr.bf16.mxu0 0
      %1661 = vmatpush2.bf16.msra.mxu0 0
      %1662 = vmatprep.subr.bf16.mxu0 0
      %1663 = vmatpush2.bf16.msra.mxu0 0
      %1664 = vmatprep.subr.bf16.mxu0 0
      %1665 = vmatpush2.bf16.msra.mxu0 0
      %1666 = vmatprep.subr.bf16.mxu0 0
      %1667 = vmatpush2.bf16.msra.mxu0 0
      %1668 = vmatprep.subr.bf16.mxu0 0
      %1669 = vmatpush2.bf16.msra.mxu0 0
      %1670 = vmatprep.subr.bf16.mxu0 0
      %1671 = vmatpush2.bf16.msra.mxu0 0
      %1672 = vmatprep.subr.bf16.mxu0 0
      %1673 = vmatpush2.bf16.msra.mxu0 0
      %1674 = vmatprep.mubr.bf16.mxu0 0
      %1675 = vmatmul.mubr.bf16.gmra.mxu0 %v456
      %v1676 = vpop.f32.mrf.mxu0
      %v1677 = vpop.f32.mrf.mxu0
      %v1678 = vpop.f32.mrf.mxu0
      %v1679 = vpop.f32.mrf.mxu0
      %1680 = vmatprep.mubr.bf16.mxu0 0
      %1681 = vmatmul.mubr.bf16.gmra.mxu0 %v459
      %v1682 = vpop.f32.mrf.mxu0
      %v1683 = vadd.f32 0.0, %v1682
      %v1684 = vpop.f32.mrf.mxu0
      %v1685 = vpop.f32.mrf.mxu0
      %v1686 = vadd.f32 0.0, %v1685
      %v1687 = vpop.f32.mrf.mxu0
      %1688 = vmatprep.mubr.bf16.mxu0 0
      %1689 = vmatmul.mubr.bf16.gmra.mxu0 %v462
      %v1690 = vpop.f32.mrf.mxu0
      %v1691 = vadd.f32 0.0, %v1690
      %v1692 = vpop.f32.mrf.mxu0
      %v1693 = vpop.f32.mrf.mxu0
      %v1694 = vadd.f32 0.0, %v1693
      %v1695 = vpop.f32.mrf.mxu0
      %1696 = vmatprep.mubr.bf16.mxu0 0
      %1697 = vmatmul.mubr.bf16.gmra.mxu0 %v465
      %v1698 = vpop.f32.mrf.mxu0
      %v1699 = vadd.f32 0.0, %v1698
      %v1700 = vpop.f32.mrf.mxu0
      %v1701 = vpop.f32.mrf.mxu0
      %v1702 = vadd.f32 0.0, %v1701
      %v1703 = vpop.f32.mrf.mxu0
      %1704 = vmatprep.mubr.bf16.mxu0 0
      %1705 = vmatmul.mubr.bf16.gmra.mxu0 %v468
      %v1706 = vpop.f32.mrf.mxu0
      %v1707 = vadd.f32 0.0, %v1706
      %v1708 = vpop.f32.mrf.mxu0
      %v1709 = vpop.f32.mrf.mxu0
      %v1710 = vadd.f32 0.0, %v1709
      %v1711 = vpop.f32.mrf.mxu0
      %1712 = vmatprep.mubr.bf16.mxu0 0
      %1713 = vmatmul.mubr.bf16.gmra.mxu0 %v471
      %v1714 = vpop.f32.mrf.mxu0
      %v1715 = vadd.f32 0.0, %v1714
      %v1716 = vpop.f32.mrf.mxu0
      %v1717 = vpop.f32.mrf.mxu0
      %v1718 = vadd.f32 0.0, %v1717
      %v1719 = vpop.f32.mrf.mxu0
      %1720 = vmatprep.mubr.bf16.mxu0 0
      %1721 = vmatmul.mubr.bf16.gmra.mxu0 %v474
      %v1722 = vpop.f32.mrf.mxu0
      %v1723 = vadd.f32 0.0, %v1722
      %v1724 = vpop.f32.mrf.mxu0
      %v1725 = vpop.f32.mrf.mxu0
      %v1726 = vadd.f32 0.0, %v1725
      %v1727 = vpop.f32.mrf.mxu0
      %1728 = vmatprep.mubr.bf16.mxu0 0
      %1729 = vmatmul.mubr.bf16.gmra.mxu0 %v477
      %v1730 = vpop.f32.mrf.mxu0
      %v1731 = vadd.f32 0.0, %v1730
      %v1732 = vpop.f32.mrf.mxu0
      %v1733 = vpop.f32.mrf.mxu0
      %v1734 = vadd.f32 0.0, %v1733
      %v1735 = vpop.f32.mrf.mxu0
      %1736 = vdwg.mxu0
      %vm1751 = vcmask 1042432
      %v1752 = vrot.slane %v1683, 5
      %v1753 = vrot.slane %v1686, 5
      %v1754 = vsel %vm1751, %v1752, %v1753
      %v1755 = vrot.slane %v1691, 5
      %v1756 = vsel %vm1751, %v1753, %v1755
      %v1757 = vrot.slane %v1694, 5
      %v1758 = vsel %vm1751, %v1755, %v1757
      %v1759 = vrot.slane %v1699, 5
      %v1760 = vsel %vm1751, %v1757, %v1759
      %v1761 = vrot.slane %v1702, 5
      %v1762 = vsel %vm1751, %v1759, %v1761
      %v1763 = vrot.slane %v1707, 5
      %v1764 = vsel %vm1751, %v1761, %v1763
      %v1765 = vrot.slane %v1710, 5
      %v1766 = vsel %vm1751, %v1763, %v1765
      %v1767 = vrot.slane %v1715, 5
      %v1768 = vsel %vm1751, %v1765, %v1767
      %v1769 = vrot.slane %v1718, 5
      %v1770 = vsel %vm1751, %v1767, %v1769
      %v1771 = vrot.slane %v1723, 5
      %v1772 = vsel %vm1751, %v1769, %v1771
      %v1773 = vrot.slane %v1726, 5
      %v1774 = vsel %vm1751, %v1771, %v1773
      %v1775 = vrot.slane %v1731, 5
      %v1776 = vsel %vm1751, %v1773, %v1775
      %v1777 = vrot.slane %v1734, 5
      %v1778 = vsel %vm1751, %v1775, %v1777
      %v1792 = vadd.f32 %v1618, %v1754
      %v1793 = vadd.f32 %v1619, %v1756
      %v1794 = vadd.f32 %v1620, %v1758
      %v1795 = vadd.f32 %v1621, %v1760
      %v1796 = vadd.f32 %v1622, %v1762
      %v1797 = vadd.f32 %v1623, %v1764
      %v1798 = vadd.f32 %v1624, %v1766
      %v1799 = vadd.f32 %v1625, %v1768
      %v1800 = vadd.f32 %v1626, %v1770
      %v1801 = vadd.f32 %v1627, %v1772
      %v1802 = vadd.f32 %v1628, %v1774
      %v1803 = vadd.f32 %v1629, %v1776
      %v1804 = vadd.f32 %v1630, %v1778
      %s1805 = scalar_lea.vmem %s335, 64
      %v1806 = vld [vmem:[%s1805] sm:$0xf]
      %v1807 = vld [vmem:[%s1805 + $0x4] sm:$0x3]
      %v1810 = vunpack.c.l.b16 %v1806
      %v1811 = vunpack.c.l.b16 %v1807
      %v1812 = vpack.c.b16 %v1811, %v1810
      %v1814 = vsel %vm479, %v1812, 0
      %1816 = vmatprep.subr.bf16.mxu0 0
      %1817 = vmatpush1.bf16.msra.mxu0 0
      %1818 = vmatprep.subr.bf16.mxu0 0
      %1819 = vmatpush1.bf16.msra.mxu0 0
      %1820 = vmatprep.subr.bf16.mxu0 0
      %1821 = vmatpush1.bf16.msra.mxu0 0
      %1822 = vmatprep.subr.bf16.mxu0 0
      %1823 = vmatpush1.bf16.msra.mxu0 0
      %1824 = vmatprep.subr.bf16.mxu0 0
      %1825 = vmatpush1.bf16.msra.mxu0 0
      %1826 = vmatprep.subr.bf16.mxu0 0
      %1827 = vmatpush1.bf16.msra.mxu0 0
      %1828 = vmatprep.subr.bf16.mxu0 0
      %1829 = vmatpush1.bf16.msra.mxu0 0
      %1830 = vmatprep.subr.bf16.mxu0 0
      %1831 = vmatpush1.bf16.msra.mxu0 %v1814
      %1832 = vmatprep.subr.bf16.mxu0 0
      %1833 = vmatpush2.bf16.msra.mxu0 0
      %1834 = vmatprep.subr.bf16.mxu0 0
      %1835 = vmatpush2.bf16.msra.mxu0 0
      %1836 = vmatprep.subr.bf16.mxu0 0
      %1837 = vmatpush2.bf16.msra.mxu0 0
      %1838 = vmatprep.subr.bf16.mxu0 0
      %1839 = vmatpush2.bf16.msra.mxu0 0
      %1840 = vmatprep.subr.bf16.mxu0 0
      %1841 = vmatpush2.bf16.msra.mxu0 0
      %1842 = vmatprep.subr.bf16.mxu0 0
      %1843 = vmatpush2.bf16.msra.mxu0 0
      %1844 = vmatprep.subr.bf16.mxu0 0
      %1845 = vmatpush2.bf16.msra.mxu0 0
      %1846 = vmatprep.subr.bf16.mxu0 0
      %1847 = vmatpush2.bf16.msra.mxu0 0
      %1848 = vmatprep.mubr.bf16.mxu0 0
      %1849 = vmatmul.mubr.bf16.gmra.mxu0 %v456
      %v1850 = vpop.f32.mrf.mxu0
      %v1851 = vpop.f32.mrf.mxu0
      %v1852 = vpop.f32.mrf.mxu0
      %v1853 = vpop.f32.mrf.mxu0
      %1854 = vmatprep.mubr.bf16.mxu0 0
      %1855 = vmatmul.mubr.bf16.gmra.mxu0 %v459
      %v1856 = vpop.f32.mrf.mxu0
      %v1857 = vadd.f32 0.0, %v1856
      %v1858 = vpop.f32.mrf.mxu0
      %v1859 = vpop.f32.mrf.mxu0
      %v1860 = vadd.f32 0.0, %v1859
      %v1861 = vpop.f32.mrf.mxu0
      %1862 = vmatprep.mubr.bf16.mxu0 0
      %1863 = vmatmul.mubr.bf16.gmra.mxu0 %v462
      %v1864 = vpop.f32.mrf.mxu0
      %v1865 = vadd.f32 0.0, %v1864
      %v1866 = vpop.f32.mrf.mxu0
      %v1867 = vpop.f32.mrf.mxu0
      %v1868 = vadd.f32 0.0, %v1867
      %v1869 = vpop.f32.mrf.mxu0
      %1870 = vmatprep.mubr.bf16.mxu0 0
      %1871 = vmatmul.mubr.bf16.gmra.mxu0 %v465
      %v1872 = vpop.f32.mrf.mxu0
      %v1873 = vadd.f32 0.0, %v1872
      %v1874 = vpop.f32.mrf.mxu0
      %v1875 = vpop.f32.mrf.mxu0
      %v1876 = vadd.f32 0.0, %v1875
      %v1877 = vpop.f32.mrf.mxu0
      %1878 = vmatprep.mubr.bf16.mxu0 0
      %1879 = vmatmul.mubr.bf16.gmra.mxu0 %v468
      %v1880 = vpop.f32.mrf.mxu0
      %v1881 = vadd.f32 0.0, %v1880
      %v1882 = vpop.f32.mrf.mxu0
      %v1883 = vpop.f32.mrf.mxu0
      %v1884 = vadd.f32 0.0, %v1883
      %v1885 = vpop.f32.mrf.mxu0
      %1886 = vmatprep.mubr.bf16.mxu0 0
      %1887 = vmatmul.mubr.bf16.gmra.mxu0 %v471
      %v1888 = vpop.f32.mrf.mxu0
      %v1889 = vadd.f32 0.0, %v1888
      %v1890 = vpop.f32.mrf.mxu0
      %v1891 = vpop.f32.mrf.mxu0
      %v1892 = vadd.f32 0.0, %v1891
      %v1893 = vpop.f32.mrf.mxu0
      %1894 = vmatprep.mubr.bf16.mxu0 0
      %1895 = vmatmul.mubr.bf16.gmra.mxu0 %v474
      %v1896 = vpop.f32.mrf.mxu0
      %v1897 = vadd.f32 0.0, %v1896
      %v1898 = vpop.f32.mrf.mxu0
      %v1899 = vpop.f32.mrf.mxu0
      %v1900 = vadd.f32 0.0, %v1899
      %v1901 = vpop.f32.mrf.mxu0
      %1902 = vmatprep.mubr.bf16.mxu0 0
      %1903 = vmatmul.mubr.bf16.gmra.mxu0 %v477
      %v1904 = vpop.f32.mrf.mxu0
      %v1905 = vadd.f32 0.0, %v1904
      %v1906 = vpop.f32.mrf.mxu0
      %v1907 = vpop.f32.mrf.mxu0
      %v1908 = vadd.f32 0.0, %v1907
      %v1909 = vpop.f32.mrf.mxu0
      %1910 = vdwg.mxu0
      %vm1925 = vcmask 1041408
      %v1926 = vrot.slane %v1857, 6
      %v1927 = vrot.slane %v1860, 6
      %v1928 = vsel %vm1925, %v1926, %v1927
      %v1929 = vrot.slane %v1865, 6
      %v1930 = vsel %vm1925, %v1927, %v1929
      %v1931 = vrot.slane %v1868, 6
      %v1932 = vsel %vm1925, %v1929, %v1931
      %v1933 = vrot.slane %v1873, 6
      %v1934 = vsel %vm1925, %v1931, %v1933
      %v1935 = vrot.slane %v1876, 6
      %v1936 = vsel %vm1925, %v1933, %v1935
      %v1937 = vrot.slane %v1881, 6
      %v1938 = vsel %vm1925, %v1935, %v1937
      %v1939 = vrot.slane %v1884, 6
      %v1940 = vsel %vm1925, %v1937, %v1939
      %v1941 = vrot.slane %v1889, 6
      %v1942 = vsel %vm1925, %v1939, %v1941
      %v1943 = vrot.slane %v1892, 6
      %v1944 = vsel %vm1925, %v1941, %v1943
      %v1945 = vrot.slane %v1897, 6
      %v1946 = vsel %vm1925, %v1943, %v1945
      %v1947 = vrot.slane %v1900, 6
      %v1948 = vsel %vm1925, %v1945, %v1947
      %v1949 = vrot.slane %v1905, 6
      %v1950 = vsel %vm1925, %v1947, %v1949
      %v1951 = vrot.slane %v1908, 6
      %v1952 = vsel %vm1925, %v1949, %v1951
      %v1966 = vadd.f32 %v1792, %v1928
      %v1967 = vadd.f32 %v1793, %v1930
      %v1968 = vadd.f32 %v1794, %v1932
      %v1969 = vadd.f32 %v1795, %v1934
      %v1970 = vadd.f32 %v1796, %v1936
      %v1971 = vadd.f32 %v1797, %v1938
      %v1972 = vadd.f32 %v1798, %v1940
      %v1973 = vadd.f32 %v1799, %v1942
      %v1974 = vadd.f32 %v1800, %v1944
      %v1975 = vadd.f32 %v1801, %v1946
      %v1976 = vadd.f32 %v1802, %v1948
      %v1977 = vadd.f32 %v1803, %v1950
      %v1978 = vadd.f32 %v1804, %v1952
      %vm1979 = vcmask 523264
      %1980 = vst.msk [vmem:[#allocation2] sm:$0xff] %vm1979, %v1966
      %1981 = vst.msk [vmem:[#allocation2 + $0x8] sm:$0xff] %vm1979, %v1967
      %1982 = vst.msk [vmem:[#allocation2 + $0x10] sm:$0xff] %vm1979, %v1968
      %1983 = vst.msk [vmem:[#allocation2 + $0x18] sm:$0xff] %vm1979, %v1969
      %1984 = vst.msk [vmem:[#allocation2 + $0x20] sm:$0xff] %vm1979, %v1970
      %1985 = vst.msk [vmem:[#allocation2 + $0x28] sm:$0xff] %vm1979, %v1971
      %1986 = vst.msk [vmem:[#allocation2 + $0x30] sm:$0xff] %vm1979, %v1972
      %1987 = vst.msk [vmem:[#allocation2 + $0x38] sm:$0xff] %vm1979, %v1973
      %1988 = vst.msk [vmem:[#allocation2 + $0x40] sm:$0xff] %vm1979, %v1974
      %1989 = vst.msk [vmem:[#allocation2 + $0x48] sm:$0xff] %vm1979, %v1975
      %1990 = vst.msk [vmem:[#allocation2 + $0x50] sm:$0xff] %vm1979, %v1976
      %1991 = vst.msk [vmem:[#allocation2 + $0x58] sm:$0xff] %vm1979, %v1977
      %1992 = vst.msk [vmem:[#allocation2 + $0x60] sm:$0xff] %vm1979, %v1978
      %p1993 = scmp.eq.s32.totalorder %s25, 2
      // Predicated region
      $region41: #{up_transition_forward.6} parent=35 // pred_check
        %p1994 = pneg %p1993
      $region42: #{up_transition_forward.6} parent=35 // pred_check_branch
        %1996 = sbr.rel (%p1994) target = $region44
      $region43: #{up_transition_forward.6} parent=35 // pred_region
        %v1997 = vld [vmem:[%s2] sm:$0x1]
        %v1999 = vlaneseq
        %v2000 = vshrl.u32 %v1999, 7
        %v2001 = vsub.s32 0, %v2000
        %v2002 = vrot.slane %v1997, %v2001
        %v2004 = vadd.f32 %v1966, %v2002
        %v2005 = vadd.f32 %v1967, %v2002
        %v2006 = vadd.f32 %v1968, %v2002
        %v2007 = vadd.f32 %v1969, %v2002
        %v2008 = vadd.f32 %v1970, %v2002
        %v2009 = vadd.f32 %v1971, %v2002
        %v2010 = vadd.f32 %v1972, %v2002
        %v2011 = vadd.f32 %v1973, %v2002
        %v2012 = vadd.f32 %v1974, %v2002
        %v2013 = vadd.f32 %v1975, %v2002
        %v2014 = vadd.f32 %v1976, %v2002
        %v2015 = vadd.f32 %v1977, %v2002
        %v2016 = vadd.f32 %v1978, %v2002
        %v2017 = vpack.c.bf16 %v2005, %v2004
        %v2018 = vpack.c.bf16 %v2007, %v2006
        %v2019 = vpack.c.bf16 %v2009, %v2008
        %v2020 = vpack.c.bf16 %v2011, %v2010
        %v2021 = vpack.c.bf16 %v2013, %v2012
        %v2022 = vpack.c.bf16 %v2015, %v2014
        %v2023 = vpack.c.bf16 %v2016, %v2016
        %v2031 = vunpack.c.l.b16 %v2017
        %v2032 = vunpack.c.h.b16 %v2017
        %v2033 = vunpack.c.l.b16 %v2018
        %v2034 = vunpack.c.h.b16 %v2018
        %v2035 = vunpack.c.l.b16 %v2019
        %v2036 = vunpack.c.h.b16 %v2019
        %v2037 = vunpack.c.l.b16 %v2020
        %v2038 = vunpack.c.h.b16 %v2020
        %v2039 = vunpack.c.l.b16 %v2021
        %v2040 = vunpack.c.h.b16 %v2021
        %v2041 = vunpack.c.l.b16 %v2022
        %v2042 = vunpack.c.h.b16 %v2022
        %v2043 = vunpack.c.l.b16 %v2023
        %v2044 = vpack.c.b16 %v2031, %v2031
        %v2045 = vpack.c.b16 %v2032, %v2032
        %v2046 = vpack.c.b16 %v2033, %v2033
        %v2047 = vpack.c.b16 %v2034, %v2034
        %v2048 = vpack.c.b16 %v2035, %v2035
        %v2049 = vpack.c.b16 %v2036, %v2036
        %v2050 = vpack.c.b16 %v2037, %v2037
        %v2051 = vpack.c.b16 %v2038, %v2038
        %v2052 = vpack.c.b16 %v2039, %v2039
        %v2053 = vpack.c.b16 %v2040, %v2040
        %v2054 = vpack.c.b16 %v2041, %v2041
        %v2055 = vpack.c.b16 %v2042, %v2042
        %v2056 = vpack.c.b16 %v2043, %v2043
        %vm2070 = vcmask 519168
        %2071 = vst.msk [vmem:[%s344] sm:$0xf] %vm2070, %v2044
        %2072 = vst.msk [vmem:[%s344 + $0x4] sm:$0xf] %vm2070, %v2045
        %2073 = vst.msk [vmem:[%s344 + $0x8] sm:$0xf] %vm2070, %v2046
        %2074 = vst.msk [vmem:[%s344 + $0xc] sm:$0xf] %vm2070, %v2047
        %2075 = vst.msk [vmem:[%s344 + $0x10] sm:$0xf] %vm2070, %v2048
        %2076 = vst.msk [vmem:[%s344 + $0x14] sm:$0xf] %vm2070, %v2049
        %2077 = vst.msk [vmem:[%s344 + $0x18] sm:$0xf] %vm2070, %v2050
        %2078 = vst.msk [vmem:[%s344 + $0x1c] sm:$0xf] %vm2070, %v2051
        %2079 = vst.msk [vmem:[%s344 + $0x20] sm:$0xf] %vm2070, %v2052
        %2080 = vst.msk [vmem:[%s344 + $0x24] sm:$0xf] %vm2070, %v2053
        %2081 = vst.msk [vmem:[%s344 + $0x28] sm:$0xf] %vm2070, %v2054
        %2082 = vst.msk [vmem:[%s344 + $0x2c] sm:$0xf] %vm2070, %v2055
        %2083 = vst.msk [vmem:[%s344 + $0x30] sm:$0xf] %vm2070, %v2056
        %v2084 = vld [vmem:[%s3] sm:$0xff]
        %v2085 = vld [vmem:[%s3 + $0x8] sm:$0xff]
        %v2086 = vld [vmem:[%s3 + $0x10] sm:$0xff]
        %v2087 = vld [vmem:[%s3 + $0x18] sm:$0xff]
        %v2088 = vld [vmem:[%s3 + $0x20] sm:$0xff]
        %v2089 = vld [vmem:[%s3 + $0x28] sm:$0xff]
        %v2090 = vld [vmem:[%s3 + $0x30] sm:$0xff]
        %v2091 = vld [vmem:[%s3 + $0x38] sm:$0xff]
        %v2092 = vld [vmem:[%s3 + $0x40] sm:$0xff]
        %v2093 = vld [vmem:[%s3 + $0x48] sm:$0xff]
        %v2094 = vld [vmem:[%s3 + $0x50] sm:$0xff]
        %v2095 = vld [vmem:[%s3 + $0x58] sm:$0xff]
        %v2096 = vld [vmem:[%s3 + $0x60] sm:$0xff]
        %2098 = vset.pattern.permute.xlu0 0
        %2099 = vperm.xlu0 %2098, %v2084
        %v2100 = vpop.permute.xlu0 %2099
        %2103 = vset.pattern.permute.xlu0 0
        %2104 = vperm.xlu0 %2103, %v2085
        %v2105 = vpop.permute.xlu0 %2104
        %2108 = vset.pattern.permute.xlu0 0
        %2109 = vperm.xlu0 %2108, %v2086
        %v2110 = vpop.permute.xlu0 %2109
        %2113 = vset.pattern.permute.xlu0 0
        %2114 = vperm.xlu0 %2113, %v2087
        %v2115 = vpop.permute.xlu0 %2114
        %2118 = vset.pattern.permute.xlu0 0
        %2119 = vperm.xlu0 %2118, %v2088
        %v2120 = vpop.permute.xlu0 %2119
        %2123 = vset.pattern.permute.xlu0 0
        %2124 = vperm.xlu0 %2123, %v2089
        %v2125 = vpop.permute.xlu0 %2124
        %2128 = vset.pattern.permute.xlu0 0
        %2129 = vperm.xlu0 %2128, %v2090
        %v2130 = vpop.permute.xlu0 %2129
        %2133 = vset.pattern.permute.xlu0 0
        %2134 = vperm.xlu0 %2133, %v2091
        %v2135 = vpop.permute.xlu0 %2134
        %2138 = vset.pattern.permute.xlu0 0
        %2139 = vperm.xlu0 %2138, %v2092
        %v2140 = vpop.permute.xlu0 %2139
        %2143 = vset.pattern.permute.xlu0 0
        %2144 = vperm.xlu0 %2143, %v2093
        %v2145 = vpop.permute.xlu0 %2144
        %2148 = vset.pattern.permute.xlu0 0
        %2149 = vperm.xlu0 %2148, %v2094
        %v2150 = vpop.permute.xlu0 %2149
        %2153 = vset.pattern.permute.xlu0 0
        %2154 = vperm.xlu0 %2153, %v2095
        %v2155 = vpop.permute.xlu0 %2154
        %2158 = vset.pattern.permute.xlu0 0
        %2159 = vperm.xlu0 %2158, %v2096
        %v2160 = vpop.permute.xlu0 %2159
        %v2162 = vmul.f32 %v2004, %v2100
        %v2163 = vmul.f32 %v2005, %v2105
        %v2164 = vmul.f32 %v2006, %v2110
        %v2165 = vmul.f32 %v2007, %v2115
        %v2166 = vmul.f32 %v2008, %v2120
        %v2167 = vmul.f32 %v2009, %v2125
        %v2168 = vmul.f32 %v2010, %v2130
        %v2169 = vmul.f32 %v2011, %v2135
        %v2170 = vmul.f32 %v2012, %v2140
        %v2171 = vmul.f32 %v2013, %v2145
        %v2172 = vmul.f32 %v2014, %v2150
        %v2173 = vmul.f32 %v2015, %v2155
        %v2174 = vmul.f32 %v2016, %v2160
        %v2175 = vsel %vm1979, %v2162, 0.0
        %v2176 = vsel %vm1979, %v2163, 0.0
        %v2177 = vadd.f32 %v2175, %v2176
        %v2178 = vsel %vm1979, %v2164, 0.0
        %v2179 = vadd.f32 %v2177, %v2178
        %v2180 = vsel %vm1979, %v2165, 0.0
        %v2181 = vadd.f32 %v2179, %v2180
        %v2182 = vsel %vm1979, %v2166, 0.0
        %v2183 = vadd.f32 %v2181, %v2182
        %v2184 = vsel %vm1979, %v2167, 0.0
        %v2185 = vadd.f32 %v2183, %v2184
        %v2186 = vsel %vm1979, %v2168, 0.0
        %v2187 = vadd.f32 %v2185, %v2186
        %v2188 = vsel %vm1979, %v2169, 0.0
        %v2189 = vadd.f32 %v2187, %v2188
        %v2190 = vsel %vm1979, %v2170, 0.0
        %v2191 = vadd.f32 %v2189, %v2190
        %v2192 = vsel %vm1979, %v2171, 0.0
        %v2193 = vadd.f32 %v2191, %v2192
        %v2194 = vsel %vm1979, %v2172, 0.0
        %v2195 = vadd.f32 %v2193, %v2194
        %v2196 = vsel %vm1979, %v2173, 0.0
        %v2197 = vadd.f32 %v2195, %v2196
        %v2198 = vsel %vm1979, %v2174, 0.0
        %v2199 = vadd.f32 %v2197, %v2198
        %v2200 = vrot.slane %v2199, 4
        %v2201 = vadd.f32 %v2199, %v2200
        %v2202 = vrot.slane %v2201, 2
        %v2203 = vadd.f32 %v2201, %v2202
        %v2204 = vrot.slane %v2203, 1
        %v2205 = vadd.f32 %v2203, %v2204
        %vm2206 = vcmask 516096
        %2207 = vst.msk [vmem:[%s351] sm:$0x1] %vm2206, %v2205
        %v2208 = vmul.f32 %v2162, %v2004
        %v2209 = vmul.f32 %v2163, %v2005
        %v2210 = vmul.f32 %v2164, %v2006
        %v2211 = vmul.f32 %v2165, %v2007
        %v2212 = vmul.f32 %v2166, %v2008
        %v2213 = vmul.f32 %v2167, %v2009
        %v2214 = vmul.f32 %v2168, %v2010
        %v2215 = vmul.f32 %v2169, %v2011
        %v2216 = vmul.f32 %v2170, %v2012
        %v2217 = vmul.f32 %v2171, %v2013
        %v2218 = vmul.f32 %v2172, %v2014
        %v2219 = vmul.f32 %v2173, %v2015
        %v2220 = vmul.f32 %v2174, %v2016
        %v2221 = vsel %vm1979, %v2208, 0.0
        %v2222 = vsel %vm1979, %v2209, 0.0
        %v2223 = vadd.f32 %v2221, %v2222
        %v2224 = vsel %vm1979, %v2210, 0.0
        %v2225 = vadd.f32 %v2223, %v2224
        %v2226 = vsel %vm1979, %v2211, 0.0
        %v2227 = vadd.f32 %v2225, %v2226
        %v2228 = vsel %vm1979, %v2212, 0.0
        %v2229 = vadd.f32 %v2227, %v2228
        %v2230 = vsel %vm1979, %v2213, 0.0
        %v2231 = vadd.f32 %v2229, %v2230
        %v2232 = vsel %vm1979, %v2214, 0.0
        %v2233 = vadd.f32 %v2231, %v2232
        %v2234 = vsel %vm1979, %v2215, 0.0
        %v2235 = vadd.f32 %v2233, %v2234
        %v2236 = vsel %vm1979, %v2216, 0.0
        %v2237 = vadd.f32 %v2235, %v2236
        %v2238 = vsel %vm1979, %v2217, 0.0
        %v2239 = vadd.f32 %v2237, %v2238
        %v2240 = vsel %vm1979, %v2218, 0.0
        %v2241 = vadd.f32 %v2239, %v2240
        %v2242 = vsel %vm1979, %v2219, 0.0
        %v2243 = vadd.f32 %v2241, %v2242
        %v2244 = vsel %vm1979, %v2220, 0.0
        %v2245 = vadd.f32 %v2243, %v2244
        %v2246 = vrot.slane %v2245, 4
        %v2247 = vadd.f32 %v2245, %v2246
        %v2248 = vrot.slane %v2247, 2
        %v2249 = vadd.f32 %v2247, %v2248
        %v2250 = vrot.slane %v2249, 1
        %v2251 = vadd.f32 %v2249, %v2250
        %2252 = vst.msk [vmem:[%s358] sm:$0x1] %vm2206, %v2251
      $region44: #{up_transition_forward.6} parent=35 // pred_fallthru
        _
      %p2253 = scmp.lt.s32.totalorder %s23, 1
      %s2254 = scalar_select %p2253, %s23, 1
      %p2255 = scmp.lt.s32.totalorder %s24, 7
      %s2256 = scalar_select %p2255, %s24, 7
      %s2257 = smul.addr %s2256, 13
      %s2258 = smul.addr %s2254, 104
      %s2259 = sadd.s32 %s2257, %s2258
      %s2260 = smul.addr %s2259, 4
      %s2261 = scalar_lea.vmem %s4, %s2260
      %p2262 = scmp.lt.s32.totalorder %s23, 1
      %s2263 = scalar_select %p2262, %s23, 1
      %p2264 = scmp.lt.s32.totalorder %s24, 7
      %s2265 = scalar_select %p2264, %s24, 7
      %s2266 = smul.addr %s2263, 8
      %s2267 = sadd.s32 %s2265, %s2266
      %s2268 = scalar_lea.vmem %s5, %s2267
      %p2269 = scmp.lt.s32.totalorder %s23, 1
      %s2270 = scalar_select %p2269, %s23, 1
      %p2271 = scmp.lt.s32.totalorder %s24, 7
      %s2272 = scalar_select %p2271, %s24, 7
      %s2273 = smul.addr %s2270, 8
      %s2274 = sadd.s32 %s2272, %s2273
      %s2275 = scalar_lea.vmem %s6, %s2274
      // Predicated region
      $region45: #{up_transition_forward.6} parent=35 // pred_check
        %p2276 = pneg %p155
      $region46: #{up_transition_forward.6} parent=35 // pred_check_branch
        %2278 = sbr.rel (%p2276) target = $region48
      $region47: #{up_transition_forward.6} parent=35 // pred_region
        _
      $region48: #{up_transition_forward.6} parent=35 // pred_fallthru
        _
      // Predicated region
      $region49: #{up_transition_forward.6} parent=35 // pred_check
        %p2279 = pneg %p183
      $region50: #{up_transition_forward.6} parent=35 // pred_check_branch
        %2281 = sbr.rel (%p2279) target = $region52
      $region51: #{up_transition_forward.6} parent=35 // pred_region
        _
      $region52: #{up_transition_forward.6} parent=35 // pred_fallthru
        _
      // Predicated region
      $region53: #{up_transition_forward.6} parent=35 // pred_check
        %p2282 = pneg %p211
      $region54: #{up_transition_forward.6} parent=35 // pred_check_branch
        %2284 = sbr.rel (%p2282) target = $region56
      $region55: #{up_transition_forward.6} parent=35 // pred_region
        _
      $region56: #{up_transition_forward.6} parent=35 // pred_fallthru
        _
    $region36: #{up_transition_forward.6} parent=5 // pred_fallthru
      _
    %p2285 = scmp.le.s32.totalorder 2, %s13
    // Predicated region
    $region57: #{up_transition_forward.6} parent=5 // pred_check
      %p2286 = pneg %p2285
    $region58: #{up_transition_forward.6} parent=5 // pred_check_branch
      %2288 = sbr.rel (%p2286) target = $region60
    $region59: #{up_transition_forward.6} parent=5 // pred_region
      %s2289 = ssub.s32 %s13, 2
      // Predicated region
      $region61: #{up_transition_forward.6} parent=59 // pred_check
        %p2290 = pneg %p161
      $region62: #{up_transition_forward.6} parent=59 // pred_check_branch
        %2292 = sbr.rel (%p2290) target = $region64
      $region63: #{up_transition_forward.6} parent=59 // pred_region
        %p2293 = scmp.lt.s32.totalorder %s26, 1
        %s2294 = scalar_select %p2293, %s26, 1
        %p2295 = scmp.lt.s32.totalorder %s27, 7
        %s2296 = scalar_select %p2295, %s27, 7
        %s2297 = smul.addr %s2296, 13
        %s2298 = smul.addr %s2294, 104
        %s2299 = sadd.s32 %s2297, %s2298
        %s2300 = smul.addr %s2299, 4
        %s2301 = scalar_lea.vmem %s4, %s2300
      $region64: #{up_transition_forward.6} parent=59 // pred_fallthru
        _
      // Predicated region
      $region65: #{up_transition_forward.6} parent=59 // pred_check
        %p2302 = pneg %p189
      $region66: #{up_transition_forward.6} parent=59 // pred_check_branch
        %2304 = sbr.rel (%p2302) target = $region68
      $region67: #{up_transition_forward.6} parent=59 // pred_region
        %p2305 = scmp.lt.s32.totalorder %s26, 1
        %s2306 = scalar_select %p2305, %s26, 1
        %p2307 = scmp.lt.s32.totalorder %s27, 7
        %s2308 = scalar_select %p2307, %s27, 7
        %s2309 = smul.addr %s2306, 8
        %s2310 = sadd.s32 %s2308, %s2309
        %s2311 = scalar_lea.vmem %s5, %s2310
      $region68: #{up_transition_forward.6} parent=59 // pred_fallthru
        _
      // Predicated region
      $region69: #{up_transition_forward.6} parent=59 // pred_check
        %p2312 = pneg %p217
      $region70: #{up_transition_forward.6} parent=59 // pred_check_branch
        %2314 = sbr.rel (%p2312) target = $region72
      $region71: #{up_transition_forward.6} parent=59 // pred_region
        %p2315 = scmp.lt.s32.totalorder %s26, 1
        %s2316 = scalar_select %p2315, %s26, 1
        %p2317 = scmp.lt.s32.totalorder %s27, 7
        %s2318 = scalar_select %p2317, %s27, 7
        %s2319 = smul.addr %s2316, 8
        %s2320 = sadd.s32 %s2318, %s2319
        %s2321 = scalar_lea.vmem %s6, %s2320
      $region72: #{up_transition_forward.6} parent=59 // pred_fallthru
        _
    $region60: #{up_transition_forward.6} parent=5 // pred_fallthru
      _
  $region6: #{up_transition_forward.6} parent=0 // loop_footer
    %s17 = sadd.s32 1, %s13
  $region7: #{up_transition_forward.6} parent=0 // loop_footer_branch
    %12 = sbr.rel target = $region3
  $region8: #{up_transition_forward.6} parent=0 // loop_exit
    _

// kernel: up_transition_forward.9
$region0: #{up_transition_forward.9}
  #allocation0 [shape = 'u32[]', space=smem, size = 0x4, offset = 0x4, fixed_abs, tag = 'smem constant byte address 0x4 - core index']
  #allocation1 [shape = 'u32[144,128]{1,0:T(1,128)}', space=vmem, size = 0x12000, scoped, tag = 'internal scratch']
  %s0 = inlined_call_operand.vmem [shape: bf16[2,8,104,64], index: 0, kind: input, shape index: {}]
  %s1 = inlined_call_operand.vmem [shape: f32[1,64], index: 1, kind: input, shape index: {}]
  %s2 = inlined_call_operand.vmem [shape: f32[1,64], index: 2, kind: input, shape index: {}]
  %s3 = inlined_call_operand.vmem [shape: f32[2,8,104,64], index: 3, kind: output, shape index: {}]
  %s4 = sld [smem:[#allocation0]]
  $region45: #{up_transition_forward.9} parent=0
    _
  %s6 = ssub.s32 1, %s4
  %s7 = scalar_select 0, %s6, %s4
  loop: start=0, step=1, limit=18
  $region2: #{up_transition_forward.9} parent=0 // loop_pre_header
    _
  $region3: #{up_transition_forward.9} parent=0 // loop_header
    %s9 = sphi 0, %s13
    %p10 = scmp.ge.s32.totalorder %s9, 18
    %s16 = sphi 0, %s28
    %s17 = sphi 0, %s24
    %s18 = sphi 0, %s16
    %s19 = sphi 0, %s17
    %s20 = sphi 0, %s18
    %s21 = sphi 0, %s19
    %s33 = sphi 0, %s35
    %s36 = sphi 0, %s33
    %s37 = sphi 0, %s36
    %s53 = sphi 0, %s37
    %s57 = sphi 0, %s57
    %s59 = sphi 0, %s57
    %s60 = sphi 0, %s59
    %s74 = sphi 0, %s60
    %s78 = sphi 0, %s78
    %s80 = sphi 0, %s78
    %s81 = sphi 0, %s80
    %s95 = sphi 0, %s81
    %s103 = sphi 0, %s105
    %s106 = sphi 0, %s103
    %s107 = sphi 0, %s106
    %s123 = sphi 0, %s107
  $region4: #{up_transition_forward.9} parent=0 // loop_header_branch
    %12 = sbr.rel (%p10) target = $region8
  $region5: #{up_transition_forward.9} parent=0 // loop_body
    %s14 = ssub.s32 %s9, 1
    %s15 = ssub.s32 %s9, 2
    %s22 = sadd.s32 1, %s17
    %p23 = scmp.ge.s32.totalorder %s22, 8
    %s24 = scalar_select %p23, 0, %s22
    %s25 = sadd.s32 1, %s16
    %s26 = scalar_select %p23, %s25, %s16
    %p27 = scmp.ge.s32.totalorder %s26, 2
    %s28 = scalar_select %p27, 0, %s26
    %s29 = ssub.s32 %s16, %s28
    %s30 = ssub.s32 %s17, %s24
    %s31 = sor.u32 %s29, %s30
    %p32 = scmp.eq.s32.totalorder %s31, 0
    %s34 = sadd.s32 %s33, 1
    %s35 = scalar_select %p32, %s33, %s34
    %p38 = pneg %p32
    %p39 = scmp.eq.s32.totalorder %s9, 15
    %p40 = por %p38, %p39
    %p41 = scmp.ne.s32.totalorder %s33, %s36
    %p42 = scmp.eq.s32.totalorder %s9, 0
    %p43 = por %p41, %p42
    %p44 = scmp.ne.s32.totalorder %s33, %s36
    %p45 = scmp.eq.s32.totalorder %s14, 15
    %p46 = por %p44, %p45
    %p47 = scmp.ne.s32.totalorder %s36, %s37
    %p48 = scmp.eq.s32.totalorder %s14, 0
    %p49 = por %p47, %p48
    %p50 = scmp.ne.s32.totalorder %s36, %s37
    %p51 = scmp.eq.s32.totalorder %s15, 15
    %p52 = por %p50, %p51
    %p54 = scmp.ne.s32.totalorder %s37, %s53
    %p55 = scmp.eq.s32.totalorder %s15, 0
    %p56 = por %p54, %p55
    %s58 = sadd.s32 %s57, 1
    %p61 = scmp.eq.s32.totalorder %s9, 15
    %p62 = scmp.ne.s32.totalorder %s57, %s59
    %p63 = scmp.eq.s32.totalorder %s9, 0
    %p64 = por %p62, %p63
    %p65 = scmp.ne.s32.totalorder %s57, %s59
    %p66 = scmp.eq.s32.totalorder %s14, 15
    %p67 = por %p65, %p66
    %p68 = scmp.ne.s32.totalorder %s59, %s60
    %p69 = scmp.eq.s32.totalorder %s14, 0
    %p70 = por %p68, %p69
    %p71 = scmp.ne.s32.totalorder %s59, %s60
    %p72 = scmp.eq.s32.totalorder %s15, 15
    %p73 = por %p71, %p72
    %p75 = scmp.ne.s32.totalorder %s60, %s74
    %p76 = scmp.eq.s32.totalorder %s15, 0
    %p77 = por %p75, %p76
    %s79 = sadd.s32 %s78, 1
    %p82 = scmp.eq.s32.totalorder %s9, 15
    %p83 = scmp.ne.s32.totalorder %s78, %s80
    %p84 = scmp.eq.s32.totalorder %s9, 0
    %p85 = por %p83, %p84
    %p86 = scmp.ne.s32.totalorder %s78, %s80
    %p87 = scmp.eq.s32.totalorder %s14, 15
    %p88 = por %p86, %p87
    %p89 = scmp.ne.s32.totalorder %s80, %s81
    %p90 = scmp.eq.s32.totalorder %s14, 0
    %p91 = por %p89, %p90
    %p92 = scmp.ne.s32.totalorder %s80, %s81
    %p93 = scmp.eq.s32.totalorder %s15, 15
    %p94 = por %p92, %p93
    %p96 = scmp.ne.s32.totalorder %s81, %s95
    %p97 = scmp.eq.s32.totalorder %s15, 0
    %p98 = por %p96, %p97
    %s99 = ssub.s32 %s16, %s28
    %s100 = ssub.s32 %s17, %s24
    %s101 = sor.u32 %s99, %s100
    %p102 = scmp.eq.s32.totalorder %s101, 0
    %s104 = sadd.s32 %s103, 1
    %s105 = scalar_select %p102, %s103, %s104
    %p108 = pneg %p102
    %p109 = scmp.eq.s32.totalorder %s9, 15
    %p110 = por %p108, %p109
    %p111 = scmp.ne.s32.totalorder %s103, %s106
    %p112 = scmp.eq.s32.totalorder %s9, 0
    %p113 = por %p111, %p112
    %p114 = scmp.ne.s32.totalorder %s103, %s106
    %p115 = scmp.eq.s32.totalorder %s14, 15
    %p116 = por %p114, %p115
    %p117 = scmp.ne.s32.totalorder %s106, %s107
    %p118 = scmp.eq.s32.totalorder %s14, 0
    %p119 = por %p117, %p118
    %p120 = scmp.ne.s32.totalorder %s106, %s107
    %p121 = scmp.eq.s32.totalorder %s15, 15
    %p122 = por %p120, %p121
    %p124 = scmp.ne.s32.totalorder %s107, %s123
    %p125 = scmp.eq.s32.totalorder %s15, 0
    %p126 = por %p124, %p125
    %p127 = scmp.le.s32.totalorder 1, %s9
    %p128 = scmp.lt.s32.totalorder %s9, 17
    %p129 = pnand %p127, %p128
    %p130 = pneg %p129
    // Predicated region
    $region9: #{up_transition_forward.9} parent=5 // pred_check
      _
    $region10: #{up_transition_forward.9} parent=5 // pred_check_branch
      %132 = sbr.rel (%p129) target = $region12
    $region11: #{up_transition_forward.9} parent=5 // pred_region
      %s133 = ssub.s32 %s9, 1
      // Predicated region
      $region13: #{up_transition_forward.9} parent=11 // pred_check
        %p134 = pneg %p70
      $region14: #{up_transition_forward.9} parent=11 // pred_check_branch
        %136 = sbr.rel (%p134) target = $region16
      $region15: #{up_transition_forward.9} parent=11 // pred_region
        _
      $region16: #{up_transition_forward.9} parent=11 // pred_fallthru
        _
      // Predicated region
      $region17: #{up_transition_forward.9} parent=11 // pred_check
        %p137 = pneg %p91
      $region18: #{up_transition_forward.9} parent=11 // pred_check_branch
        %139 = sbr.rel (%p137) target = $region20
      $region19: #{up_transition_forward.9} parent=11 // pred_region
        _
      $region20: #{up_transition_forward.9} parent=11 // pred_fallthru
        _
    $region12: #{up_transition_forward.9} parent=5 // pred_fallthru
      _
    %p140 = scmp.lt.s32.totalorder %s9, 16
    // Predicated region
    $region21: #{up_transition_forward.9} parent=5 // pred_check
      %p141 = pneg %p140
    $region22: #{up_transition_forward.9} parent=5 // pred_check_branch
      %143 = sbr.rel (%p141) target = $region24
    $region23: #{up_transition_forward.9} parent=5 // pred_region
      // Predicated region
      $region25: #{up_transition_forward.9} parent=23 // pred_check
        %p144 = pneg %p43
      $region26: #{up_transition_forward.9} parent=23 // pred_check_branch
        %146 = sbr.rel (%p144) target = $region28
      $region27: #{up_transition_forward.9} parent=23 // pred_region
        %p147 = scmp.lt.s32.totalorder %s16, 1
        %s148 = scalar_select %p147, %s16, 1
        %p149 = scmp.lt.s32.totalorder %s17, 7
        %s150 = scalar_select %p149, %s17, 7
        %s151 = smul.addr %s150, 13
        %s152 = smul.addr %s148, 104
        %s153 = sadd.s32 %s151, %s152
        %s154 = smul.addr %s153, 4
        %s155 = scalar_lea.vmem %s0, %s154
      $region28: #{up_transition_forward.9} parent=23 // pred_fallthru
        _
    $region24: #{up_transition_forward.9} parent=5 // pred_fallthru
      _
    %p156 = scmp.le.s32.totalorder 1, %s9
    %p157 = scmp.lt.s32.totalorder %s9, 17
    %p158 = pnand %p156, %p157
    %p159 = pneg %p158
    // Predicated region
    $region29: #{up_transition_forward.9} parent=5 // pred_check
      _
    $region30: #{up_transition_forward.9} parent=5 // pred_check_branch
      %161 = sbr.rel (%p158) target = $region32
    $region31: #{up_transition_forward.9} parent=5 // pred_region
      %s162 = ssub.s32 %s9, 1
      %p163 = scmp.lt.s32.totalorder %s18, 1
      %s164 = scalar_select %p163, %s18, 1
      %p165 = scmp.lt.s32.totalorder %s19, 7
      %s166 = scalar_select %p165, %s19, 7
      %s167 = smul.addr %s166, 13
      %s168 = smul.addr %s164, 104
      %s169 = sadd.s32 %s167, %s168
      %s170 = smul.addr %s169, 4
      %s171 = scalar_lea.vmem %s0, %s170
      %p172 = pneg %p49
      %p173 = pneg %p46
      %p174 = pneg %p70
      %p175 = pneg %p67
      %p176 = pneg %p91
      %p177 = pneg %p88
      %p178 = pneg %p119
      %p179 = pneg %p116
      %p180 = scmp.lt.s32.totalorder %s18, 1
      %s181 = scalar_select %p180, %s18, 1
      %p182 = scmp.lt.s32.totalorder %s19, 7
      %s183 = scalar_select %p182, %s19, 7
      %s184 = smul.addr %s183, 13
      %s185 = smul.addr %s181, 104
      %s186 = sadd.s32 %s184, %s185
      %s187 = smul.addr %s186, 8
      %s188 = scalar_lea.vmem %s3, %s187
      %p189 = scmp.lt.s32.totalorder %s18, 1
      %s190 = scalar_select %p189, %s18, 1
      %p191 = scmp.lt.s32.totalorder %s19, 7
      %s192 = scalar_select %p191, %s19, 7
      %s193 = smul.addr %s192, 13
      %s194 = smul.addr %s190, 104
      %s195 = sadd.s32 %s193, %s194
      %s196 = smul.addr %s195, 4
      %s197 = scalar_lea.vmem %s0, %s196
      %p198 = scmp.lt.s32.totalorder %s18, 1
      %s199 = scalar_select %p198, %s18, 1
      %p200 = scmp.lt.s32.totalorder %s19, 7
      %s201 = scalar_select %p200, %s19, 7
      %s202 = smul.addr %s201, 13
      %s203 = smul.addr %s199, 104
      %s204 = sadd.s32 %s202, %s203
      %s205 = smul.addr %s204, 8
      %s206 = scalar_lea.vmem %s3, %s205
      %v207 = vld [vmem:[%s197] sm:$0xf]
      %v208 = vld [vmem:[%s197 + $0x4] sm:$0xf]
      %v209 = vld [vmem:[%s197 + $0x8] sm:$0xf]
      %v210 = vld [vmem:[%s197 + $0xc] sm:$0xf]
      %v211 = vld [vmem:[%s197 + $0x10] sm:$0xf]
      %v212 = vld [vmem:[%s197 + $0x14] sm:$0xf]
      %v213 = vld [vmem:[%s197 + $0x18] sm:$0xf]
      %v214 = vld [vmem:[%s197 + $0x1c] sm:$0xf]
      %v215 = vld [vmem:[%s197 + $0x20] sm:$0xf]
      %v216 = vld [vmem:[%s197 + $0x24] sm:$0xf]
      %v217 = vld [vmem:[%s197 + $0x28] sm:$0xf]
      %v218 = vld [vmem:[%s197 + $0x2c] sm:$0xf]
      %v219 = vld [vmem:[%s197 + $0x30] sm:$0xf]
      %v220 = vunpack.c.l.bf16 %v207
      %v221 = vunpack.c.l.bf16 %v208
      %v222 = vunpack.c.l.bf16 %v209
      %v223 = vunpack.c.l.bf16 %v210
      %v224 = vunpack.c.l.bf16 %v211
      %v225 = vunpack.c.l.bf16 %v212
      %v226 = vunpack.c.l.bf16 %v213
      %v227 = vunpack.c.l.bf16 %v214
      %v228 = vunpack.c.l.bf16 %v215
      %v229 = vunpack.c.l.bf16 %v216
      %v230 = vunpack.c.l.bf16 %v217
      %v231 = vunpack.c.l.bf16 %v218
      %v232 = vunpack.c.l.bf16 %v219
      %v233 = vld [vmem:[%s1] sm:$0x1]
      %v235 = vlaneseq
      %v236 = vshrl.u32 %v235, 7
      %v237 = vsub.s32 0, %v236
      %v238 = vrot.slane %v233, %v237
      %v240 = vmul.f32 %v220, %v238
      %v241 = vmul.f32 %v221, %v238
      %v242 = vmul.f32 %v222, %v238
      %v243 = vmul.f32 %v223, %v238
      %v244 = vmul.f32 %v224, %v238
      %v245 = vmul.f32 %v225, %v238
      %v246 = vmul.f32 %v226, %v238
      %v247 = vmul.f32 %v227, %v238
      %v248 = vmul.f32 %v228, %v238
      %v249 = vmul.f32 %v229, %v238
      %v250 = vmul.f32 %v230, %v238
      %v251 = vmul.f32 %v231, %v238
      %v252 = vmul.f32 %v232, %v238
      %v253 = vld [vmem:[%s2] sm:$0x1]
      %v255 = vlaneseq
      %v256 = vshrl.u32 %v255, 7
      %v257 = vsub.s32 0, %v256
      %v258 = vrot.slane %v253, %v257
      %v260 = vadd.f32 %v240, %v258
      %v261 = vadd.f32 %v241, %v258
      %v262 = vadd.f32 %v242, %v258
      %v263 = vadd.f32 %v243, %v258
      %v264 = vadd.f32 %v244, %v258
      %v265 = vadd.f32 %v245, %v258
      %v266 = vadd.f32 %v246, %v258
      %v267 = vadd.f32 %v247, %v258
      %v268 = vadd.f32 %v248, %v258
      %v269 = vadd.f32 %v249, %v258
      %v270 = vadd.f32 %v250, %v258
      %v271 = vadd.f32 %v251, %v258
      %v272 = vadd.f32 %v252, %v258
      %v273 = vmax.f32 %v260, 0.0
      %v274 = vmax.f32 %v261, 0.0
      %v275 = vmax.f32 %v262, 0.0
      %v276 = vmax.f32 %v263, 0.0
      %v277 = vmax.f32 %v264, 0.0
      %v278 = vmax.f32 %v265, 0.0
      %v279 = vmax.f32 %v266, 0.0
      %v280 = vmax.f32 %v267, 0.0
      %v281 = vmax.f32 %v268, 0.0
      %v282 = vmax.f32 %v269, 0.0
      %v283 = vmax.f32 %v270, 0.0
      %v284 = vmax.f32 %v271, 0.0
      %v285 = vmax.f32 %v272, 0.0
      %vm286 = vcmask 523264
      %287 = vst.msk [vmem:[%s206] sm:$0xff] %vm286, %v273
      %288 = vst.msk [vmem:[%s206 + $0x8] sm:$0xff] %vm286, %v274
      %289 = vst.msk [vmem:[%s206 + $0x10] sm:$0xff] %vm286, %v275
      %290 = vst.msk [vmem:[%s206 + $0x18] sm:$0xff] %vm286, %v276
      %291 = vst.msk [vmem:[%s206 + $0x20] sm:$0xff] %vm286, %v277
      %292 = vst.msk [vmem:[%s206 + $0x28] sm:$0xff] %vm286, %v278
      %293 = vst.msk [vmem:[%s206 + $0x30] sm:$0xff] %vm286, %v279
      %294 = vst.msk [vmem:[%s206 + $0x38] sm:$0xff] %vm286, %v280
      %295 = vst.msk [vmem:[%s206 + $0x40] sm:$0xff] %vm286, %v281
      %296 = vst.msk [vmem:[%s206 + $0x48] sm:$0xff] %vm286, %v282
      %297 = vst.msk [vmem:[%s206 + $0x50] sm:$0xff] %vm286, %v283
      %298 = vst.msk [vmem:[%s206 + $0x58] sm:$0xff] %vm286, %v284
      %299 = vst.msk [vmem:[%s206 + $0x60] sm:$0xff] %vm286, %v285
      %p300 = scmp.lt.s32.totalorder %s18, 1
      %s301 = scalar_select %p300, %s18, 1
      %p302 = scmp.lt.s32.totalorder %s19, 7
      %s303 = scalar_select %p302, %s19, 7
      %s304 = smul.addr %s303, 13
      %s305 = smul.addr %s301, 104
      %s306 = sadd.s32 %s304, %s305
      %s307 = smul.addr %s306, 8
      %s308 = scalar_lea.vmem %s3, %s307
      // Predicated region
      $region33: #{up_transition_forward.9} parent=31 // pred_check
        %p309 = pneg %p116
      $region34: #{up_transition_forward.9} parent=31 // pred_check_branch
        %311 = sbr.rel (%p309) target = $region36
      $region35: #{up_transition_forward.9} parent=31 // pred_region
        _
      $region36: #{up_transition_forward.9} parent=31 // pred_fallthru
        _
    $region32: #{up_transition_forward.9} parent=5 // pred_fallthru
      _
    %p312 = scmp.le.s32.totalorder 2, %s9
    // Predicated region
    $region37: #{up_transition_forward.9} parent=5 // pred_check
      %p313 = pneg %p312
    $region38: #{up_transition_forward.9} parent=5 // pred_check_branch
      %315 = sbr.rel (%p313) target = $region40
    $region39: #{up_transition_forward.9} parent=5 // pred_region
      %s316 = ssub.s32 %s9, 2
      // Predicated region
      $region41: #{up_transition_forward.9} parent=39 // pred_check
        %p317 = pneg %p122
      $region42: #{up_transition_forward.9} parent=39 // pred_check_branch
        %319 = sbr.rel (%p317) target = $region44
      $region43: #{up_transition_forward.9} parent=39 // pred_region
        %p320 = scmp.lt.s32.totalorder %s20, 1
        %s321 = scalar_select %p320, %s20, 1
        %p322 = scmp.lt.s32.totalorder %s21, 7
        %s323 = scalar_select %p322, %s21, 7
        %s324 = smul.addr %s323, 13
        %s325 = smul.addr %s321, 104
        %s326 = sadd.s32 %s324, %s325
        %s327 = smul.addr %s326, 8
        %s328 = scalar_lea.vmem %s3, %s327
      $region44: #{up_transition_forward.9} parent=39 // pred_fallthru
        _
    $region40: #{up_transition_forward.9} parent=5 // pred_fallthru
      _
  $region6: #{up_transition_forward.9} parent=0 // loop_footer
    %s13 = sadd.s32 1, %s9
  $region7: #{up_transition_forward.9} parent=0 // loop_footer_branch
    %8 = sbr.rel target = $region3
  $region8: #{up_transition_forward.9} parent=0 // loop_exit
    _

// kernel: up_transition_forward.8
$region0: #{up_transition_forward.8}
  #allocation0 [shape = 'u32[]', space=smem, size = 0x4, offset = 0x4, fixed_abs, tag = 'smem constant byte address 0x4 - core index']
  #allocation1 [shape = 'u32[144,128]{1,0:T(1,128)}', space=vmem, size = 0x12000, scoped, tag = 'internal scratch']
  #allocation2 [shape = 'f32[104,64]{1,0:T(8,128)}', space=vmem, size = 0xd000, scoped, tag = 'scratch operand']
  %s0 = inlined_call_operand.vmem [shape: bf16[2,10,128,64], index: 0, kind: input, shape index: {}]
  %s1 = inlined_call_operand.vmem [shape: bf16[3,9,64,64], index: 1, kind: input, shape index: {}]
  %s2 = inlined_call_operand.vmem [shape: f32[1,64], index: 2, kind: input, shape index: {}]
  %s3 = inlined_call_operand.vmem [shape: f32[104,1], index: 3, kind: input, shape index: {}]
  %s4 = inlined_call_operand.vmem [shape: bf16[2,8,104,64], index: 4, kind: output, shape index: {0}]
  %s5 = inlined_call_operand.vmem [shape: f32[2,8,1,64], index: 5, kind: output, shape index: {1}]
  %s6 = inlined_call_operand.vmem [shape: f32[2,8,1,64], index: 6, kind: output, shape index: {2}]
  %7 = xla_tuple %s4, %s5, %s6
  %s8 = sld [smem:[#allocation0]]
  $region73: #{up_transition_forward.8} parent=0
    _
  %s10 = ssub.s32 1, %s8
  %s11 = scalar_select 0, %s10, %s8
  loop: start=0, step=1, limit=50
  $region2: #{up_transition_forward.8} parent=0 // loop_pre_header
    _
  $region3: #{up_transition_forward.8} parent=0 // loop_header
    %s13 = sphi 0, %s17
    %p14 = scmp.ge.s32.totalorder %s13, 50
    %s20 = sphi 0, %s39
    %s21 = sphi 0, %s35
    %s22 = sphi 0, %s31
    %s23 = sphi 0, %s20
    %s24 = sphi 0, %s21
    %s25 = sphi 0, %s22
    %s26 = sphi 0, %s23
    %s27 = sphi 0, %s24
    %s28 = sphi 0, %s25
    %s46 = sphi 0, %s48
    %s49 = sphi 0, %s46
    %s50 = sphi 0, %s49
    %s66 = sphi 0, %s50
    %s72 = sphi 0, %s74
    %s75 = sphi 0, %s72
    %s76 = sphi 0, %s75
    %s92 = sphi 0, %s76
    %s96 = sphi 0, %s96
    %s98 = sphi 0, %s96
    %s99 = sphi 0, %s98
    %s113 = sphi 0, %s99
    %s117 = sphi 0, %s117
    %s119 = sphi 0, %s117
    %s120 = sphi 0, %s119
    %s134 = sphi 0, %s120
    %s142 = sphi 0, %s144
    %s145 = sphi 0, %s142
    %s146 = sphi 0, %s145
    %s162 = sphi 0, %s146
    %s170 = sphi 0, %s172
    %s173 = sphi 0, %s170
    %s174 = sphi 0, %s173
    %s190 = sphi 0, %s174
    %s198 = sphi 0, %s200
    %s201 = sphi 0, %s198
    %s202 = sphi 0, %s201
    %s218 = sphi 0, %s202
  $region4: #{up_transition_forward.8} parent=0 // loop_header_branch
    %16 = sbr.rel (%p14) target = $region8
  $region5: #{up_transition_forward.8} parent=0 // loop_body
    %s18 = ssub.s32 %s13, 1
    %s19 = ssub.s32 %s13, 2
    %s29 = sadd.s32 1, %s22
    %p30 = scmp.ge.s32.totalorder %s29, 3
    %s31 = scalar_select %p30, 0, %s29
    %s32 = sadd.s32 1, %s21
    %s33 = scalar_select %p30, %s32, %s21
    %p34 = scmp.ge.s32.totalorder %s33, 8
    %s35 = scalar_select %p34, 0, %s33
    %s36 = sadd.s32 1, %s20
    %s37 = scalar_select %p34, %s36, %s20
    %p38 = scmp.ge.s32.totalorder %s37, 2
    %s39 = scalar_select %p38, 0, %s37
    %s40 = sadd.s32 %s21, %s22
    %s41 = sadd.s32 %s35, %s31
    %s42 = ssub.s32 %s20, %s39
    %s43 = ssub.s32 %s40, %s41
    %s44 = sor.u32 %s42, %s43
    %p45 = scmp.eq.s32.totalorder %s44, 0
    %s47 = sadd.s32 %s46, 1
    %s48 = scalar_select %p45, %s46, %s47
    %p51 = pneg %p45
    %p52 = scmp.eq.s32.totalorder %s13, 47
    %p53 = por %p51, %p52
    %p54 = scmp.ne.s32.totalorder %s46, %s49
    %p55 = scmp.eq.s32.totalorder %s13, 0
    %p56 = por %p54, %p55
    %p57 = scmp.ne.s32.totalorder %s46, %s49
    %p58 = scmp.eq.s32.totalorder %s18, 47
    %p59 = por %p57, %p58
    %p60 = scmp.ne.s32.totalorder %s49, %s50
    %p61 = scmp.eq.s32.totalorder %s18, 0
    %p62 = por %p60, %p61
    %p63 = scmp.ne.s32.totalorder %s49, %s50
    %p64 = scmp.eq.s32.totalorder %s19, 47
    %p65 = por %p63, %p64
    %p67 = scmp.ne.s32.totalorder %s50, %s66
    %p68 = scmp.eq.s32.totalorder %s19, 0
    %p69 = por %p67, %p68
    %s70 = ssub.s32 %s22, %s31
    %p71 = scmp.eq.s32.totalorder %s70, 0
    %s73 = sadd.s32 %s72, 1
    %s74 = scalar_select %p71, %s72, %s73
    %p77 = pneg %p71
    %p78 = scmp.eq.s32.totalorder %s13, 47
    %p79 = por %p77, %p78
    %p80 = scmp.ne.s32.totalorder %s72, %s75
    %p81 = scmp.eq.s32.totalorder %s13, 0
    %p82 = por %p80, %p81
    %p83 = scmp.ne.s32.totalorder %s72, %s75
    %p84 = scmp.eq.s32.totalorder %s18, 47
    %p85 = por %p83, %p84
    %p86 = scmp.ne.s32.totalorder %s75, %s76
    %p87 = scmp.eq.s32.totalorder %s18, 0
    %p88 = por %p86, %p87
    %p89 = scmp.ne.s32.totalorder %s75, %s76
    %p90 = scmp.eq.s32.totalorder %s19, 47
    %p91 = por %p89, %p90
    %p93 = scmp.ne.s32.totalorder %s76, %s92
    %p94 = scmp.eq.s32.totalorder %s19, 0
    %p95 = por %p93, %p94
    %s97 = sadd.s32 %s96, 1
    %p100 = scmp.eq.s32.totalorder %s13, 47
    %p101 = scmp.ne.s32.totalorder %s96, %s98
    %p102 = scmp.eq.s32.totalorder %s13, 0
    %p103 = por %p101, %p102
    %p104 = scmp.ne.s32.totalorder %s96, %s98
    %p105 = scmp.eq.s32.totalorder %s18, 47
    %p106 = por %p104, %p105
    %p107 = scmp.ne.s32.totalorder %s98, %s99
    %p108 = scmp.eq.s32.totalorder %s18, 0
    %p109 = por %p107, %p108
    %p110 = scmp.ne.s32.totalorder %s98, %s99
    %p111 = scmp.eq.s32.totalorder %s19, 47
    %p112 = por %p110, %p111
    %p114 = scmp.ne.s32.totalorder %s99, %s113
    %p115 = scmp.eq.s32.totalorder %s19, 0
    %p116 = por %p114, %p115
    %s118 = sadd.s32 %s117, 1
    %p121 = scmp.eq.s32.totalorder %s13, 47
    %p122 = scmp.ne.s32.totalorder %s117, %s119
    %p123 = scmp.eq.s32.totalorder %s13, 0
    %p124 = por %p122, %p123
    %p125 = scmp.ne.s32.totalorder %s117, %s119
    %p126 = scmp.eq.s32.totalorder %s18, 47
    %p127 = por %p125, %p126
    %p128 = scmp.ne.s32.totalorder %s119, %s120
    %p129 = scmp.eq.s32.totalorder %s18, 0
    %p130 = por %p128, %p129
    %p131 = scmp.ne.s32.totalorder %s119, %s120
    %p132 = scmp.eq.s32.totalorder %s19, 47
    %p133 = por %p131, %p132
    %p135 = scmp.ne.s32.totalorder %s120, %s134
    %p136 = scmp.eq.s32.totalorder %s19, 0
    %p137 = por %p135, %p136
    %s138 = ssub.s32 %s20, %s39
    %s139 = ssub.s32 %s21, %s35
    %s140 = sor.u32 %s138, %s139
    %p141 = scmp.eq.s32.totalorder %s140, 0
    %s143 = sadd.s32 %s142, 1
    %s144 = scalar_select %p141, %s142, %s143
    %p147 = pneg %p141
    %p148 = scmp.eq.s32.totalorder %s13, 47
    %p149 = por %p147, %p148
    %p150 = scmp.ne.s32.totalorder %s142, %s145
    %p151 = scmp.eq.s32.totalorder %s13, 0
    %p152 = por %p150, %p151
    %p153 = scmp.ne.s32.totalorder %s142, %s145
    %p154 = scmp.eq.s32.totalorder %s18, 47
    %p155 = por %p153, %p154
    %p156 = scmp.ne.s32.totalorder %s145, %s146
    %p157 = scmp.eq.s32.totalorder %s18, 0
    %p158 = por %p156, %p157
    %p159 = scmp.ne.s32.totalorder %s145, %s146
    %p160 = scmp.eq.s32.totalorder %s19, 47
    %p161 = por %p159, %p160
    %p163 = scmp.ne.s32.totalorder %s146, %s162
    %p164 = scmp.eq.s32.totalorder %s19, 0
    %p165 = por %p163, %p164
    %s166 = ssub.s32 %s20, %s39
    %s167 = ssub.s32 %s21, %s35
    %s168 = sor.u32 %s166, %s167
    %p169 = scmp.eq.s32.totalorder %s168, 0
    %s171 = sadd.s32 %s170, 1
    %s172 = scalar_select %p169, %s170, %s171
    %p175 = pneg %p169
    %p176 = scmp.eq.s32.totalorder %s13, 47
    %p177 = por %p175, %p176
    %p178 = scmp.ne.s32.totalorder %s170, %s173
    %p179 = scmp.eq.s32.totalorder %s13, 0
    %p180 = por %p178, %p179
    %p181 = scmp.ne.s32.totalorder %s170, %s173
    %p182 = scmp.eq.s32.totalorder %s18, 47
    %p183 = por %p181, %p182
    %p184 = scmp.ne.s32.totalorder %s173, %s174
    %p185 = scmp.eq.s32.totalorder %s18, 0
    %p186 = por %p184, %p185
    %p187 = scmp.ne.s32.totalorder %s173, %s174
    %p188 = scmp.eq.s32.totalorder %s19, 47
    %p189 = por %p187, %p188
    %p191 = scmp.ne.s32.totalorder %s174, %s190
    %p192 = scmp.eq.s32.totalorder %s19, 0
    %p193 = por %p191, %p192
    %s194 = ssub.s32 %s20, %s39
    %s195 = ssub.s32 %s21, %s35
    %s196 = sor.u32 %s194, %s195
    %p197 = scmp.eq.s32.totalorder %s196, 0
    %s199 = sadd.s32 %s198, 1
    %s200 = scalar_select %p197, %s198, %s199
    %p203 = pneg %p197
    %p204 = scmp.eq.s32.totalorder %s13, 47
    %p205 = por %p203, %p204
    %p206 = scmp.ne.s32.totalorder %s198, %s201
    %p207 = scmp.eq.s32.totalorder %s13, 0
    %p208 = por %p206, %p207
    %p209 = scmp.ne.s32.totalorder %s198, %s201
    %p210 = scmp.eq.s32.totalorder %s18, 47
    %p211 = por %p209, %p210
    %p212 = scmp.ne.s32.totalorder %s201, %s202
    %p213 = scmp.eq.s32.totalorder %s18, 0
    %p214 = por %p212, %p213
    %p215 = scmp.ne.s32.totalorder %s201, %s202
    %p216 = scmp.eq.s32.totalorder %s19, 47
    %p217 = por %p215, %p216
    %p219 = scmp.ne.s32.totalorder %s202, %s218
    %p220 = scmp.eq.s32.totalorder %s19, 0
    %p221 = por %p219, %p220
    %p222 = scmp.le.s32.totalorder 1, %s13
    %p223 = scmp.lt.s32.totalorder %s13, 49
    %p224 = pnand %p222, %p223
    %p225 = pneg %p224
    // Predicated region
    $region9: #{up_transition_forward.8} parent=5 // pred_check
      _
    $region10: #{up_transition_forward.8} parent=5 // pred_check_branch
      %227 = sbr.rel (%p224) target = $region12
    $region11: #{up_transition_forward.8} parent=5 // pred_region
      %s228 = ssub.s32 %s13, 1
      // Predicated region
      $region13: #{up_transition_forward.8} parent=11 // pred_check
        %p229 = pneg %p109
      $region14: #{up_transition_forward.8} parent=11 // pred_check_branch
        %231 = sbr.rel (%p229) target = $region16
      $region15: #{up_transition_forward.8} parent=11 // pred_region
        _
      $region16: #{up_transition_forward.8} parent=11 // pred_fallthru
        _
      // Predicated region
      $region17: #{up_transition_forward.8} parent=11 // pred_check
        %p232 = pneg %p130
      $region18: #{up_transition_forward.8} parent=11 // pred_check_branch
        %234 = sbr.rel (%p232) target = $region20
      $region19: #{up_transition_forward.8} parent=11 // pred_region
        _
      $region20: #{up_transition_forward.8} parent=11 // pred_fallthru
        _
    $region12: #{up_transition_forward.8} parent=5 // pred_fallthru
      _
    %p235 = scmp.lt.s32.totalorder %s13, 48
    // Predicated region
    $region21: #{up_transition_forward.8} parent=5 // pred_check
      %p236 = pneg %p235
    $region22: #{up_transition_forward.8} parent=5 // pred_check_branch
      %238 = sbr.rel (%p236) target = $region24
    $region23: #{up_transition_forward.8} parent=5 // pred_region
      // Predicated region
      $region25: #{up_transition_forward.8} parent=23 // pred_check
        %p239 = pneg %p56
      $region26: #{up_transition_forward.8} parent=23 // pred_check_branch
        %241 = sbr.rel (%p239) target = $region28
      $region27: #{up_transition_forward.8} parent=23 // pred_region
        %s242 = sadd.s32 %s21, %s22
        %p243 = scmp.lt.s32.totalorder %s20, 1
        %s244 = scalar_select %p243, %s20, 1
        %p245 = scmp.lt.s32.totalorder %s242, 9
        %s246 = scalar_select %p245, %s242, 9
        %s247 = smul.addr %s246, 16
        %s248 = smul.addr %s244, 160
        %s249 = sadd.s32 %s247, %s248
        %s250 = smul.addr %s249, 4
        %s251 = scalar_lea.vmem %s0, %s250
        %s252 = sadd.s32 %s21, %s22
      $region28: #{up_transition_forward.8} parent=23 // pred_fallthru
        _
      // Predicated region
      $region29: #{up_transition_forward.8} parent=23 // pred_check
        %p253 = pneg %p82
      $region30: #{up_transition_forward.8} parent=23 // pred_check_branch
        %255 = sbr.rel (%p253) target = $region32
      $region31: #{up_transition_forward.8} parent=23 // pred_region
        %p256 = scmp.lt.s32.totalorder %s22, 2
        %s257 = scalar_select %p256, %s22, 2
        %s258 = smul.addr %s257, 72
        %s259 = smul.addr %s258, 4
        %s260 = scalar_lea.vmem %s1, %s259
      $region32: #{up_transition_forward.8} parent=23 // pred_fallthru
        _
    $region24: #{up_transition_forward.8} parent=5 // pred_fallthru
      _
    %p261 = scmp.le.s32.totalorder 1, %s13
    %p262 = scmp.lt.s32.totalorder %s13, 49
    %p263 = pnand %p261, %p262
    %p264 = pneg %p263
    // Predicated region
    $region33: #{up_transition_forward.8} parent=5 // pred_check
      _
    $region34: #{up_transition_forward.8} parent=5 // pred_check_branch
      %266 = sbr.rel (%p263) target = $region36
    $region35: #{up_transition_forward.8} parent=5 // pred_region
      %s267 = ssub.s32 %s13, 1
      %s268 = sadd.s32 %s24, %s25
      %p269 = scmp.lt.s32.totalorder %s23, 1
      %s270 = scalar_select %p269, %s23, 1
      %p271 = scmp.lt.s32.totalorder %s268, 9
      %s272 = scalar_select %p271, %s268, 9
      %s273 = smul.addr %s272, 16
      %s274 = smul.addr %s270, 160
      %s275 = sadd.s32 %s273, %s274
      %s276 = smul.addr %s275, 4
      %s277 = scalar_lea.vmem %s0, %s276
      %p278 = pneg %p62
      %p279 = pneg %p59
      %p280 = scmp.lt.s32.totalorder %s25, 2
      %s281 = scalar_select %p280, %s25, 2
      %s282 = smul.addr %s281, 72
      %s283 = smul.addr %s282, 4
      %s284 = scalar_lea.vmem %s1, %s283
      %p285 = pneg %p88
      %p286 = pneg %p85
      %p287 = pneg %p109
      %p288 = pneg %p106
      %p289 = pneg %p130
      %p290 = pneg %p127
      %p291 = pneg %p158
      %p292 = pneg %p155
      %p293 = scmp.lt.s32.totalorder %s23, 1
      %s294 = scalar_select %p293, %s23, 1
      %p295 = scmp.lt.s32.totalorder %s24, 7
      %s296 = scalar_select %p295, %s24, 7
      %s297 = smul.addr %s296, 13
      %s298 = smul.addr %s294, 104
      %s299 = sadd.s32 %s297, %s298
      %s300 = smul.addr %s299, 4
      %s301 = scalar_lea.vmem %s4, %s300
      %p302 = pneg %p186
      %p303 = pneg %p183
      %p304 = scmp.lt.s32.totalorder %s23, 1
      %s305 = scalar_select %p304, %s23, 1
      %p306 = scmp.lt.s32.totalorder %s24, 7
      %s307 = scalar_select %p306, %s24, 7
      %s308 = smul.addr %s305, 8
      %s309 = sadd.s32 %s307, %s308
      %s310 = scalar_lea.vmem %s5, %s309
      %p311 = pneg %p214
      %p312 = pneg %p211
      %p313 = scmp.lt.s32.totalorder %s23, 1
      %s314 = scalar_select %p313, %s23, 1
      %p315 = scmp.lt.s32.totalorder %s24, 7
      %s316 = scalar_select %p315, %s24, 7
      %s317 = smul.addr %s314, 8
      %s318 = sadd.s32 %s316, %s317
      %s319 = scalar_lea.vmem %s6, %s318
      %s320 = sadd.s32 %s24, %s25
      %p321 = scmp.lt.s32.totalorder %s23, 1
      %s322 = scalar_select %p321, %s23, 1
      %p323 = scmp.lt.s32.totalorder %s320, 9
      %s324 = scalar_select %p323, %s320, 9
      %s325 = smul.addr %s324, 16
      %s326 = smul.addr %s322, 160
      %s327 = sadd.s32 %s325, %s326
      %s328 = smul.addr %s327, 4
      %s329 = scalar_lea.vmem %s0, %s328
      %s330 = sadd.s32 %s24, %s25
      %p331 = scmp.lt.s32.totalorder %s25, 2
      %s332 = scalar_select %p331, %s25, 2
      %s333 = smul.addr %s332, 72
      %s334 = smul.addr %s333, 4
      %s335 = scalar_lea.vmem %s1, %s334
      %p336 = scmp.lt.s32.totalorder %s23, 1
      %s337 = scalar_select %p336, %s23, 1
      %p338 = scmp.lt.s32.totalorder %s24, 7
      %s339 = scalar_select %p338, %s24, 7
      %s340 = smul.addr %s339, 13
      %s341 = smul.addr %s337, 104
      %s342 = sadd.s32 %s340, %s341
      %s343 = smul.addr %s342, 4
      %s344 = scalar_lea.vmem %s4, %s343
      %p345 = scmp.lt.s32.totalorder %s23, 1
      %s346 = scalar_select %p345, %s23, 1
      %p347 = scmp.lt.s32.totalorder %s24, 7
      %s348 = scalar_select %p347, %s24, 7
      %s349 = smul.addr %s346, 8
      %s350 = sadd.s32 %s348, %s349
      %s351 = scalar_lea.vmem %s5, %s350
      %p352 = scmp.lt.s32.totalorder %s23, 1
      %s353 = scalar_select %p352, %s23, 1
      %p354 = scmp.lt.s32.totalorder %s24, 7
      %s355 = scalar_select %p354, %s24, 7
      %s356 = smul.addr %s353, 8
      %s357 = sadd.s32 %s355, %s356
      %s358 = scalar_lea.vmem %s6, %s357
      %p360 = scmp.eq.s32.totalorder %s25, 0
      // Predicated region
      $region37: #{up_transition_forward.8} parent=35 // pred_check
        %p361 = pneg %p360
      $region38: #{up_transition_forward.8} parent=35 // pred_check_branch
        %363 = sbr.rel (%p361) target = $region40
      $region39: #{up_transition_forward.8} parent=35 // pred_region
        %vm364 = vcmask 523264
        %365 = vst.msk [vmem:[#allocation2] sm:$0xff] %vm364, 0.0
        %366 = vst.msk [vmem:[#allocation2 + $0x8] sm:$0xff] %vm364, 0.0
        %367 = vst.msk [vmem:[#allocation2 + $0x10] sm:$0xff] %vm364, 0.0
        %368 = vst.msk [vmem:[#allocation2 + $0x18] sm:$0xff] %vm364, 0.0
        %369 = vst.msk [vmem:[#allocation2 + $0x20] sm:$0xff] %vm364, 0.0
        %370 = vst.msk [vmem:[#allocation2 + $0x28] sm:$0xff] %vm364, 0.0
        %371 = vst.msk [vmem:[#allocation2 + $0x30] sm:$0xff] %vm364, 0.0
        %372 = vst.msk [vmem:[#allocation2 + $0x38] sm:$0xff] %vm364, 0.0
        %373 = vst.msk [vmem:[#allocation2 + $0x40] sm:$0xff] %vm364, 0.0
        %374 = vst.msk [vmem:[#allocation2 + $0x48] sm:$0xff] %vm364, 0.0
        %375 = vst.msk [vmem:[#allocation2 + $0x50] sm:$0xff] %vm364, 0.0
        %376 = vst.msk [vmem:[#allocation2 + $0x58] sm:$0xff] %vm364, 0.0
        %377 = vst.msk [vmem:[#allocation2 + $0x60] sm:$0xff] %vm364, 0.0
      $region40: #{up_transition_forward.8} parent=35 // pred_fallthru
        _
      %v378 = vld [vmem:[%s329] sm:$0xf]
      %v379 = vld [vmem:[%s329 + $0x4] sm:$0xf]
      %v380 = vld [vmem:[%s329 + $0x8] sm:$0xf]
      %v381 = vld [vmem:[%s329 + $0xc] sm:$0xf]
      %v382 = vld [vmem:[%s329 + $0x10] sm:$0xf]
      %v383 = vld [vmem:[%s329 + $0x14] sm:$0xf]
      %v384 = vld [vmem:[%s329 + $0x18] sm:$0xf]
      %v385 = vld [vmem:[%s329 + $0x1c] sm:$0xf]
      %v386 = vld [vmem:[%s329 + $0x20] sm:$0xf]
      %v387 = vld [vmem:[%s329 + $0x24] sm:$0xf]
      %v388 = vld [vmem:[%s329 + $0x28] sm:$0xf]
      %v389 = vld [vmem:[%s329 + $0x2c] sm:$0xf]
      %v390 = vld [vmem:[%s329 + $0x30] sm:$0xf]
      %v391 = vld [vmem:[%s329 + $0x34] sm:$0xf]
      %v392 = vld [vmem:[%s329 + $0x38] sm:$0xf]
      %v393 = vld [vmem:[%s329 + $0x3c] sm:$0xf]
      %v394 = vld [vmem:[#allocation2] sm:$0xff]
      %v395 = vld [vmem:[#allocation2 + $0x8] sm:$0xff]
      %v396 = vld [vmem:[#allocation2 + $0x10] sm:$0xff]
      %v397 = vld [vmem:[#allocation2 + $0x18] sm:$0xff]
      %v398 = vld [vmem:[#allocation2 + $0x20] sm:$0xff]
      %v399 = vld [vmem:[#allocation2 + $0x28] sm:$0xff]
      %v400 = vld [vmem:[#allocation2 + $0x30] sm:$0xff]
      %v401 = vld [vmem:[#allocation2 + $0x38] sm:$0xff]
      %v402 = vld [vmem:[#allocation2 + $0x40] sm:$0xff]
      %v403 = vld [vmem:[#allocation2 + $0x48] sm:$0xff]
      %v404 = vld [vmem:[#allocation2 + $0x50] sm:$0xff]
      %v405 = vld [vmem:[#allocation2 + $0x58] sm:$0xff]
      %v406 = vld [vmem:[#allocation2 + $0x60] sm:$0xff]
      %v407 = vld [vmem:[%s335] sm:$0xf]
      %v408 = vld [vmem:[%s335 + $0x4] sm:$0xf]
      %v409 = vld [vmem:[%s335 + $0x8] sm:$0xf]
      %v410 = vld [vmem:[%s335 + $0xc] sm:$0xf]
      %v411 = vld [vmem:[%s335 + $0x10] sm:$0xf]
      %v412 = vld [vmem:[%s335 + $0x14] sm:$0xf]
      %v413 = vld [vmem:[%s335 + $0x18] sm:$0xf]
      %v414 = vld [vmem:[%s335 + $0x1c] sm:$0xf]
      %v431 = vunpack.c.l.b16 %v378
      %v432 = vunpack.c.l.b16 %v379
      %v433 = vunpack.c.l.b16 %v380
      %v434 = vunpack.c.l.b16 %v381
      %v435 = vunpack.c.l.b16 %v382
      %v436 = vunpack.c.l.b16 %v383
      %v437 = vunpack.c.l.b16 %v384
      %v438 = vunpack.c.l.b16 %v385
      %v439 = vunpack.c.l.b16 %v386
      %v440 = vunpack.c.l.b16 %v387
      %v441 = vunpack.c.l.b16 %v388
      %v442 = vunpack.c.l.b16 %v389
      %v443 = vunpack.c.l.b16 %v390
      %v444 = vunpack.c.l.b16 %v391
      %v445 = vunpack.c.l.b16 %v392
      %v446 = vunpack.c.l.b16 %v393
      %v447 = vpack.c.b16 %v432, %v431
      %v448 = vpack.c.b16 %v434, %v433
      %v449 = vpack.c.b16 %v436, %v435
      %v450 = vpack.c.b16 %v438, %v437
      %v451 = vpack.c.b16 %v440, %v439
      %v452 = vpack.c.b16 %v442, %v441
      %v453 = vpack.c.b16 %v444, %v443
      %v454 = vpack.c.b16 %v446, %v445
      %v463 = vunpack.c.l.b16 %v407
      %v464 = vunpack.c.l.b16 %v408
      %v465 = vunpack.c.l.b16 %v409
      %v466 = vunpack.c.l.b16 %v410
      %v467 = vunpack.c.l.b16 %v411
      %v468 = vunpack.c.l.b16 %v412
      %v469 = vunpack.c.l.b16 %v413
      %v470 = vunpack.c.l.b16 %v414
      %v471 = vpack.c.b16 %v464, %v463
      %v472 = vpack.c.b16 %v466, %v465
      %v473 = vpack.c.b16 %v468, %v467
      %v474 = vpack.c.b16 %v470, %v469
      %vm479 = vcmask 523264
      %v481 = vsel %vm479, %v447, 0
      %v484 = vsel %vm479, %v448, 0
      %v487 = vsel %vm479, %v449, 0
      %v490 = vsel %vm479, %v450, 0
      %v493 = vsel %vm479, %v451, 0
      %v496 = vsel %vm479, %v452, 0
      %v499 = vsel %vm479, %v453, 0
      %v502 = vsel %vm479, %v454, 0
      %504 = vmatprep.subr.bf16.mxu0 0
      %505 = vmatpush1.bf16.msra.mxu0 0
      %506 = vmatprep.subr.bf16.mxu0 0
      %507 = vmatpush1.bf16.msra.mxu0 0
      %508 = vmatprep.subr.bf16.mxu0 0
      %509 = vmatpush1.bf16.msra.mxu0 0
      %510 = vmatprep.subr.bf16.mxu0 0
      %511 = vmatpush1.bf16.msra.mxu0 0
      %512 = vmatprep.subr.bf16.mxu0 0
      %513 = vmatpush1.bf16.msra.mxu0 %v474
      %514 = vmatprep.subr.bf16.mxu0 0
      %515 = vmatpush1.bf16.msra.mxu0 %v473
      %516 = vmatprep.subr.bf16.mxu0 0
      %517 = vmatpush1.bf16.msra.mxu0 %v472
      %518 = vmatprep.subr.bf16.mxu0 0
      %519 = vmatpush1.bf16.msra.mxu0 %v471
      %520 = vmatprep.subr.bf16.mxu0 0
      %521 = vmatpush2.bf16.msra.mxu0 0
      %522 = vmatprep.subr.bf16.mxu0 0
      %523 = vmatpush2.bf16.msra.mxu0 0
      %524 = vmatprep.subr.bf16.mxu0 0
      %525 = vmatpush2.bf16.msra.mxu0 0
      %526 = vmatprep.subr.bf16.mxu0 0
      %527 = vmatpush2.bf16.msra.mxu0 0
      %528 = vmatprep.subr.bf16.mxu0 0
      %529 = vmatpush2.bf16.msra.mxu0 0
      %530 = vmatprep.subr.bf16.mxu0 0
      %531 = vmatpush2.bf16.msra.mxu0 0
      %532 = vmatprep.subr.bf16.mxu0 0
      %533 = vmatpush2.bf16.msra.mxu0 0
      %534 = vmatprep.subr.bf16.mxu0 0
      %535 = vmatpush2.bf16.msra.mxu0 0
      %536 = vmatprep.mubr.bf16.mxu0 0
      %537 = vmatmul.mubr.bf16.gmra.mxu0 %v481
      %v538 = vpop.f32.mrf.mxu0
      %v539 = vadd.f32 0.0, %v538
      %v540 = vpop.f32.mrf.mxu0
      %v541 = vpop.f32.mrf.mxu0
      %v542 = vadd.f32 0.0, %v541
      %v543 = vpop.f32.mrf.mxu0
      %544 = vmatprep.mubr.bf16.mxu0 0
      %545 = vmatmul.mubr.bf16.gmra.mxu0 %v484
      %v546 = vpop.f32.mrf.mxu0
      %v547 = vadd.f32 0.0, %v546
      %v548 = vpop.f32.mrf.mxu0
      %v549 = vpop.f32.mrf.mxu0
      %v550 = vadd.f32 0.0, %v549
      %v551 = vpop.f32.mrf.mxu0
      %552 = vmatprep.mubr.bf16.mxu0 0
      %553 = vmatmul.mubr.bf16.gmra.mxu0 %v487
      %v554 = vpop.f32.mrf.mxu0
      %v555 = vadd.f32 0.0, %v554
      %v556 = vpop.f32.mrf.mxu0
      %v557 = vpop.f32.mrf.mxu0
      %v558 = vadd.f32 0.0, %v557
      %v559 = vpop.f32.mrf.mxu0
      %560 = vmatprep.mubr.bf16.mxu0 0
      %561 = vmatmul.mubr.bf16.gmra.mxu0 %v490
      %v562 = vpop.f32.mrf.mxu0
      %v563 = vadd.f32 0.0, %v562
      %v564 = vpop.f32.mrf.mxu0
      %v565 = vpop.f32.mrf.mxu0
      %v566 = vadd.f32 0.0, %v565
      %v567 = vpop.f32.mrf.mxu0
      %568 = vmatprep.mubr.bf16.mxu0 0
      %569 = vmatmul.mubr.bf16.gmra.mxu0 %v493
      %v570 = vpop.f32.mrf.mxu0
      %v571 = vadd.f32 0.0, %v570
      %v572 = vpop.f32.mrf.mxu0
      %v573 = vpop.f32.mrf.mxu0
      %v574 = vadd.f32 0.0, %v573
      %v575 = vpop.f32.mrf.mxu0
      %576 = vmatprep.mubr.bf16.mxu0 0
      %577 = vmatmul.mubr.bf16.gmra.mxu0 %v496
      %v578 = vpop.f32.mrf.mxu0
      %v579 = vadd.f32 0.0, %v578
      %v580 = vpop.f32.mrf.mxu0
      %v581 = vpop.f32.mrf.mxu0
      %v582 = vadd.f32 0.0, %v581
      %v583 = vpop.f32.mrf.mxu0
      %584 = vmatprep.mubr.bf16.mxu0 0
      %585 = vmatmul.mubr.bf16.gmra.mxu0 %v499
      %v586 = vpop.f32.mrf.mxu0
      %v587 = vadd.f32 0.0, %v586
      %v588 = vpop.f32.mrf.mxu0
      %v589 = vpop.f32.mrf.mxu0
      %v590 = vpop.f32.mrf.mxu0
      %591 = vmatprep.mubr.bf16.mxu0 0
      %592 = vmatmul.mubr.bf16.gmra.mxu0 %v502
      %v593 = vpop.f32.mrf.mxu0
      %v594 = vpop.f32.mrf.mxu0
      %v595 = vpop.f32.mrf.mxu0
      %v596 = vpop.f32.mrf.mxu0
      %597 = vdwg.mxu0
      %v598 = vadd.f32 %v394, %v539
      %v599 = vadd.f32 %v395, %v542
      %v600 = vadd.f32 %v396, %v547
      %v601 = vadd.f32 %v397, %v550
      %v602 = vadd.f32 %v398, %v555
      %v603 = vadd.f32 %v399, %v558
      %v604 = vadd.f32 %v400, %v563
      %v605 = vadd.f32 %v401, %v566
      %v606 = vadd.f32 %v402, %v571
      %v607 = vadd.f32 %v403, %v574
      %v608 = vadd.f32 %v404, %v579
      %v609 = vadd.f32 %v405, %v582
      %v610 = vadd.f32 %v406, %v587
      %s611 = scalar_lea.vmem %s335, 32
      %v612 = vld [vmem:[%s611] sm:$0xf]
      %v613 = vld [vmem:[%s611 + $0x4] sm:$0xf]
      %v614 = vld [vmem:[%s611 + $0x8] sm:$0xf]
      %v615 = vld [vmem:[%s611 + $0xc] sm:$0xf]
      %v616 = vld [vmem:[%s611 + $0x10] sm:$0xf]
      %v617 = vld [vmem:[%s611 + $0x14] sm:$0xf]
      %v618 = vld [vmem:[%s611 + $0x18] sm:$0xf]
      %v619 = vld [vmem:[%s611 + $0x1c] sm:$0xf]
      %v628 = vunpack.c.l.b16 %v612
      %v629 = vunpack.c.l.b16 %v613
      %v630 = vunpack.c.l.b16 %v614
      %v631 = vunpack.c.l.b16 %v615
      %v632 = vunpack.c.l.b16 %v616
      %v633 = vunpack.c.l.b16 %v617
      %v634 = vunpack.c.l.b16 %v618
      %v635 = vunpack.c.l.b16 %v619
      %v636 = vpack.c.b16 %v629, %v628
      %v637 = vpack.c.b16 %v631, %v630
      %v638 = vpack.c.b16 %v633, %v632
      %v639 = vpack.c.b16 %v635, %v634
      %644 = vmatprep.subr.bf16.mxu0 0
      %645 = vmatpush1.bf16.msra.mxu0 0
      %646 = vmatprep.subr.bf16.mxu0 0
      %647 = vmatpush1.bf16.msra.mxu0 0
      %648 = vmatprep.subr.bf16.mxu0 0
      %649 = vmatpush1.bf16.msra.mxu0 0
      %650 = vmatprep.subr.bf16.mxu0 0
      %651 = vmatpush1.bf16.msra.mxu0 0
      %652 = vmatprep.subr.bf16.mxu0 0
      %653 = vmatpush1.bf16.msra.mxu0 %v639
      %654 = vmatprep.subr.bf16.mxu0 0
      %655 = vmatpush1.bf16.msra.mxu0 %v638
      %656 = vmatprep.subr.bf16.mxu0 0
      %657 = vmatpush1.bf16.msra.mxu0 %v637
      %658 = vmatprep.subr.bf16.mxu0 0
      %659 = vmatpush1.bf16.msra.mxu0 %v636
      %660 = vmatprep.subr.bf16.mxu0 0
      %661 = vmatpush2.bf16.msra.mxu0 0
      %662 = vmatprep.subr.bf16.mxu0 0
      %663 = vmatpush2.bf16.msra.mxu0 0
      %664 = vmatprep.subr.bf16.mxu0 0
      %665 = vmatpush2.bf16.msra.mxu0 0
      %666 = vmatprep.subr.bf16.mxu0 0
      %667 = vmatpush2.bf16.msra.mxu0 0
      %668 = vmatprep.subr.bf16.mxu0 0
      %669 = vmatpush2.bf16.msra.mxu0 0
      %670 = vmatprep.subr.bf16.mxu0 0
      %671 = vmatpush2.bf16.msra.mxu0 0
      %672 = vmatprep.subr.bf16.mxu0 0
      %673 = vmatpush2.bf16.msra.mxu0 0
      %674 = vmatprep.subr.bf16.mxu0 0
      %675 = vmatpush2.bf16.msra.mxu0 0
      %676 = vmatprep.mubr.bf16.mxu0 0
      %677 = vmatmul.mubr.bf16.gmra.mxu0 %v481
      %v678 = vpop.f32.mrf.mxu0
      %v679 = vadd.f32 0.0, %v678
      %v680 = vpop.f32.mrf.mxu0
      %v681 = vpop.f32.mrf.mxu0
      %v682 = vadd.f32 0.0, %v681
      %v683 = vpop.f32.mrf.mxu0
      %684 = vmatprep.mubr.bf16.mxu0 0
      %685 = vmatmul.mubr.bf16.gmra.mxu0 %v484
      %v686 = vpop.f32.mrf.mxu0
      %v687 = vadd.f32 0.0, %v686
      %v688 = vpop.f32.mrf.mxu0
      %v689 = vpop.f32.mrf.mxu0
      %v690 = vadd.f32 0.0, %v689
      %v691 = vpop.f32.mrf.mxu0
      %692 = vmatprep.mubr.bf16.mxu0 0
      %693 = vmatmul.mubr.bf16.gmra.mxu0 %v487
      %v694 = vpop.f32.mrf.mxu0
      %v695 = vadd.f32 0.0, %v694
      %v696 = vpop.f32.mrf.mxu0
      %v697 = vpop.f32.mrf.mxu0
      %v698 = vadd.f32 0.0, %v697
      %v699 = vpop.f32.mrf.mxu0
      %700 = vmatprep.mubr.bf16.mxu0 0
      %701 = vmatmul.mubr.bf16.gmra.mxu0 %v490
      %v702 = vpop.f32.mrf.mxu0
      %v703 = vadd.f32 0.0, %v702
      %v704 = vpop.f32.mrf.mxu0
      %v705 = vpop.f32.mrf.mxu0
      %v706 = vadd.f32 0.0, %v705
      %v707 = vpop.f32.mrf.mxu0
      %708 = vmatprep.mubr.bf16.mxu0 0
      %709 = vmatmul.mubr.bf16.gmra.mxu0 %v493
      %v710 = vpop.f32.mrf.mxu0
      %v711 = vadd.f32 0.0, %v710
      %v712 = vpop.f32.mrf.mxu0
      %v713 = vpop.f32.mrf.mxu0
      %v714 = vadd.f32 0.0, %v713
      %v715 = vpop.f32.mrf.mxu0
      %716 = vmatprep.mubr.bf16.mxu0 0
      %717 = vmatmul.mubr.bf16.gmra.mxu0 %v496
      %v718 = vpop.f32.mrf.mxu0
      %v719 = vadd.f32 0.0, %v718
      %v720 = vpop.f32.mrf.mxu0
      %v721 = vpop.f32.mrf.mxu0
      %v722 = vadd.f32 0.0, %v721
      %v723 = vpop.f32.mrf.mxu0
      %724 = vmatprep.mubr.bf16.mxu0 0
      %725 = vmatmul.mubr.bf16.gmra.mxu0 %v499
      %v726 = vpop.f32.mrf.mxu0
      %v727 = vadd.f32 0.0, %v726
      %v728 = vpop.f32.mrf.mxu0
      %v729 = vpop.f32.mrf.mxu0
      %v730 = vadd.f32 0.0, %v729
      %v731 = vpop.f32.mrf.mxu0
      %732 = vmatprep.mubr.bf16.mxu0 0
      %733 = vmatmul.mubr.bf16.gmra.mxu0 %v502
      %v734 = vpop.f32.mrf.mxu0
      %v735 = vpop.f32.mrf.mxu0
      %v736 = vpop.f32.mrf.mxu0
      %v737 = vpop.f32.mrf.mxu0
      %738 = vdwg.mxu0
      %vm753 = vcmask 1046528
      %v754 = vrot.slane %v679, 1
      %v755 = vrot.slane %v682, 1
      %v756 = vsel %vm753, %v754, %v755
      %v757 = vrot.slane %v687, 1
      %v758 = vsel %vm753, %v755, %v757
      %v759 = vrot.slane %v690, 1
      %v760 = vsel %vm753, %v757, %v759
      %v761 = vrot.slane %v695, 1
      %v762 = vsel %vm753, %v759, %v761
      %v763 = vrot.slane %v698, 1
      %v764 = vsel %vm753, %v761, %v763
      %v765 = vrot.slane %v703, 1
      %v766 = vsel %vm753, %v763, %v765
      %v767 = vrot.slane %v706, 1
      %v768 = vsel %vm753, %v765, %v767
      %v769 = vrot.slane %v711, 1
      %v770 = vsel %vm753, %v767, %v769
      %v771 = vrot.slane %v714, 1
      %v772 = vsel %vm753, %v769, %v771
      %v773 = vrot.slane %v719, 1
      %v774 = vsel %vm753, %v771, %v773
      %v775 = vrot.slane %v722, 1
      %v776 = vsel %vm753, %v773, %v775
      %v777 = vrot.slane %v727, 1
      %v778 = vsel %vm753, %v775, %v777
      %v779 = vrot.slane %v730, 1
      %v780 = vsel %vm753, %v777, %v779
      %v794 = vadd.f32 %v598, %v756
      %v795 = vadd.f32 %v599, %v758
      %v796 = vadd.f32 %v600, %v760
      %v797 = vadd.f32 %v601, %v762
      %v798 = vadd.f32 %v602, %v764
      %v799 = vadd.f32 %v603, %v766
      %v800 = vadd.f32 %v604, %v768
      %v801 = vadd.f32 %v605, %v770
      %v802 = vadd.f32 %v606, %v772
      %v803 = vadd.f32 %v607, %v774
      %v804 = vadd.f32 %v608, %v776
      %v805 = vadd.f32 %v609, %v778
      %v806 = vadd.f32 %v610, %v780
      %s807 = scalar_lea.vmem %s335, 64
      %v808 = vld [vmem:[%s807] sm:$0xf]
      %v809 = vld [vmem:[%s807 + $0x4] sm:$0xf]
      %v810 = vld [vmem:[%s807 + $0x8] sm:$0xf]
      %v811 = vld [vmem:[%s807 + $0xc] sm:$0xf]
      %v812 = vld [vmem:[%s807 + $0x10] sm:$0xf]
      %v813 = vld [vmem:[%s807 + $0x14] sm:$0xf]
      %v814 = vld [vmem:[%s807 + $0x18] sm:$0xf]
      %v815 = vld [vmem:[%s807 + $0x1c] sm:$0xf]
      %v824 = vunpack.c.l.b16 %v808
      %v825 = vunpack.c.l.b16 %v809
      %v826 = vunpack.c.l.b16 %v810
      %v827 = vunpack.c.l.b16 %v811
      %v828 = vunpack.c.l.b16 %v812
      %v829 = vunpack.c.l.b16 %v813
      %v830 = vunpack.c.l.b16 %v814
      %v831 = vunpack.c.l.b16 %v815
      %v832 = vpack.c.b16 %v825, %v824
      %v833 = vpack.c.b16 %v827, %v826
      %v834 = vpack.c.b16 %v829, %v828
      %v835 = vpack.c.b16 %v831, %v830
      %840 = vmatprep.subr.bf16.mxu0 0
      %841 = vmatpush1.bf16.msra.mxu0 0
      %842 = vmatprep.subr.bf16.mxu0 0
      %843 = vmatpush1.bf16.msra.mxu0 0
      %844 = vmatprep.subr.bf16.mxu0 0
      %845 = vmatpush1.bf16.msra.mxu0 0
      %846 = vmatprep.subr.bf16.mxu0 0
      %847 = vmatpush1.bf16.msra.mxu0 0
      %848 = vmatprep.subr.bf16.mxu0 0
      %849 = vmatpush1.bf16.msra.mxu0 %v835
      %850 = vmatprep.subr.bf16.mxu0 0
      %851 = vmatpush1.bf16.msra.mxu0 %v834
      %852 = vmatprep.subr.bf16.mxu0 0
      %853 = vmatpush1.bf16.msra.mxu0 %v833
      %854 = vmatprep.subr.bf16.mxu0 0
      %855 = vmatpush1.bf16.msra.mxu0 %v832
      %856 = vmatprep.subr.bf16.mxu0 0
      %857 = vmatpush2.bf16.msra.mxu0 0
      %858 = vmatprep.subr.bf16.mxu0 0
      %859 = vmatpush2.bf16.msra.mxu0 0
      %860 = vmatprep.subr.bf16.mxu0 0
      %861 = vmatpush2.bf16.msra.mxu0 0
      %862 = vmatprep.subr.bf16.mxu0 0
      %863 = vmatpush2.bf16.msra.mxu0 0
      %864 = vmatprep.subr.bf16.mxu0 0
      %865 = vmatpush2.bf16.msra.mxu0 0
      %866 = vmatprep.subr.bf16.mxu0 0
      %867 = vmatpush2.bf16.msra.mxu0 0
      %868 = vmatprep.subr.bf16.mxu0 0
      %869 = vmatpush2.bf16.msra.mxu0 0
      %870 = vmatprep.subr.bf16.mxu0 0
      %871 = vmatpush2.bf16.msra.mxu0 0
      %872 = vmatprep.mubr.bf16.mxu0 0
      %873 = vmatmul.mubr.bf16.gmra.mxu0 %v481
      %v874 = vpop.f32.mrf.mxu0
      %v875 = vadd.f32 0.0, %v874
      %v876 = vpop.f32.mrf.mxu0
      %v877 = vpop.f32.mrf.mxu0
      %v878 = vadd.f32 0.0, %v877
      %v879 = vpop.f32.mrf.mxu0
      %880 = vmatprep.mubr.bf16.mxu0 0
      %881 = vmatmul.mubr.bf16.gmra.mxu0 %v484
      %v882 = vpop.f32.mrf.mxu0
      %v883 = vadd.f32 0.0, %v882
      %v884 = vpop.f32.mrf.mxu0
      %v885 = vpop.f32.mrf.mxu0
      %v886 = vadd.f32 0.0, %v885
      %v887 = vpop.f32.mrf.mxu0
      %888 = vmatprep.mubr.bf16.mxu0 0
      %889 = vmatmul.mubr.bf16.gmra.mxu0 %v487
      %v890 = vpop.f32.mrf.mxu0
      %v891 = vadd.f32 0.0, %v890
      %v892 = vpop.f32.mrf.mxu0
      %v893 = vpop.f32.mrf.mxu0
      %v894 = vadd.f32 0.0, %v893
      %v895 = vpop.f32.mrf.mxu0
      %896 = vmatprep.mubr.bf16.mxu0 0
      %897 = vmatmul.mubr.bf16.gmra.mxu0 %v490
      %v898 = vpop.f32.mrf.mxu0
      %v899 = vadd.f32 0.0, %v898
      %v900 = vpop.f32.mrf.mxu0
      %v901 = vpop.f32.mrf.mxu0
      %v902 = vadd.f32 0.0, %v901
      %v903 = vpop.f32.mrf.mxu0
      %904 = vmatprep.mubr.bf16.mxu0 0
      %905 = vmatmul.mubr.bf16.gmra.mxu0 %v493
      %v906 = vpop.f32.mrf.mxu0
      %v907 = vadd.f32 0.0, %v906
      %v908 = vpop.f32.mrf.mxu0
      %v909 = vpop.f32.mrf.mxu0
      %v910 = vadd.f32 0.0, %v909
      %v911 = vpop.f32.mrf.mxu0
      %912 = vmatprep.mubr.bf16.mxu0 0
      %913 = vmatmul.mubr.bf16.gmra.mxu0 %v496
      %v914 = vpop.f32.mrf.mxu0
      %v915 = vadd.f32 0.0, %v914
      %v916 = vpop.f32.mrf.mxu0
      %v917 = vpop.f32.mrf.mxu0
      %v918 = vadd.f32 0.0, %v917
      %v919 = vpop.f32.mrf.mxu0
      %920 = vmatprep.mubr.bf16.mxu0 0
      %921 = vmatmul.mubr.bf16.gmra.mxu0 %v499
      %v922 = vpop.f32.mrf.mxu0
      %v923 = vadd.f32 0.0, %v922
      %v924 = vpop.f32.mrf.mxu0
      %v925 = vpop.f32.mrf.mxu0
      %v926 = vadd.f32 0.0, %v925
      %v927 = vpop.f32.mrf.mxu0
      %928 = vmatprep.mubr.bf16.mxu0 0
      %929 = vmatmul.mubr.bf16.gmra.mxu0 %v502
      %v930 = vpop.f32.mrf.mxu0
      %v931 = vpop.f32.mrf.mxu0
      %v932 = vpop.f32.mrf.mxu0
      %v933 = vpop.f32.mrf.mxu0
      %934 = vdwg.mxu0
      %vm949 = vcmask 1045504
      %v950 = vrot.slane %v875, 2
      %v951 = vrot.slane %v878, 2
      %v952 = vsel %vm949, %v950, %v951
      %v953 = vrot.slane %v883, 2
      %v954 = vsel %vm949, %v951, %v953
      %v955 = vrot.slane %v886, 2
      %v956 = vsel %vm949, %v953, %v955
      %v957 = vrot.slane %v891, 2
      %v958 = vsel %vm949, %v955, %v957
      %v959 = vrot.slane %v894, 2
      %v960 = vsel %vm949, %v957, %v959
      %v961 = vrot.slane %v899, 2
      %v962 = vsel %vm949, %v959, %v961
      %v963 = vrot.slane %v902, 2
      %v964 = vsel %vm949, %v961, %v963
      %v965 = vrot.slane %v907, 2
      %v966 = vsel %vm949, %v963, %v965
      %v967 = vrot.slane %v910, 2
      %v968 = vsel %vm949, %v965, %v967
      %v969 = vrot.slane %v915, 2
      %v970 = vsel %vm949, %v967, %v969
      %v971 = vrot.slane %v918, 2
      %v972 = vsel %vm949, %v969, %v971
      %v973 = vrot.slane %v923, 2
      %v974 = vsel %vm949, %v971, %v973
      %v975 = vrot.slane %v926, 2
      %v976 = vsel %vm949, %v973, %v975
      %v990 = vadd.f32 %v794, %v952
      %v991 = vadd.f32 %v795, %v954
      %v992 = vadd.f32 %v796, %v956
      %v993 = vadd.f32 %v797, %v958
      %v994 = vadd.f32 %v798, %v960
      %v995 = vadd.f32 %v799, %v962
      %v996 = vadd.f32 %v800, %v964
      %v997 = vadd.f32 %v801, %v966
      %v998 = vadd.f32 %v802, %v968
      %v999 = vadd.f32 %v803, %v970
      %v1000 = vadd.f32 %v804, %v972
      %v1001 = vadd.f32 %v805, %v974
      %v1002 = vadd.f32 %v806, %v976
      %s1003 = scalar_lea.vmem %s335, 96
      %v1004 = vld [vmem:[%s1003] sm:$0xf]
      %v1005 = vld [vmem:[%s1003 + $0x4] sm:$0xf]
      %v1006 = vld [vmem:[%s1003 + $0x8] sm:$0xf]
      %v1007 = vld [vmem:[%s1003 + $0xc] sm:$0xf]
      %v1008 = vld [vmem:[%s1003 + $0x10] sm:$0xf]
      %v1009 = vld [vmem:[%s1003 + $0x14] sm:$0xf]
      %v1010 = vld [vmem:[%s1003 + $0x18] sm:$0xf]
      %v1011 = vld [vmem:[%s1003 + $0x1c] sm:$0xf]
      %v1020 = vunpack.c.l.b16 %v1004
      %v1021 = vunpack.c.l.b16 %v1005
      %v1022 = vunpack.c.l.b16 %v1006
      %v1023 = vunpack.c.l.b16 %v1007
      %v1024 = vunpack.c.l.b16 %v1008
      %v1025 = vunpack.c.l.b16 %v1009
      %v1026 = vunpack.c.l.b16 %v1010
      %v1027 = vunpack.c.l.b16 %v1011
      %v1028 = vpack.c.b16 %v1021, %v1020
      %v1029 = vpack.c.b16 %v1023, %v1022
      %v1030 = vpack.c.b16 %v1025, %v1024
      %v1031 = vpack.c.b16 %v1027, %v1026
      %1036 = vmatprep.subr.bf16.mxu0 0
      %1037 = vmatpush1.bf16.msra.mxu0 0
      %1038 = vmatprep.subr.bf16.mxu0 0
      %1039 = vmatpush1.bf16.msra.mxu0 0
      %1040 = vmatprep.subr.bf16.mxu0 0
      %1041 = vmatpush1.bf16.msra.mxu0 0
      %1042 = vmatprep.subr.bf16.mxu0 0
      %1043 = vmatpush1.bf16.msra.mxu0 0
      %1044 = vmatprep.subr.bf16.mxu0 0
      %1045 = vmatpush1.bf16.msra.mxu0 %v1031
      %1046 = vmatprep.subr.bf16.mxu0 0
      %1047 = vmatpush1.bf16.msra.mxu0 %v1030
      %1048 = vmatprep.subr.bf16.mxu0 0
      %1049 = vmatpush1.bf16.msra.mxu0 %v1029
      %1050 = vmatprep.subr.bf16.mxu0 0
      %1051 = vmatpush1.bf16.msra.mxu0 %v1028
      %1052 = vmatprep.subr.bf16.mxu0 0
      %1053 = vmatpush2.bf16.msra.mxu0 0
      %1054 = vmatprep.subr.bf16.mxu0 0
      %1055 = vmatpush2.bf16.msra.mxu0 0
      %1056 = vmatprep.subr.bf16.mxu0 0
      %1057 = vmatpush2.bf16.msra.mxu0 0
      %1058 = vmatprep.subr.bf16.mxu0 0
      %1059 = vmatpush2.bf16.msra.mxu0 0
      %1060 = vmatprep.subr.bf16.mxu0 0
      %1061 = vmatpush2.bf16.msra.mxu0 0
      %1062 = vmatprep.subr.bf16.mxu0 0
      %1063 = vmatpush2.bf16.msra.mxu0 0
      %1064 = vmatprep.subr.bf16.mxu0 0
      %1065 = vmatpush2.bf16.msra.mxu0 0
      %1066 = vmatprep.subr.bf16.mxu0 0
      %1067 = vmatpush2.bf16.msra.mxu0 0
      %1068 = vmatprep.mubr.bf16.mxu0 0
      %1069 = vmatmul.mubr.bf16.gmra.mxu0 %v481
      %v1070 = vpop.f32.mrf.mxu0
      %v1071 = vpop.f32.mrf.mxu0
      %v1072 = vpop.f32.mrf.mxu0
      %v1073 = vadd.f32 0.0, %v1072
      %v1074 = vpop.f32.mrf.mxu0
      %1075 = vmatprep.mubr.bf16.mxu0 0
      %1076 = vmatmul.mubr.bf16.gmra.mxu0 %v484
      %v1077 = vpop.f32.mrf.mxu0
      %v1078 = vadd.f32 0.0, %v1077
      %v1079 = vpop.f32.mrf.mxu0
      %v1080 = vpop.f32.mrf.mxu0
      %v1081 = vadd.f32 0.0, %v1080
      %v1082 = vpop.f32.mrf.mxu0
      %1083 = vmatprep.mubr.bf16.mxu0 0
      %1084 = vmatmul.mubr.bf16.gmra.mxu0 %v487
      %v1085 = vpop.f32.mrf.mxu0
      %v1086 = vadd.f32 0.0, %v1085
      %v1087 = vpop.f32.mrf.mxu0
      %v1088 = vpop.f32.mrf.mxu0
      %v1089 = vadd.f32 0.0, %v1088
      %v1090 = vpop.f32.mrf.mxu0
      %1091 = vmatprep.mubr.bf16.mxu0 0
      %1092 = vmatmul.mubr.bf16.gmra.mxu0 %v490
      %v1093 = vpop.f32.mrf.mxu0
      %v1094 = vadd.f32 0.0, %v1093
      %v1095 = vpop.f32.mrf.mxu0
      %v1096 = vpop.f32.mrf.mxu0
      %v1097 = vadd.f32 0.0, %v1096
      %v1098 = vpop.f32.mrf.mxu0
      %1099 = vmatprep.mubr.bf16.mxu0 0
      %1100 = vmatmul.mubr.bf16.gmra.mxu0 %v493
      %v1101 = vpop.f32.mrf.mxu0
      %v1102 = vadd.f32 0.0, %v1101
      %v1103 = vpop.f32.mrf.mxu0
      %v1104 = vpop.f32.mrf.mxu0
      %v1105 = vadd.f32 0.0, %v1104
      %v1106 = vpop.f32.mrf.mxu0
      %1107 = vmatprep.mubr.bf16.mxu0 0
      %1108 = vmatmul.mubr.bf16.gmra.mxu0 %v496
      %v1109 = vpop.f32.mrf.mxu0
      %v1110 = vadd.f32 0.0, %v1109
      %v1111 = vpop.f32.mrf.mxu0
      %v1112 = vpop.f32.mrf.mxu0
      %v1113 = vadd.f32 0.0, %v1112
      %v1114 = vpop.f32.mrf.mxu0
      %1115 = vmatprep.mubr.bf16.mxu0 0
      %1116 = vmatmul.mubr.bf16.gmra.mxu0 %v499
      %v1117 = vpop.f32.mrf.mxu0
      %v1118 = vadd.f32 0.0, %v1117
      %v1119 = vpop.f32.mrf.mxu0
      %v1120 = vpop.f32.mrf.mxu0
      %v1121 = vadd.f32 0.0, %v1120
      %v1122 = vpop.f32.mrf.mxu0
      %1123 = vmatprep.mubr.bf16.mxu0 0
      %1124 = vmatmul.mubr.bf16.gmra.mxu0 %v502
      %v1125 = vpop.f32.mrf.mxu0
      %v1126 = vadd.f32 0.0, %v1125
      %v1127 = vpop.f32.mrf.mxu0
      %v1128 = vpop.f32.mrf.mxu0
      %v1129 = vpop.f32.mrf.mxu0
      %1130 = vdwg.mxu0
      %v1145 = vrot.slane %v1073, 2
      %v1146 = vrot.slane %v1078, 2
      %v1147 = vsel %vm949, %v1145, %v1146
      %v1148 = vrot.slane %v1081, 2
      %v1149 = vsel %vm949, %v1146, %v1148
      %v1150 = vrot.slane %v1086, 2
      %v1151 = vsel %vm949, %v1148, %v1150
      %v1152 = vrot.slane %v1089, 2
      %v1153 = vsel %vm949, %v1150, %v1152
      %v1154 = vrot.slane %v1094, 2
      %v1155 = vsel %vm949, %v1152, %v1154
      %v1156 = vrot.slane %v1097, 2
      %v1157 = vsel %vm949, %v1154, %v1156
      %v1158 = vrot.slane %v1102, 2
      %v1159 = vsel %vm949, %v1156, %v1158
      %v1160 = vrot.slane %v1105, 2
      %v1161 = vsel %vm949, %v1158, %v1160
      %v1162 = vrot.slane %v1110, 2
      %v1163 = vsel %vm949, %v1160, %v1162
      %v1164 = vrot.slane %v1113, 2
      %v1165 = vsel %vm949, %v1162, %v1164
      %v1166 = vrot.slane %v1118, 2
      %v1167 = vsel %vm949, %v1164, %v1166
      %v1168 = vrot.slane %v1121, 2
      %v1169 = vsel %vm949, %v1166, %v1168
      %v1170 = vrot.slane %v1126, 2
      %v1171 = vsel %vm949, %v1168, %v1170
      %v1185 = vadd.f32 %v990, %v1147
      %v1186 = vadd.f32 %v991, %v1149
      %v1187 = vadd.f32 %v992, %v1151
      %v1188 = vadd.f32 %v993, %v1153
      %v1189 = vadd.f32 %v994, %v1155
      %v1190 = vadd.f32 %v995, %v1157
      %v1191 = vadd.f32 %v996, %v1159
      %v1192 = vadd.f32 %v997, %v1161
      %v1193 = vadd.f32 %v998, %v1163
      %v1194 = vadd.f32 %v999, %v1165
      %v1195 = vadd.f32 %v1000, %v1167
      %v1196 = vadd.f32 %v1001, %v1169
      %v1197 = vadd.f32 %v1002, %v1171
      %s1198 = scalar_lea.vmem %s335, 128
      %v1199 = vld [vmem:[%s1198] sm:$0xf]
      %v1200 = vld [vmem:[%s1198 + $0x4] sm:$0xf]
      %v1201 = vld [vmem:[%s1198 + $0x8] sm:$0xf]
      %v1202 = vld [vmem:[%s1198 + $0xc] sm:$0xf]
      %v1203 = vld [vmem:[%s1198 + $0x10] sm:$0xf]
      %v1204 = vld [vmem:[%s1198 + $0x14] sm:$0xf]
      %v1205 = vld [vmem:[%s1198 + $0x18] sm:$0xf]
      %v1206 = vld [vmem:[%s1198 + $0x1c] sm:$0xf]
      %v1215 = vunpack.c.l.b16 %v1199
      %v1216 = vunpack.c.l.b16 %v1200
      %v1217 = vunpack.c.l.b16 %v1201
      %v1218 = vunpack.c.l.b16 %v1202
      %v1219 = vunpack.c.l.b16 %v1203
      %v1220 = vunpack.c.l.b16 %v1204
      %v1221 = vunpack.c.l.b16 %v1205
      %v1222 = vunpack.c.l.b16 %v1206
      %v1223 = vpack.c.b16 %v1216, %v1215
      %v1224 = vpack.c.b16 %v1218, %v1217
      %v1225 = vpack.c.b16 %v1220, %v1219
      %v1226 = vpack.c.b16 %v1222, %v1221
      %1231 = vmatprep.subr.bf16.mxu0 0
      %1232 = vmatpush1.bf16.msra.mxu0 0
      %1233 = vmatprep.subr.bf16.mxu0 0
      %1234 = vmatpush1.bf16.msra.mxu0 0
      %1235 = vmatprep.subr.bf16.mxu0 0
      %1236 = vmatpush1.bf16.msra.mxu0 0
      %1237 = vmatprep.subr.bf16.mxu0 0
      %1238 = vmatpush1.bf16.msra.mxu0 0
      %1239 = vmatprep.subr.bf16.mxu0 0
      %1240 = vmatpush1.bf16.msra.mxu0 %v1226
      %1241 = vmatprep.subr.bf16.mxu0 0
      %1242 = vmatpush1.bf16.msra.mxu0 %v1225
      %1243 = vmatprep.subr.bf16.mxu0 0
      %1244 = vmatpush1.bf16.msra.mxu0 %v1224
      %1245 = vmatprep.subr.bf16.mxu0 0
      %1246 = vmatpush1.bf16.msra.mxu0 %v1223
      %1247 = vmatprep.subr.bf16.mxu0 0
      %1248 = vmatpush2.bf16.msra.mxu0 0
      %1249 = vmatprep.subr.bf16.mxu0 0
      %1250 = vmatpush2.bf16.msra.mxu0 0
      %1251 = vmatprep.subr.bf16.mxu0 0
      %1252 = vmatpush2.bf16.msra.mxu0 0
      %1253 = vmatprep.subr.bf16.mxu0 0
      %1254 = vmatpush2.bf16.msra.mxu0 0
      %1255 = vmatprep.subr.bf16.mxu0 0
      %1256 = vmatpush2.bf16.msra.mxu0 0
      %1257 = vmatprep.subr.bf16.mxu0 0
      %1258 = vmatpush2.bf16.msra.mxu0 0
      %1259 = vmatprep.subr.bf16.mxu0 0
      %1260 = vmatpush2.bf16.msra.mxu0 0
      %1261 = vmatprep.subr.bf16.mxu0 0
      %1262 = vmatpush2.bf16.msra.mxu0 0
      %1263 = vmatprep.mubr.bf16.mxu0 0
      %1264 = vmatmul.mubr.bf16.gmra.mxu0 %v481
      %v1265 = vpop.f32.mrf.mxu0
      %v1266 = vpop.f32.mrf.mxu0
      %v1267 = vpop.f32.mrf.mxu0
      %v1268 = vadd.f32 0.0, %v1267
      %v1269 = vpop.f32.mrf.mxu0
      %1270 = vmatprep.mubr.bf16.mxu0 0
      %1271 = vmatmul.mubr.bf16.gmra.mxu0 %v484
      %v1272 = vpop.f32.mrf.mxu0
      %v1273 = vadd.f32 0.0, %v1272
      %v1274 = vpop.f32.mrf.mxu0
      %v1275 = vpop.f32.mrf.mxu0
      %v1276 = vadd.f32 0.0, %v1275
      %v1277 = vpop.f32.mrf.mxu0
      %1278 = vmatprep.mubr.bf16.mxu0 0
      %1279 = vmatmul.mubr.bf16.gmra.mxu0 %v487
      %v1280 = vpop.f32.mrf.mxu0
      %v1281 = vadd.f32 0.0, %v1280
      %v1282 = vpop.f32.mrf.mxu0
      %v1283 = vpop.f32.mrf.mxu0
      %v1284 = vadd.f32 0.0, %v1283
      %v1285 = vpop.f32.mrf.mxu0
      %1286 = vmatprep.mubr.bf16.mxu0 0
      %1287 = vmatmul.mubr.bf16.gmra.mxu0 %v490
      %v1288 = vpop.f32.mrf.mxu0
      %v1289 = vadd.f32 0.0, %v1288
      %v1290 = vpop.f32.mrf.mxu0
      %v1291 = vpop.f32.mrf.mxu0
      %v1292 = vadd.f32 0.0, %v1291
      %v1293 = vpop.f32.mrf.mxu0
      %1294 = vmatprep.mubr.bf16.mxu0 0
      %1295 = vmatmul.mubr.bf16.gmra.mxu0 %v493
      %v1296 = vpop.f32.mrf.mxu0
      %v1297 = vadd.f32 0.0, %v1296
      %v1298 = vpop.f32.mrf.mxu0
      %v1299 = vpop.f32.mrf.mxu0
      %v1300 = vadd.f32 0.0, %v1299
      %v1301 = vpop.f32.mrf.mxu0
      %1302 = vmatprep.mubr.bf16.mxu0 0
      %1303 = vmatmul.mubr.bf16.gmra.mxu0 %v496
      %v1304 = vpop.f32.mrf.mxu0
      %v1305 = vadd.f32 0.0, %v1304
      %v1306 = vpop.f32.mrf.mxu0
      %v1307 = vpop.f32.mrf.mxu0
      %v1308 = vadd.f32 0.0, %v1307
      %v1309 = vpop.f32.mrf.mxu0
      %1310 = vmatprep.mubr.bf16.mxu0 0
      %1311 = vmatmul.mubr.bf16.gmra.mxu0 %v499
      %v1312 = vpop.f32.mrf.mxu0
      %v1313 = vadd.f32 0.0, %v1312
      %v1314 = vpop.f32.mrf.mxu0
      %v1315 = vpop.f32.mrf.mxu0
      %v1316 = vadd.f32 0.0, %v1315
      %v1317 = vpop.f32.mrf.mxu0
      %1318 = vmatprep.mubr.bf16.mxu0 0
      %1319 = vmatmul.mubr.bf16.gmra.mxu0 %v502
      %v1320 = vpop.f32.mrf.mxu0
      %v1321 = vadd.f32 0.0, %v1320
      %v1322 = vpop.f32.mrf.mxu0
      %v1323 = vpop.f32.mrf.mxu0
      %v1324 = vpop.f32.mrf.mxu0
      %1325 = vdwg.mxu0
      %vm1340 = vcmask 1044480
      %v1341 = vrot.slane %v1268, 3
      %v1342 = vrot.slane %v1273, 3
      %v1343 = vsel %vm1340, %v1341, %v1342
      %v1344 = vrot.slane %v1276, 3
      %v1345 = vsel %vm1340, %v1342, %v1344
      %v1346 = vrot.slane %v1281, 3
      %v1347 = vsel %vm1340, %v1344, %v1346
      %v1348 = vrot.slane %v1284, 3
      %v1349 = vsel %vm1340, %v1346, %v1348
      %v1350 = vrot.slane %v1289, 3
      %v1351 = vsel %vm1340, %v1348, %v1350
      %v1352 = vrot.slane %v1292, 3
      %v1353 = vsel %vm1340, %v1350, %v1352
      %v1354 = vrot.slane %v1297, 3
      %v1355 = vsel %vm1340, %v1352, %v1354
      %v1356 = vrot.slane %v1300, 3
      %v1357 = vsel %vm1340, %v1354, %v1356
      %v1358 = vrot.slane %v1305, 3
      %v1359 = vsel %vm1340, %v1356, %v1358
      %v1360 = vrot.slane %v1308, 3
      %v1361 = vsel %vm1340, %v1358, %v1360
      %v1362 = vrot.slane %v1313, 3
      %v1363 = vsel %vm1340, %v1360, %v1362
      %v1364 = vrot.slane %v1316, 3
      %v1365 = vsel %vm1340, %v1362, %v1364
      %v1366 = vrot.slane %v1321, 3
      %v1367 = vsel %vm1340, %v1364, %v1366
      %v1381 = vadd.f32 %v1185, %v1343
      %v1382 = vadd.f32 %v1186, %v1345
      %v1383 = vadd.f32 %v1187, %v1347
      %v1384 = vadd.f32 %v1188, %v1349
      %v1385 = vadd.f32 %v1189, %v1351
      %v1386 = vadd.f32 %v1190, %v1353
      %v1387 = vadd.f32 %v1191, %v1355
      %v1388 = vadd.f32 %v1192, %v1357
      %v1389 = vadd.f32 %v1193, %v1359
      %v1390 = vadd.f32 %v1194, %v1361
      %v1391 = vadd.f32 %v1195, %v1363
      %v1392 = vadd.f32 %v1196, %v1365
      %v1393 = vadd.f32 %v1197, %v1367
      %s1394 = scalar_lea.vmem %s335, 160
      %v1395 = vld [vmem:[%s1394] sm:$0xf]
      %v1396 = vld [vmem:[%s1394 + $0x4] sm:$0xf]
      %v1397 = vld [vmem:[%s1394 + $0x8] sm:$0xf]
      %v1398 = vld [vmem:[%s1394 + $0xc] sm:$0xf]
      %v1399 = vld [vmem:[%s1394 + $0x10] sm:$0xf]
      %v1400 = vld [vmem:[%s1394 + $0x14] sm:$0xf]
      %v1401 = vld [vmem:[%s1394 + $0x18] sm:$0xf]
      %v1402 = vld [vmem:[%s1394 + $0x1c] sm:$0xf]
      %v1411 = vunpack.c.l.b16 %v1395
      %v1412 = vunpack.c.l.b16 %v1396
      %v1413 = vunpack.c.l.b16 %v1397
      %v1414 = vunpack.c.l.b16 %v1398
      %v1415 = vunpack.c.l.b16 %v1399
      %v1416 = vunpack.c.l.b16 %v1400
      %v1417 = vunpack.c.l.b16 %v1401
      %v1418 = vunpack.c.l.b16 %v1402
      %v1419 = vpack.c.b16 %v1412, %v1411
      %v1420 = vpack.c.b16 %v1414, %v1413
      %v1421 = vpack.c.b16 %v1416, %v1415
      %v1422 = vpack.c.b16 %v1418, %v1417
      %1427 = vmatprep.subr.bf16.mxu0 0
      %1428 = vmatpush1.bf16.msra.mxu0 0
      %1429 = vmatprep.subr.bf16.mxu0 0
      %1430 = vmatpush1.bf16.msra.mxu0 0
      %1431 = vmatprep.subr.bf16.mxu0 0
      %1432 = vmatpush1.bf16.msra.mxu0 0
      %1433 = vmatprep.subr.bf16.mxu0 0
      %1434 = vmatpush1.bf16.msra.mxu0 0
      %1435 = vmatprep.subr.bf16.mxu0 0
      %1436 = vmatpush1.bf16.msra.mxu0 %v1422
      %1437 = vmatprep.subr.bf16.mxu0 0
      %1438 = vmatpush1.bf16.msra.mxu0 %v1421
      %1439 = vmatprep.subr.bf16.mxu0 0
      %1440 = vmatpush1.bf16.msra.mxu0 %v1420
      %1441 = vmatprep.subr.bf16.mxu0 0
      %1442 = vmatpush1.bf16.msra.mxu0 %v1419
      %1443 = vmatprep.subr.bf16.mxu0 0
      %1444 = vmatpush2.bf16.msra.mxu0 0
      %1445 = vmatprep.subr.bf16.mxu0 0
      %1446 = vmatpush2.bf16.msra.mxu0 0
      %1447 = vmatprep.subr.bf16.mxu0 0
      %1448 = vmatpush2.bf16.msra.mxu0 0
      %1449 = vmatprep.subr.bf16.mxu0 0
      %1450 = vmatpush2.bf16.msra.mxu0 0
      %1451 = vmatprep.subr.bf16.mxu0 0
      %1452 = vmatpush2.bf16.msra.mxu0 0
      %1453 = vmatprep.subr.bf16.mxu0 0
      %1454 = vmatpush2.bf16.msra.mxu0 0
      %1455 = vmatprep.subr.bf16.mxu0 0
      %1456 = vmatpush2.bf16.msra.mxu0 0
      %1457 = vmatprep.subr.bf16.mxu0 0
      %1458 = vmatpush2.bf16.msra.mxu0 0
      %1459 = vmatprep.mubr.bf16.mxu0 0
      %1460 = vmatmul.mubr.bf16.gmra.mxu0 %v481
      %v1461 = vpop.f32.mrf.mxu0
      %v1462 = vpop.f32.mrf.mxu0
      %v1463 = vpop.f32.mrf.mxu0
      %v1464 = vadd.f32 0.0, %v1463
      %v1465 = vpop.f32.mrf.mxu0
      %1466 = vmatprep.mubr.bf16.mxu0 0
      %1467 = vmatmul.mubr.bf16.gmra.mxu0 %v484
      %v1468 = vpop.f32.mrf.mxu0
      %v1469 = vadd.f32 0.0, %v1468
      %v1470 = vpop.f32.mrf.mxu0
      %v1471 = vpop.f32.mrf.mxu0
      %v1472 = vadd.f32 0.0, %v1471
      %v1473 = vpop.f32.mrf.mxu0
      %1474 = vmatprep.mubr.bf16.mxu0 0
      %1475 = vmatmul.mubr.bf16.gmra.mxu0 %v487
      %v1476 = vpop.f32.mrf.mxu0
      %v1477 = vadd.f32 0.0, %v1476
      %v1478 = vpop.f32.mrf.mxu0
      %v1479 = vpop.f32.mrf.mxu0
      %v1480 = vadd.f32 0.0, %v1479
      %v1481 = vpop.f32.mrf.mxu0
      %1482 = vmatprep.mubr.bf16.mxu0 0
      %1483 = vmatmul.mubr.bf16.gmra.mxu0 %v490
      %v1484 = vpop.f32.mrf.mxu0
      %v1485 = vadd.f32 0.0, %v1484
      %v1486 = vpop.f32.mrf.mxu0
      %v1487 = vpop.f32.mrf.mxu0
      %v1488 = vadd.f32 0.0, %v1487
      %v1489 = vpop.f32.mrf.mxu0
      %1490 = vmatprep.mubr.bf16.mxu0 0
      %1491 = vmatmul.mubr.bf16.gmra.mxu0 %v493
      %v1492 = vpop.f32.mrf.mxu0
      %v1493 = vadd.f32 0.0, %v1492
      %v1494 = vpop.f32.mrf.mxu0
      %v1495 = vpop.f32.mrf.mxu0
      %v1496 = vadd.f32 0.0, %v1495
      %v1497 = vpop.f32.mrf.mxu0
      %1498 = vmatprep.mubr.bf16.mxu0 0
      %1499 = vmatmul.mubr.bf16.gmra.mxu0 %v496
      %v1500 = vpop.f32.mrf.mxu0
      %v1501 = vadd.f32 0.0, %v1500
      %v1502 = vpop.f32.mrf.mxu0
      %v1503 = vpop.f32.mrf.mxu0
      %v1504 = vadd.f32 0.0, %v1503
      %v1505 = vpop.f32.mrf.mxu0
      %1506 = vmatprep.mubr.bf16.mxu0 0
      %1507 = vmatmul.mubr.bf16.gmra.mxu0 %v499
      %v1508 = vpop.f32.mrf.mxu0
      %v1509 = vadd.f32 0.0, %v1508
      %v1510 = vpop.f32.mrf.mxu0
      %v1511 = vpop.f32.mrf.mxu0
      %v1512 = vadd.f32 0.0, %v1511
      %v1513 = vpop.f32.mrf.mxu0
      %1514 = vmatprep.mubr.bf16.mxu0 0
      %1515 = vmatmul.mubr.bf16.gmra.mxu0 %v502
      %v1516 = vpop.f32.mrf.mxu0
      %v1517 = vadd.f32 0.0, %v1516
      %v1518 = vpop.f32.mrf.mxu0
      %v1519 = vpop.f32.mrf.mxu0
      %v1520 = vpop.f32.mrf.mxu0
      %1521 = vdwg.mxu0
      %vm1536 = vcmask 1043456
      %v1537 = vrot.slane %v1464, 4
      %v1538 = vrot.slane %v1469, 4
      %v1539 = vsel %vm1536, %v1537, %v1538
      %v1540 = vrot.slane %v1472, 4
      %v1541 = vsel %vm1536, %v1538, %v1540
      %v1542 = vrot.slane %v1477, 4
      %v1543 = vsel %vm1536, %v1540, %v1542
      %v1544 = vrot.slane %v1480, 4
      %v1545 = vsel %vm1536, %v1542, %v1544
      %v1546 = vrot.slane %v1485, 4
      %v1547 = vsel %vm1536, %v1544, %v1546
      %v1548 = vrot.slane %v1488, 4
      %v1549 = vsel %vm1536, %v1546, %v1548
      %v1550 = vrot.slane %v1493, 4
      %v1551 = vsel %vm1536, %v1548, %v1550
      %v1552 = vrot.slane %v1496, 4
      %v1553 = vsel %vm1536, %v1550, %v1552
      %v1554 = vrot.slane %v1501, 4
      %v1555 = vsel %vm1536, %v1552, %v1554
      %v1556 = vrot.slane %v1504, 4
      %v1557 = vsel %vm1536, %v1554, %v1556
      %v1558 = vrot.slane %v1509, 4
      %v1559 = vsel %vm1536, %v1556, %v1558
      %v1560 = vrot.slane %v1512, 4
      %v1561 = vsel %vm1536, %v1558, %v1560
      %v1562 = vrot.slane %v1517, 4
      %v1563 = vsel %vm1536, %v1560, %v1562
      %v1577 = vadd.f32 %v1381, %v1539
      %v1578 = vadd.f32 %v1382, %v1541
      %v1579 = vadd.f32 %v1383, %v1543
      %v1580 = vadd.f32 %v1384, %v1545
      %v1581 = vadd.f32 %v1385, %v1547
      %v1582 = vadd.f32 %v1386, %v1549
      %v1583 = vadd.f32 %v1387, %v1551
      %v1584 = vadd.f32 %v1388, %v1553
      %v1585 = vadd.f32 %v1389, %v1555
      %v1586 = vadd.f32 %v1390, %v1557
      %v1587 = vadd.f32 %v1391, %v1559
      %v1588 = vadd.f32 %v1392, %v1561
      %v1589 = vadd.f32 %v1393, %v1563
      %s1590 = scalar_lea.vmem %s335, 192
      %v1591 = vld [vmem:[%s1590] sm:$0xf]
      %v1592 = vld [vmem:[%s1590 + $0x4] sm:$0xf]
      %v1593 = vld [vmem:[%s1590 + $0x8] sm:$0xf]
      %v1594 = vld [vmem:[%s1590 + $0xc] sm:$0xf]
      %v1595 = vld [vmem:[%s1590 + $0x10] sm:$0xf]
      %v1596 = vld [vmem:[%s1590 + $0x14] sm:$0xf]
      %v1597 = vld [vmem:[%s1590 + $0x18] sm:$0xf]
      %v1598 = vld [vmem:[%s1590 + $0x1c] sm:$0xf]
      %v1607 = vunpack.c.l.b16 %v1591
      %v1608 = vunpack.c.l.b16 %v1592
      %v1609 = vunpack.c.l.b16 %v1593
      %v1610 = vunpack.c.l.b16 %v1594
      %v1611 = vunpack.c.l.b16 %v1595
      %v1612 = vunpack.c.l.b16 %v1596
      %v1613 = vunpack.c.l.b16 %v1597
      %v1614 = vunpack.c.l.b16 %v1598
      %v1615 = vpack.c.b16 %v1608, %v1607
      %v1616 = vpack.c.b16 %v1610, %v1609
      %v1617 = vpack.c.b16 %v1612, %v1611
      %v1618 = vpack.c.b16 %v1614, %v1613
      %1623 = vmatprep.subr.bf16.mxu0 0
      %1624 = vmatpush1.bf16.msra.mxu0 0
      %1625 = vmatprep.subr.bf16.mxu0 0
      %1626 = vmatpush1.bf16.msra.mxu0 0
      %1627 = vmatprep.subr.bf16.mxu0 0
      %1628 = vmatpush1.bf16.msra.mxu0 0
      %1629 = vmatprep.subr.bf16.mxu0 0
      %1630 = vmatpush1.bf16.msra.mxu0 0
      %1631 = vmatprep.subr.bf16.mxu0 0
      %1632 = vmatpush1.bf16.msra.mxu0 %v1618
      %1633 = vmatprep.subr.bf16.mxu0 0
      %1634 = vmatpush1.bf16.msra.mxu0 %v1617
      %1635 = vmatprep.subr.bf16.mxu0 0
      %1636 = vmatpush1.bf16.msra.mxu0 %v1616
      %1637 = vmatprep.subr.bf16.mxu0 0
      %1638 = vmatpush1.bf16.msra.mxu0 %v1615
      %1639 = vmatprep.subr.bf16.mxu0 0
      %1640 = vmatpush2.bf16.msra.mxu0 0
      %1641 = vmatprep.subr.bf16.mxu0 0
      %1642 = vmatpush2.bf16.msra.mxu0 0
      %1643 = vmatprep.subr.bf16.mxu0 0
      %1644 = vmatpush2.bf16.msra.mxu0 0
      %1645 = vmatprep.subr.bf16.mxu0 0
      %1646 = vmatpush2.bf16.msra.mxu0 0
      %1647 = vmatprep.subr.bf16.mxu0 0
      %1648 = vmatpush2.bf16.msra.mxu0 0
      %1649 = vmatprep.subr.bf16.mxu0 0
      %1650 = vmatpush2.bf16.msra.mxu0 0
      %1651 = vmatprep.subr.bf16.mxu0 0
      %1652 = vmatpush2.bf16.msra.mxu0 0
      %1653 = vmatprep.subr.bf16.mxu0 0
      %1654 = vmatpush2.bf16.msra.mxu0 0
      %1655 = vmatprep.mubr.bf16.mxu0 0
      %1656 = vmatmul.mubr.bf16.gmra.mxu0 %v481
      %v1657 = vpop.f32.mrf.mxu0
      %v1658 = vpop.f32.mrf.mxu0
      %v1659 = vpop.f32.mrf.mxu0
      %v1660 = vpop.f32.mrf.mxu0
      %1661 = vmatprep.mubr.bf16.mxu0 0
      %1662 = vmatmul.mubr.bf16.gmra.mxu0 %v484
      %v1663 = vpop.f32.mrf.mxu0
      %v1664 = vadd.f32 0.0, %v1663
      %v1665 = vpop.f32.mrf.mxu0
      %v1666 = vpop.f32.mrf.mxu0
      %v1667 = vadd.f32 0.0, %v1666
      %v1668 = vpop.f32.mrf.mxu0
      %1669 = vmatprep.mubr.bf16.mxu0 0
      %1670 = vmatmul.mubr.bf16.gmra.mxu0 %v487
      %v1671 = vpop.f32.mrf.mxu0
      %v1672 = vadd.f32 0.0, %v1671
      %v1673 = vpop.f32.mrf.mxu0
      %v1674 = vpop.f32.mrf.mxu0
      %v1675 = vadd.f32 0.0, %v1674
      %v1676 = vpop.f32.mrf.mxu0
      %1677 = vmatprep.mubr.bf16.mxu0 0
      %1678 = vmatmul.mubr.bf16.gmra.mxu0 %v490
      %v1679 = vpop.f32.mrf.mxu0
      %v1680 = vadd.f32 0.0, %v1679
      %v1681 = vpop.f32.mrf.mxu0
      %v1682 = vpop.f32.mrf.mxu0
      %v1683 = vadd.f32 0.0, %v1682
      %v1684 = vpop.f32.mrf.mxu0
      %1685 = vmatprep.mubr.bf16.mxu0 0
      %1686 = vmatmul.mubr.bf16.gmra.mxu0 %v493
      %v1687 = vpop.f32.mrf.mxu0
      %v1688 = vadd.f32 0.0, %v1687
      %v1689 = vpop.f32.mrf.mxu0
      %v1690 = vpop.f32.mrf.mxu0
      %v1691 = vadd.f32 0.0, %v1690
      %v1692 = vpop.f32.mrf.mxu0
      %1693 = vmatprep.mubr.bf16.mxu0 0
      %1694 = vmatmul.mubr.bf16.gmra.mxu0 %v496
      %v1695 = vpop.f32.mrf.mxu0
      %v1696 = vadd.f32 0.0, %v1695
      %v1697 = vpop.f32.mrf.mxu0
      %v1698 = vpop.f32.mrf.mxu0
      %v1699 = vadd.f32 0.0, %v1698
      %v1700 = vpop.f32.mrf.mxu0
      %1701 = vmatprep.mubr.bf16.mxu0 0
      %1702 = vmatmul.mubr.bf16.gmra.mxu0 %v499
      %v1703 = vpop.f32.mrf.mxu0
      %v1704 = vadd.f32 0.0, %v1703
      %v1705 = vpop.f32.mrf.mxu0
      %v1706 = vpop.f32.mrf.mxu0
      %v1707 = vadd.f32 0.0, %v1706
      %v1708 = vpop.f32.mrf.mxu0
      %1709 = vmatprep.mubr.bf16.mxu0 0
      %1710 = vmatmul.mubr.bf16.gmra.mxu0 %v502
      %v1711 = vpop.f32.mrf.mxu0
      %v1712 = vadd.f32 0.0, %v1711
      %v1713 = vpop.f32.mrf.mxu0
      %v1714 = vpop.f32.mrf.mxu0
      %v1715 = vadd.f32 0.0, %v1714
      %v1716 = vpop.f32.mrf.mxu0
      %1717 = vdwg.mxu0
      %v1732 = vrot.slane %v1664, 4
      %v1733 = vrot.slane %v1667, 4
      %v1734 = vsel %vm1536, %v1732, %v1733
      %v1735 = vrot.slane %v1672, 4
      %v1736 = vsel %vm1536, %v1733, %v1735
      %v1737 = vrot.slane %v1675, 4
      %v1738 = vsel %vm1536, %v1735, %v1737
      %v1739 = vrot.slane %v1680, 4
      %v1740 = vsel %vm1536, %v1737, %v1739
      %v1741 = vrot.slane %v1683, 4
      %v1742 = vsel %vm1536, %v1739, %v1741
      %v1743 = vrot.slane %v1688, 4
      %v1744 = vsel %vm1536, %v1741, %v1743
      %v1745 = vrot.slane %v1691, 4
      %v1746 = vsel %vm1536, %v1743, %v1745
      %v1747 = vrot.slane %v1696, 4
      %v1748 = vsel %vm1536, %v1745, %v1747
      %v1749 = vrot.slane %v1699, 4
      %v1750 = vsel %vm1536, %v1747, %v1749
      %v1751 = vrot.slane %v1704, 4
      %v1752 = vsel %vm1536, %v1749, %v1751
      %v1753 = vrot.slane %v1707, 4
      %v1754 = vsel %vm1536, %v1751, %v1753
      %v1755 = vrot.slane %v1712, 4
      %v1756 = vsel %vm1536, %v1753, %v1755
      %v1757 = vrot.slane %v1715, 4
      %v1758 = vsel %vm1536, %v1755, %v1757
      %v1772 = vadd.f32 %v1577, %v1734
      %v1773 = vadd.f32 %v1578, %v1736
      %v1774 = vadd.f32 %v1579, %v1738
      %v1775 = vadd.f32 %v1580, %v1740
      %v1776 = vadd.f32 %v1581, %v1742
      %v1777 = vadd.f32 %v1582, %v1744
      %v1778 = vadd.f32 %v1583, %v1746
      %v1779 = vadd.f32 %v1584, %v1748
      %v1780 = vadd.f32 %v1585, %v1750
      %v1781 = vadd.f32 %v1586, %v1752
      %v1782 = vadd.f32 %v1587, %v1754
      %v1783 = vadd.f32 %v1588, %v1756
      %v1784 = vadd.f32 %v1589, %v1758
      %s1785 = scalar_lea.vmem %s335, 224
      %v1786 = vld [vmem:[%s1785] sm:$0xf]
      %v1787 = vld [vmem:[%s1785 + $0x4] sm:$0xf]
      %v1788 = vld [vmem:[%s1785 + $0x8] sm:$0xf]
      %v1789 = vld [vmem:[%s1785 + $0xc] sm:$0xf]
      %v1790 = vld [vmem:[%s1785 + $0x10] sm:$0xf]
      %v1791 = vld [vmem:[%s1785 + $0x14] sm:$0xf]
      %v1792 = vld [vmem:[%s1785 + $0x18] sm:$0xf]
      %v1793 = vld [vmem:[%s1785 + $0x1c] sm:$0xf]
      %v1802 = vunpack.c.l.b16 %v1786
      %v1803 = vunpack.c.l.b16 %v1787
      %v1804 = vunpack.c.l.b16 %v1788
      %v1805 = vunpack.c.l.b16 %v1789
      %v1806 = vunpack.c.l.b16 %v1790
      %v1807 = vunpack.c.l.b16 %v1791
      %v1808 = vunpack.c.l.b16 %v1792
      %v1809 = vunpack.c.l.b16 %v1793
      %v1810 = vpack.c.b16 %v1803, %v1802
      %v1811 = vpack.c.b16 %v1805, %v1804
      %v1812 = vpack.c.b16 %v1807, %v1806
      %v1813 = vpack.c.b16 %v1809, %v1808
      %1818 = vmatprep.subr.bf16.mxu0 0
      %1819 = vmatpush1.bf16.msra.mxu0 0
      %1820 = vmatprep.subr.bf16.mxu0 0
      %1821 = vmatpush1.bf16.msra.mxu0 0
      %1822 = vmatprep.subr.bf16.mxu0 0
      %1823 = vmatpush1.bf16.msra.mxu0 0
      %1824 = vmatprep.subr.bf16.mxu0 0
      %1825 = vmatpush1.bf16.msra.mxu0 0
      %1826 = vmatprep.subr.bf16.mxu0 0
      %1827 = vmatpush1.bf16.msra.mxu0 %v1813
      %1828 = vmatprep.subr.bf16.mxu0 0
      %1829 = vmatpush1.bf16.msra.mxu0 %v1812
      %1830 = vmatprep.subr.bf16.mxu0 0
      %1831 = vmatpush1.bf16.msra.mxu0 %v1811
      %1832 = vmatprep.subr.bf16.mxu0 0
      %1833 = vmatpush1.bf16.msra.mxu0 %v1810
      %1834 = vmatprep.subr.bf16.mxu0 0
      %1835 = vmatpush2.bf16.msra.mxu0 0
      %1836 = vmatprep.subr.bf16.mxu0 0
      %1837 = vmatpush2.bf16.msra.mxu0 0
      %1838 = vmatprep.subr.bf16.mxu0 0
      %1839 = vmatpush2.bf16.msra.mxu0 0
      %1840 = vmatprep.subr.bf16.mxu0 0
      %1841 = vmatpush2.bf16.msra.mxu0 0
      %1842 = vmatprep.subr.bf16.mxu0 0
      %1843 = vmatpush2.bf16.msra.mxu0 0
      %1844 = vmatprep.subr.bf16.mxu0 0
      %1845 = vmatpush2.bf16.msra.mxu0 0
      %1846 = vmatprep.subr.bf16.mxu0 0
      %1847 = vmatpush2.bf16.msra.mxu0 0
      %1848 = vmatprep.subr.bf16.mxu0 0
      %1849 = vmatpush2.bf16.msra.mxu0 0
      %1850 = vmatprep.mubr.bf16.mxu0 0
      %1851 = vmatmul.mubr.bf16.gmra.mxu0 %v481
      %v1852 = vpop.f32.mrf.mxu0
      %v1853 = vpop.f32.mrf.mxu0
      %v1854 = vpop.f32.mrf.mxu0
      %v1855 = vpop.f32.mrf.mxu0
      %1856 = vmatprep.mubr.bf16.mxu0 0
      %1857 = vmatmul.mubr.bf16.gmra.mxu0 %v484
      %v1858 = vpop.f32.mrf.mxu0
      %v1859 = vadd.f32 0.0, %v1858
      %v1860 = vpop.f32.mrf.mxu0
      %v1861 = vpop.f32.mrf.mxu0
      %v1862 = vadd.f32 0.0, %v1861
      %v1863 = vpop.f32.mrf.mxu0
      %1864 = vmatprep.mubr.bf16.mxu0 0
      %1865 = vmatmul.mubr.bf16.gmra.mxu0 %v487
      %v1866 = vpop.f32.mrf.mxu0
      %v1867 = vadd.f32 0.0, %v1866
      %v1868 = vpop.f32.mrf.mxu0
      %v1869 = vpop.f32.mrf.mxu0
      %v1870 = vadd.f32 0.0, %v1869
      %v1871 = vpop.f32.mrf.mxu0
      %1872 = vmatprep.mubr.bf16.mxu0 0
      %1873 = vmatmul.mubr.bf16.gmra.mxu0 %v490
      %v1874 = vpop.f32.mrf.mxu0
      %v1875 = vadd.f32 0.0, %v1874
      %v1876 = vpop.f32.mrf.mxu0
      %v1877 = vpop.f32.mrf.mxu0
      %v1878 = vadd.f32 0.0, %v1877
      %v1879 = vpop.f32.mrf.mxu0
      %1880 = vmatprep.mubr.bf16.mxu0 0
      %1881 = vmatmul.mubr.bf16.gmra.mxu0 %v493
      %v1882 = vpop.f32.mrf.mxu0
      %v1883 = vadd.f32 0.0, %v1882
      %v1884 = vpop.f32.mrf.mxu0
      %v1885 = vpop.f32.mrf.mxu0
      %v1886 = vadd.f32 0.0, %v1885
      %v1887 = vpop.f32.mrf.mxu0
      %1888 = vmatprep.mubr.bf16.mxu0 0
      %1889 = vmatmul.mubr.bf16.gmra.mxu0 %v496
      %v1890 = vpop.f32.mrf.mxu0
      %v1891 = vadd.f32 0.0, %v1890
      %v1892 = vpop.f32.mrf.mxu0
      %v1893 = vpop.f32.mrf.mxu0
      %v1894 = vadd.f32 0.0, %v1893
      %v1895 = vpop.f32.mrf.mxu0
      %1896 = vmatprep.mubr.bf16.mxu0 0
      %1897 = vmatmul.mubr.bf16.gmra.mxu0 %v499
      %v1898 = vpop.f32.mrf.mxu0
      %v1899 = vadd.f32 0.0, %v1898
      %v1900 = vpop.f32.mrf.mxu0
      %v1901 = vpop.f32.mrf.mxu0
      %v1902 = vadd.f32 0.0, %v1901
      %v1903 = vpop.f32.mrf.mxu0
      %1904 = vmatprep.mubr.bf16.mxu0 0
      %1905 = vmatmul.mubr.bf16.gmra.mxu0 %v502
      %v1906 = vpop.f32.mrf.mxu0
      %v1907 = vadd.f32 0.0, %v1906
      %v1908 = vpop.f32.mrf.mxu0
      %v1909 = vpop.f32.mrf.mxu0
      %v1910 = vadd.f32 0.0, %v1909
      %v1911 = vpop.f32.mrf.mxu0
      %1912 = vdwg.mxu0
      %vm1927 = vcmask 1042432
      %v1928 = vrot.slane %v1859, 5
      %v1929 = vrot.slane %v1862, 5
      %v1930 = vsel %vm1927, %v1928, %v1929
      %v1931 = vrot.slane %v1867, 5
      %v1932 = vsel %vm1927, %v1929, %v1931
      %v1933 = vrot.slane %v1870, 5
      %v1934 = vsel %vm1927, %v1931, %v1933
      %v1935 = vrot.slane %v1875, 5
      %v1936 = vsel %vm1927, %v1933, %v1935
      %v1937 = vrot.slane %v1878, 5
      %v1938 = vsel %vm1927, %v1935, %v1937
      %v1939 = vrot.slane %v1883, 5
      %v1940 = vsel %vm1927, %v1937, %v1939
      %v1941 = vrot.slane %v1886, 5
      %v1942 = vsel %vm1927, %v1939, %v1941
      %v1943 = vrot.slane %v1891, 5
      %v1944 = vsel %vm1927, %v1941, %v1943
      %v1945 = vrot.slane %v1894, 5
      %v1946 = vsel %vm1927, %v1943, %v1945
      %v1947 = vrot.slane %v1899, 5
      %v1948 = vsel %vm1927, %v1945, %v1947
      %v1949 = vrot.slane %v1902, 5
      %v1950 = vsel %vm1927, %v1947, %v1949
      %v1951 = vrot.slane %v1907, 5
      %v1952 = vsel %vm1927, %v1949, %v1951
      %v1953 = vrot.slane %v1910, 5
      %v1954 = vsel %vm1927, %v1951, %v1953
      %v1968 = vadd.f32 %v1772, %v1930
      %v1969 = vadd.f32 %v1773, %v1932
      %v1970 = vadd.f32 %v1774, %v1934
      %v1971 = vadd.f32 %v1775, %v1936
      %v1972 = vadd.f32 %v1776, %v1938
      %v1973 = vadd.f32 %v1777, %v1940
      %v1974 = vadd.f32 %v1778, %v1942
      %v1975 = vadd.f32 %v1779, %v1944
      %v1976 = vadd.f32 %v1780, %v1946
      %v1977 = vadd.f32 %v1781, %v1948
      %v1978 = vadd.f32 %v1782, %v1950
      %v1979 = vadd.f32 %v1783, %v1952
      %v1980 = vadd.f32 %v1784, %v1954
      %s1981 = scalar_lea.vmem %s335, 256
      %v1982 = vld [vmem:[%s1981] sm:$0xf]
      %v1983 = vld [vmem:[%s1981 + $0x4] sm:$0xf]
      %v1984 = vld [vmem:[%s1981 + $0x8] sm:$0xf]
      %v1985 = vld [vmem:[%s1981 + $0xc] sm:$0xf]
      %v1986 = vld [vmem:[%s1981 + $0x10] sm:$0xf]
      %v1987 = vld [vmem:[%s1981 + $0x14] sm:$0xf]
      %v1988 = vld [vmem:[%s1981 + $0x18] sm:$0xf]
      %v1989 = vld [vmem:[%s1981 + $0x1c] sm:$0xf]
      %v1998 = vunpack.c.l.b16 %v1982
      %v1999 = vunpack.c.l.b16 %v1983
      %v2000 = vunpack.c.l.b16 %v1984
      %v2001 = vunpack.c.l.b16 %v1985
      %v2002 = vunpack.c.l.b16 %v1986
      %v2003 = vunpack.c.l.b16 %v1987
      %v2004 = vunpack.c.l.b16 %v1988
      %v2005 = vunpack.c.l.b16 %v1989
      %v2006 = vpack.c.b16 %v1999, %v1998
      %v2007 = vpack.c.b16 %v2001, %v2000
      %v2008 = vpack.c.b16 %v2003, %v2002
      %v2009 = vpack.c.b16 %v2005, %v2004
      %2014 = vmatprep.subr.bf16.mxu0 0
      %2015 = vmatpush1.bf16.msra.mxu0 0
      %2016 = vmatprep.subr.bf16.mxu0 0
      %2017 = vmatpush1.bf16.msra.mxu0 0
      %2018 = vmatprep.subr.bf16.mxu0 0
      %2019 = vmatpush1.bf16.msra.mxu0 0
      %2020 = vmatprep.subr.bf16.mxu0 0
      %2021 = vmatpush1.bf16.msra.mxu0 0
      %2022 = vmatprep.subr.bf16.mxu0 0
      %2023 = vmatpush1.bf16.msra.mxu0 %v2009
      %2024 = vmatprep.subr.bf16.mxu0 0
      %2025 = vmatpush1.bf16.msra.mxu0 %v2008
      %2026 = vmatprep.subr.bf16.mxu0 0
      %2027 = vmatpush1.bf16.msra.mxu0 %v2007
      %2028 = vmatprep.subr.bf16.mxu0 0
      %2029 = vmatpush1.bf16.msra.mxu0 %v2006
      %2030 = vmatprep.subr.bf16.mxu0 0
      %2031 = vmatpush2.bf16.msra.mxu0 0
      %2032 = vmatprep.subr.bf16.mxu0 0
      %2033 = vmatpush2.bf16.msra.mxu0 0
      %2034 = vmatprep.subr.bf16.mxu0 0
      %2035 = vmatpush2.bf16.msra.mxu0 0
      %2036 = vmatprep.subr.bf16.mxu0 0
      %2037 = vmatpush2.bf16.msra.mxu0 0
      %2038 = vmatprep.subr.bf16.mxu0 0
      %2039 = vmatpush2.bf16.msra.mxu0 0
      %2040 = vmatprep.subr.bf16.mxu0 0
      %2041 = vmatpush2.bf16.msra.mxu0 0
      %2042 = vmatprep.subr.bf16.mxu0 0
      %2043 = vmatpush2.bf16.msra.mxu0 0
      %2044 = vmatprep.subr.bf16.mxu0 0
      %2045 = vmatpush2.bf16.msra.mxu0 0
      %2046 = vmatprep.mubr.bf16.mxu0 0
      %2047 = vmatmul.mubr.bf16.gmra.mxu0 %v481
      %v2048 = vpop.f32.mrf.mxu0
      %v2049 = vpop.f32.mrf.mxu0
      %v2050 = vpop.f32.mrf.mxu0
      %v2051 = vpop.f32.mrf.mxu0
      %2052 = vmatprep.mubr.bf16.mxu0 0
      %2053 = vmatmul.mubr.bf16.gmra.mxu0 %v484
      %v2054 = vpop.f32.mrf.mxu0
      %v2055 = vadd.f32 0.0, %v2054
      %v2056 = vpop.f32.mrf.mxu0
      %v2057 = vpop.f32.mrf.mxu0
      %v2058 = vadd.f32 0.0, %v2057
      %v2059 = vpop.f32.mrf.mxu0
      %2060 = vmatprep.mubr.bf16.mxu0 0
      %2061 = vmatmul.mubr.bf16.gmra.mxu0 %v487
      %v2062 = vpop.f32.mrf.mxu0
      %v2063 = vadd.f32 0.0, %v2062
      %v2064 = vpop.f32.mrf.mxu0
      %v2065 = vpop.f32.mrf.mxu0
      %v2066 = vadd.f32 0.0, %v2065
      %v2067 = vpop.f32.mrf.mxu0
      %2068 = vmatprep.mubr.bf16.mxu0 0
      %2069 = vmatmul.mubr.bf16.gmra.mxu0 %v490
      %v2070 = vpop.f32.mrf.mxu0
      %v2071 = vadd.f32 0.0, %v2070
      %v2072 = vpop.f32.mrf.mxu0
      %v2073 = vpop.f32.mrf.mxu0
      %v2074 = vadd.f32 0.0, %v2073
      %v2075 = vpop.f32.mrf.mxu0
      %2076 = vmatprep.mubr.bf16.mxu0 0
      %2077 = vmatmul.mubr.bf16.gmra.mxu0 %v493
      %v2078 = vpop.f32.mrf.mxu0
      %v2079 = vadd.f32 0.0, %v2078
      %v2080 = vpop.f32.mrf.mxu0
      %v2081 = vpop.f32.mrf.mxu0
      %v2082 = vadd.f32 0.0, %v2081
      %v2083 = vpop.f32.mrf.mxu0
      %2084 = vmatprep.mubr.bf16.mxu0 0
      %2085 = vmatmul.mubr.bf16.gmra.mxu0 %v496
      %v2086 = vpop.f32.mrf.mxu0
      %v2087 = vadd.f32 0.0, %v2086
      %v2088 = vpop.f32.mrf.mxu0
      %v2089 = vpop.f32.mrf.mxu0
      %v2090 = vadd.f32 0.0, %v2089
      %v2091 = vpop.f32.mrf.mxu0
      %2092 = vmatprep.mubr.bf16.mxu0 0
      %2093 = vmatmul.mubr.bf16.gmra.mxu0 %v499
      %v2094 = vpop.f32.mrf.mxu0
      %v2095 = vadd.f32 0.0, %v2094
      %v2096 = vpop.f32.mrf.mxu0
      %v2097 = vpop.f32.mrf.mxu0
      %v2098 = vadd.f32 0.0, %v2097
      %v2099 = vpop.f32.mrf.mxu0
      %2100 = vmatprep.mubr.bf16.mxu0 0
      %2101 = vmatmul.mubr.bf16.gmra.mxu0 %v502
      %v2102 = vpop.f32.mrf.mxu0
      %v2103 = vadd.f32 0.0, %v2102
      %v2104 = vpop.f32.mrf.mxu0
      %v2105 = vpop.f32.mrf.mxu0
      %v2106 = vadd.f32 0.0, %v2105
      %v2107 = vpop.f32.mrf.mxu0
      %2108 = vdwg.mxu0
      %vm2123 = vcmask 1041408
      %v2124 = vrot.slane %v2055, 6
      %v2125 = vrot.slane %v2058, 6
      %v2126 = vsel %vm2123, %v2124, %v2125
      %v2127 = vrot.slane %v2063, 6
      %v2128 = vsel %vm2123, %v2125, %v2127
      %v2129 = vrot.slane %v2066, 6
      %v2130 = vsel %vm2123, %v2127, %v2129
      %v2131 = vrot.slane %v2071, 6
      %v2132 = vsel %vm2123, %v2129, %v2131
      %v2133 = vrot.slane %v2074, 6
      %v2134 = vsel %vm2123, %v2131, %v2133
      %v2135 = vrot.slane %v2079, 6
      %v2136 = vsel %vm2123, %v2133, %v2135
      %v2137 = vrot.slane %v2082, 6
      %v2138 = vsel %vm2123, %v2135, %v2137
      %v2139 = vrot.slane %v2087, 6
      %v2140 = vsel %vm2123, %v2137, %v2139
      %v2141 = vrot.slane %v2090, 6
      %v2142 = vsel %vm2123, %v2139, %v2141
      %v2143 = vrot.slane %v2095, 6
      %v2144 = vsel %vm2123, %v2141, %v2143
      %v2145 = vrot.slane %v2098, 6
      %v2146 = vsel %vm2123, %v2143, %v2145
      %v2147 = vrot.slane %v2103, 6
      %v2148 = vsel %vm2123, %v2145, %v2147
      %v2149 = vrot.slane %v2106, 6
      %v2150 = vsel %vm2123, %v2147, %v2149
      %v2164 = vadd.f32 %v1968, %v2126
      %v2165 = vadd.f32 %v1969, %v2128
      %v2166 = vadd.f32 %v1970, %v2130
      %v2167 = vadd.f32 %v1971, %v2132
      %v2168 = vadd.f32 %v1972, %v2134
      %v2169 = vadd.f32 %v1973, %v2136
      %v2170 = vadd.f32 %v1974, %v2138
      %v2171 = vadd.f32 %v1975, %v2140
      %v2172 = vadd.f32 %v1976, %v2142
      %v2173 = vadd.f32 %v1977, %v2144
      %v2174 = vadd.f32 %v1978, %v2146
      %v2175 = vadd.f32 %v1979, %v2148
      %v2176 = vadd.f32 %v1980, %v2150
      %2177 = vst.msk [vmem:[#allocation2] sm:$0xff] %vm479, %v2164
      %2178 = vst.msk [vmem:[#allocation2 + $0x8] sm:$0xff] %vm479, %v2165
      %2179 = vst.msk [vmem:[#allocation2 + $0x10] sm:$0xff] %vm479, %v2166
      %2180 = vst.msk [vmem:[#allocation2 + $0x18] sm:$0xff] %vm479, %v2167
      %2181 = vst.msk [vmem:[#allocation2 + $0x20] sm:$0xff] %vm479, %v2168
      %2182 = vst.msk [vmem:[#allocation2 + $0x28] sm:$0xff] %vm479, %v2169
      %2183 = vst.msk [vmem:[#allocation2 + $0x30] sm:$0xff] %vm479, %v2170
      %2184 = vst.msk [vmem:[#allocation2 + $0x38] sm:$0xff] %vm479, %v2171
      %2185 = vst.msk [vmem:[#allocation2 + $0x40] sm:$0xff] %vm479, %v2172
      %2186 = vst.msk [vmem:[#allocation2 + $0x48] sm:$0xff] %vm479, %v2173
      %2187 = vst.msk [vmem:[#allocation2 + $0x50] sm:$0xff] %vm479, %v2174
      %2188 = vst.msk [vmem:[#allocation2 + $0x58] sm:$0xff] %vm479, %v2175
      %2189 = vst.msk [vmem:[#allocation2 + $0x60] sm:$0xff] %vm479, %v2176
      %p2190 = scmp.eq.s32.totalorder %s25, 2
      // Predicated region
      $region41: #{up_transition_forward.8} parent=35 // pred_check
        %p2191 = pneg %p2190
      $region42: #{up_transition_forward.8} parent=35 // pred_check_branch
        %2193 = sbr.rel (%p2191) target = $region44
      $region43: #{up_transition_forward.8} parent=35 // pred_region
        %v2194 = vld [vmem:[%s2] sm:$0x1]
        %v2196 = vlaneseq
        %v2197 = vshrl.u32 %v2196, 7
        %v2198 = vsub.s32 0, %v2197
        %v2199 = vrot.slane %v2194, %v2198
        %v2201 = vadd.f32 %v2164, %v2199
        %v2202 = vadd.f32 %v2165, %v2199
        %v2203 = vadd.f32 %v2166, %v2199
        %v2204 = vadd.f32 %v2167, %v2199
        %v2205 = vadd.f32 %v2168, %v2199
        %v2206 = vadd.f32 %v2169, %v2199
        %v2207 = vadd.f32 %v2170, %v2199
        %v2208 = vadd.f32 %v2171, %v2199
        %v2209 = vadd.f32 %v2172, %v2199
        %v2210 = vadd.f32 %v2173, %v2199
        %v2211 = vadd.f32 %v2174, %v2199
        %v2212 = vadd.f32 %v2175, %v2199
        %v2213 = vadd.f32 %v2176, %v2199
        %v2214 = vpack.c.bf16 %v2202, %v2201
        %v2215 = vpack.c.bf16 %v2204, %v2203
        %v2216 = vpack.c.bf16 %v2206, %v2205
        %v2217 = vpack.c.bf16 %v2208, %v2207
        %v2218 = vpack.c.bf16 %v2210, %v2209
        %v2219 = vpack.c.bf16 %v2212, %v2211
        %v2220 = vpack.c.bf16 %v2213, %v2213
        %v2228 = vunpack.c.l.b16 %v2214
        %v2229 = vunpack.c.h.b16 %v2214
        %v2230 = vunpack.c.l.b16 %v2215
        %v2231 = vunpack.c.h.b16 %v2215
        %v2232 = vunpack.c.l.b16 %v2216
        %v2233 = vunpack.c.h.b16 %v2216
        %v2234 = vunpack.c.l.b16 %v2217
        %v2235 = vunpack.c.h.b16 %v2217
        %v2236 = vunpack.c.l.b16 %v2218
        %v2237 = vunpack.c.h.b16 %v2218
        %v2238 = vunpack.c.l.b16 %v2219
        %v2239 = vunpack.c.h.b16 %v2219
        %v2240 = vunpack.c.l.b16 %v2220
        %v2241 = vpack.c.b16 %v2228, %v2228
        %v2242 = vpack.c.b16 %v2229, %v2229
        %v2243 = vpack.c.b16 %v2230, %v2230
        %v2244 = vpack.c.b16 %v2231, %v2231
        %v2245 = vpack.c.b16 %v2232, %v2232
        %v2246 = vpack.c.b16 %v2233, %v2233
        %v2247 = vpack.c.b16 %v2234, %v2234
        %v2248 = vpack.c.b16 %v2235, %v2235
        %v2249 = vpack.c.b16 %v2236, %v2236
        %v2250 = vpack.c.b16 %v2237, %v2237
        %v2251 = vpack.c.b16 %v2238, %v2238
        %v2252 = vpack.c.b16 %v2239, %v2239
        %v2253 = vpack.c.b16 %v2240, %v2240
        %vm2267 = vcmask 519168
        %2268 = vst.msk [vmem:[%s344] sm:$0xf] %vm2267, %v2241
        %2269 = vst.msk [vmem:[%s344 + $0x4] sm:$0xf] %vm2267, %v2242
        %2270 = vst.msk [vmem:[%s344 + $0x8] sm:$0xf] %vm2267, %v2243
        %2271 = vst.msk [vmem:[%s344 + $0xc] sm:$0xf] %vm2267, %v2244
        %2272 = vst.msk [vmem:[%s344 + $0x10] sm:$0xf] %vm2267, %v2245
        %2273 = vst.msk [vmem:[%s344 + $0x14] sm:$0xf] %vm2267, %v2246
        %2274 = vst.msk [vmem:[%s344 + $0x18] sm:$0xf] %vm2267, %v2247
        %2275 = vst.msk [vmem:[%s344 + $0x1c] sm:$0xf] %vm2267, %v2248
        %2276 = vst.msk [vmem:[%s344 + $0x20] sm:$0xf] %vm2267, %v2249
        %2277 = vst.msk [vmem:[%s344 + $0x24] sm:$0xf] %vm2267, %v2250
        %2278 = vst.msk [vmem:[%s344 + $0x28] sm:$0xf] %vm2267, %v2251
        %2279 = vst.msk [vmem:[%s344 + $0x2c] sm:$0xf] %vm2267, %v2252
        %2280 = vst.msk [vmem:[%s344 + $0x30] sm:$0xf] %vm2267, %v2253
        %v2281 = vld [vmem:[%s3] sm:$0xff]
        %v2282 = vld [vmem:[%s3 + $0x8] sm:$0xff]
        %v2283 = vld [vmem:[%s3 + $0x10] sm:$0xff]
        %v2284 = vld [vmem:[%s3 + $0x18] sm:$0xff]
        %v2285 = vld [vmem:[%s3 + $0x20] sm:$0xff]
        %v2286 = vld [vmem:[%s3 + $0x28] sm:$0xff]
        %v2287 = vld [vmem:[%s3 + $0x30] sm:$0xff]
        %v2288 = vld [vmem:[%s3 + $0x38] sm:$0xff]
        %v2289 = vld [vmem:[%s3 + $0x40] sm:$0xff]
        %v2290 = vld [vmem:[%s3 + $0x48] sm:$0xff]
        %v2291 = vld [vmem:[%s3 + $0x50] sm:$0xff]
        %v2292 = vld [vmem:[%s3 + $0x58] sm:$0xff]
        %v2293 = vld [vmem:[%s3 + $0x60] sm:$0xff]
        %2295 = vset.pattern.permute.xlu0 0
        %2296 = vperm.xlu0 %2295, %v2281
        %v2297 = vpop.permute.xlu0 %2296
        %2300 = vset.pattern.permute.xlu0 0
        %2301 = vperm.xlu0 %2300, %v2282
        %v2302 = vpop.permute.xlu0 %2301
        %2305 = vset.pattern.permute.xlu0 0
        %2306 = vperm.xlu0 %2305, %v2283
        %v2307 = vpop.permute.xlu0 %2306
        %2310 = vset.pattern.permute.xlu0 0
        %2311 = vperm.xlu0 %2310, %v2284
        %v2312 = vpop.permute.xlu0 %2311
        %2315 = vset.pattern.permute.xlu0 0
        %2316 = vperm.xlu0 %2315, %v2285
        %v2317 = vpop.permute.xlu0 %2316
        %2320 = vset.pattern.permute.xlu0 0
        %2321 = vperm.xlu0 %2320, %v2286
        %v2322 = vpop.permute.xlu0 %2321
        %2325 = vset.pattern.permute.xlu0 0
        %2326 = vperm.xlu0 %2325, %v2287
        %v2327 = vpop.permute.xlu0 %2326
        %2330 = vset.pattern.permute.xlu0 0
        %2331 = vperm.xlu0 %2330, %v2288
        %v2332 = vpop.permute.xlu0 %2331
        %2335 = vset.pattern.permute.xlu0 0
        %2336 = vperm.xlu0 %2335, %v2289
        %v2337 = vpop.permute.xlu0 %2336
        %2340 = vset.pattern.permute.xlu0 0
        %2341 = vperm.xlu0 %2340, %v2290
        %v2342 = vpop.permute.xlu0 %2341
        %2345 = vset.pattern.permute.xlu0 0
        %2346 = vperm.xlu0 %2345, %v2291
        %v2347 = vpop.permute.xlu0 %2346
        %2350 = vset.pattern.permute.xlu0 0
        %2351 = vperm.xlu0 %2350, %v2292
        %v2352 = vpop.permute.xlu0 %2351
        %2355 = vset.pattern.permute.xlu0 0
        %2356 = vperm.xlu0 %2355, %v2293
        %v2357 = vpop.permute.xlu0 %2356
        %v2359 = vmul.f32 %v2201, %v2297
        %v2360 = vmul.f32 %v2202, %v2302
        %v2361 = vmul.f32 %v2203, %v2307
        %v2362 = vmul.f32 %v2204, %v2312
        %v2363 = vmul.f32 %v2205, %v2317
        %v2364 = vmul.f32 %v2206, %v2322
        %v2365 = vmul.f32 %v2207, %v2327
        %v2366 = vmul.f32 %v2208, %v2332
        %v2367 = vmul.f32 %v2209, %v2337
        %v2368 = vmul.f32 %v2210, %v2342
        %v2369 = vmul.f32 %v2211, %v2347
        %v2370 = vmul.f32 %v2212, %v2352
        %v2371 = vmul.f32 %v2213, %v2357
        %v2372 = vsel %vm479, %v2359, 0.0
        %v2373 = vsel %vm479, %v2360, 0.0
        %v2374 = vadd.f32 %v2372, %v2373
        %v2375 = vsel %vm479, %v2361, 0.0
        %v2376 = vadd.f32 %v2374, %v2375
        %v2377 = vsel %vm479, %v2362, 0.0
        %v2378 = vadd.f32 %v2376, %v2377
        %v2379 = vsel %vm479, %v2363, 0.0
        %v2380 = vadd.f32 %v2378, %v2379
        %v2381 = vsel %vm479, %v2364, 0.0
        %v2382 = vadd.f32 %v2380, %v2381
        %v2383 = vsel %vm479, %v2365, 0.0
        %v2384 = vadd.f32 %v2382, %v2383
        %v2385 = vsel %vm479, %v2366, 0.0
        %v2386 = vadd.f32 %v2384, %v2385
        %v2387 = vsel %vm479, %v2367, 0.0
        %v2388 = vadd.f32 %v2386, %v2387
        %v2389 = vsel %vm479, %v2368, 0.0
        %v2390 = vadd.f32 %v2388, %v2389
        %v2391 = vsel %vm479, %v2369, 0.0
        %v2392 = vadd.f32 %v2390, %v2391
        %v2393 = vsel %vm479, %v2370, 0.0
        %v2394 = vadd.f32 %v2392, %v2393
        %v2395 = vsel %vm479, %v2371, 0.0
        %v2396 = vadd.f32 %v2394, %v2395
        %v2397 = vrot.slane %v2396, 4
        %v2398 = vadd.f32 %v2396, %v2397
        %v2399 = vrot.slane %v2398, 2
        %v2400 = vadd.f32 %v2398, %v2399
        %v2401 = vrot.slane %v2400, 1
        %v2402 = vadd.f32 %v2400, %v2401
        %vm2403 = vcmask 516096
        %2404 = vst.msk [vmem:[%s351] sm:$0x1] %vm2403, %v2402
        %v2405 = vmul.f32 %v2359, %v2201
        %v2406 = vmul.f32 %v2360, %v2202
        %v2407 = vmul.f32 %v2361, %v2203
        %v2408 = vmul.f32 %v2362, %v2204
        %v2409 = vmul.f32 %v2363, %v2205
        %v2410 = vmul.f32 %v2364, %v2206
        %v2411 = vmul.f32 %v2365, %v2207
        %v2412 = vmul.f32 %v2366, %v2208
        %v2413 = vmul.f32 %v2367, %v2209
        %v2414 = vmul.f32 %v2368, %v2210
        %v2415 = vmul.f32 %v2369, %v2211
        %v2416 = vmul.f32 %v2370, %v2212
        %v2417 = vmul.f32 %v2371, %v2213
        %v2418 = vsel %vm479, %v2405, 0.0
        %v2419 = vsel %vm479, %v2406, 0.0
        %v2420 = vadd.f32 %v2418, %v2419
        %v2421 = vsel %vm479, %v2407, 0.0
        %v2422 = vadd.f32 %v2420, %v2421
        %v2423 = vsel %vm479, %v2408, 0.0
        %v2424 = vadd.f32 %v2422, %v2423
        %v2425 = vsel %vm479, %v2409, 0.0
        %v2426 = vadd.f32 %v2424, %v2425
        %v2427 = vsel %vm479, %v2410, 0.0
        %v2428 = vadd.f32 %v2426, %v2427
        %v2429 = vsel %vm479, %v2411, 0.0
        %v2430 = vadd.f32 %v2428, %v2429
        %v2431 = vsel %vm479, %v2412, 0.0
        %v2432 = vadd.f32 %v2430, %v2431
        %v2433 = vsel %vm479, %v2413, 0.0
        %v2434 = vadd.f32 %v2432, %v2433
        %v2435 = vsel %vm479, %v2414, 0.0
        %v2436 = vadd.f32 %v2434, %v2435
        %v2437 = vsel %vm479, %v2415, 0.0
        %v2438 = vadd.f32 %v2436, %v2437
        %v2439 = vsel %vm479, %v2416, 0.0
        %v2440 = vadd.f32 %v2438, %v2439
        %v2441 = vsel %vm479, %v2417, 0.0
        %v2442 = vadd.f32 %v2440, %v2441
        %v2443 = vrot.slane %v2442, 4
        %v2444 = vadd.f32 %v2442, %v2443
        %v2445 = vrot.slane %v2444, 2
        %v2446 = vadd.f32 %v2444, %v2445
        %v2447 = vrot.slane %v2446, 1
        %v2448 = vadd.f32 %v2446, %v2447
        %2449 = vst.msk [vmem:[%s358] sm:$0x1] %vm2403, %v2448
      $region44: #{up_transition_forward.8} parent=35 // pred_fallthru
        _
      %p2450 = scmp.lt.s32.totalorder %s23, 1
      %s2451 = scalar_select %p2450, %s23, 1
      %p2452 = scmp.lt.s32.totalorder %s24, 7
      %s2453 = scalar_select %p2452, %s24, 7
      %s2454 = smul.addr %s2453, 13
      %s2455 = smul.addr %s2451, 104
      %s2456 = sadd.s32 %s2454, %s2455
      %s2457 = smul.addr %s2456, 4
      %s2458 = scalar_lea.vmem %s4, %s2457
      %p2459 = scmp.lt.s32.totalorder %s23, 1
      %s2460 = scalar_select %p2459, %s23, 1
      %p2461 = scmp.lt.s32.totalorder %s24, 7
      %s2462 = scalar_select %p2461, %s24, 7
      %s2463 = smul.addr %s2460, 8
      %s2464 = sadd.s32 %s2462, %s2463
      %s2465 = scalar_lea.vmem %s5, %s2464
      %p2466 = scmp.lt.s32.totalorder %s23, 1
      %s2467 = scalar_select %p2466, %s23, 1
      %p2468 = scmp.lt.s32.totalorder %s24, 7
      %s2469 = scalar_select %p2468, %s24, 7
      %s2470 = smul.addr %s2467, 8
      %s2471 = sadd.s32 %s2469, %s2470
      %s2472 = scalar_lea.vmem %s6, %s2471
      // Predicated region
      $region45: #{up_transition_forward.8} parent=35 // pred_check
        %p2473 = pneg %p155
      $region46: #{up_transition_forward.8} parent=35 // pred_check_branch
        %2475 = sbr.rel (%p2473) target = $region48
      $region47: #{up_transition_forward.8} parent=35 // pred_region
        _
      $region48: #{up_transition_forward.8} parent=35 // pred_fallthru
        _
      // Predicated region
      $region49: #{up_transition_forward.8} parent=35 // pred_check
        %p2476 = pneg %p183
      $region50: #{up_transition_forward.8} parent=35 // pred_check_branch
        %2478 = sbr.rel (%p2476) target = $region52
      $region51: #{up_transition_forward.8} parent=35 // pred_region
        _
      $region52: #{up_transition_forward.8} parent=35 // pred_fallthru
        _
      // Predicated region
      $region53: #{up_transition_forward.8} parent=35 // pred_check
        %p2479 = pneg %p211
      $region54: #{up_transition_forward.8} parent=35 // pred_check_branch
        %2481 = sbr.rel (%p2479) target = $region56
      $region55: #{up_transition_forward.8} parent=35 // pred_region
        _
      $region56: #{up_transition_forward.8} parent=35 // pred_fallthru
        _
    $region36: #{up_transition_forward.8} parent=5 // pred_fallthru
      _
    %p2482 = scmp.le.s32.totalorder 2, %s13
    // Predicated region
    $region57: #{up_transition_forward.8} parent=5 // pred_check
      %p2483 = pneg %p2482
    $region58: #{up_transition_forward.8} parent=5 // pred_check_branch
      %2485 = sbr.rel (%p2483) target = $region60
    $region59: #{up_transition_forward.8} parent=5 // pred_region
      %s2486 = ssub.s32 %s13, 2
      // Predicated region
      $region61: #{up_transition_forward.8} parent=59 // pred_check
        %p2487 = pneg %p161
      $region62: #{up_transition_forward.8} parent=59 // pred_check_branch
        %2489 = sbr.rel (%p2487) target = $region64
      $region63: #{up_transition_forward.8} parent=59 // pred_region
        %p2490 = scmp.lt.s32.totalorder %s26, 1
        %s2491 = scalar_select %p2490, %s26, 1
        %p2492 = scmp.lt.s32.totalorder %s27, 7
        %s2493 = scalar_select %p2492, %s27, 7
        %s2494 = smul.addr %s2493, 13
        %s2495 = smul.addr %s2491, 104
        %s2496 = sadd.s32 %s2494, %s2495
        %s2497 = smul.addr %s2496, 4
        %s2498 = scalar_lea.vmem %s4, %s2497
      $region64: #{up_transition_forward.8} parent=59 // pred_fallthru
        _
      // Predicated region
      $region65: #{up_transition_forward.8} parent=59 // pred_check
        %p2499 = pneg %p189
      $region66: #{up_transition_forward.8} parent=59 // pred_check_branch
        %2501 = sbr.rel (%p2499) target = $region68
      $region67: #{up_transition_forward.8} parent=59 // pred_region
        %p2502 = scmp.lt.s32.totalorder %s26, 1
        %s2503 = scalar_select %p2502, %s26, 1
        %p2504 = scmp.lt.s32.totalorder %s27, 7
        %s2505 = scalar_select %p2504, %s27, 7
        %s2506 = smul.addr %s2503, 8
        %s2507 = sadd.s32 %s2505, %s2506
        %s2508 = scalar_lea.vmem %s5, %s2507
      $region68: #{up_transition_forward.8} parent=59 // pred_fallthru
        _
      // Predicated region
      $region69: #{up_transition_forward.8} parent=59 // pred_check
        %p2509 = pneg %p217
      $region70: #{up_transition_forward.8} parent=59 // pred_check_branch
        %2511 = sbr.rel (%p2509) target = $region72
      $region71: #{up_transition_forward.8} parent=59 // pred_region
        %p2512 = scmp.lt.s32.totalorder %s26, 1
        %s2513 = scalar_select %p2512, %s26, 1
        %p2514 = scmp.lt.s32.totalorder %s27, 7
        %s2515 = scalar_select %p2514, %s27, 7
        %s2516 = smul.addr %s2513, 8
        %s2517 = sadd.s32 %s2515, %s2516
        %s2518 = scalar_lea.vmem %s6, %s2517
      $region72: #{up_transition_forward.8} parent=59 // pred_fallthru
        _
    $region60: #{up_transition_forward.8} parent=5 // pred_fallthru
      _
  $region6: #{up_transition_forward.8} parent=0 // loop_footer
    %s17 = sadd.s32 1, %s13
  $region7: #{up_transition_forward.8} parent=0 // loop_footer_branch
    %12 = sbr.rel target = $region3
  $region8: #{up_transition_forward.8} parent=0 // loop_exit
    _

</llo_original>
